<compile_context>
chip_gen: v7x
topology: tpu7x:2x2x1
jax: 0.10.0
libtpu: 0.0.40
codegen_flags: <defaults>
</compile_context>

<pallas_src>
import functools

import jax
import jax.numpy as jnp
from jax.experimental import pallas as pl
from jax.experimental.pallas import tpu as pltpu


# ----------------------------------------------------------------------------
# Fused Pallas kernel: n_layers x LSTM (wavefront) + Linear + ReLU.
# ----------------------------------------------------------------------------
def fused_mosi_kernel(T, Bp, H, GP, n_layers, *refs):
    """refs = (x, [wih_p, whh_p, bias_p] * n_layers, w_fc, b_fc, out, xproj_sc)

    x        : (T*Bp, D_in)  f32, batch padded to Bp (row t*Bp + b == x[t, b])
    wih_p    : (D_in|H, 4*GP) bf16, gate k in lanes [k*GP, k*GP+H)
    whh_p    : (H, 4*GP)      bf16, same gate layout
    bias_p   : (1, 4*GP)      f32, b_ih + b_hh, same gate layout
    w_fc     : (H, D_out)     bf16
    b_fc     : (1, D_out)     f32
    out      : (T*Bp, D_out)  f32, relu(fc1(lstm_out)) before the final view
    xproj_sc : VMEM (T*Bp, 4*GP) f32, layer-0 hoisted input projection
    """
    x_ref = refs[0]
    layer_refs = refs[1:1 + 3 * n_layers]
    w_fc_ref = refs[1 + 3 * n_layers]
    b_fc_ref = refs[2 + 3 * n_layers]
    out_ref = refs[3 + 3 * n_layers]
    xproj_sc = refs[4 + 3 * n_layers]

    def lstm_cell(gates, c):
        # Gate slices are lane-aligned (offset 0 of their own 128-lane block),
        # so no XLU relayout is needed before combining with c / h.
        i_g = jax.nn.sigmoid(gates[:, 0 * GP:0 * GP + H])
        f_g = jax.nn.sigmoid(gates[:, 1 * GP:1 * GP + H])
        g_g = jnp.tanh(gates[:, 2 * GP:2 * GP + H])
        o_g = jax.nn.sigmoid(gates[:, 3 * GP:3 * GP + H])
        c_new = f_g * c + i_g * g_g
        h_new = o_g * jnp.tanh(c_new)
        return h_new, c_new

    xb = x_ref[...].astype(jnp.bfloat16)                      # (T*Bp, D_in)

    # ---- layer 0: hoisted input projection (one big MXU call), then recurrence.
    wih0 = layer_refs[0][...]
    whh0 = layer_refs[1][...]
    b0 = layer_refs[2][...]
    xproj_sc[...] = jnp.dot(xb, wih0,
                            preferred_element_type=jnp.float32) + b0

    h = jnp.zeros((Bp, H), jnp.float32)
    c = jnp.zeros((Bp, H), jnp.float32)
    hs = []                                                   # per-step hidden
    for t in range(T):
        gates = xproj_sc[t * Bp:(t + 1) * Bp, :] + jnp.dot(
            h.astype(jnp.bfloat16), whh0, preferred_element_type=jnp.float32)
        h, c = lstm_cell(gates, c)
        hs.append(h)

    # ---- layers >= 1: wavefront. Per-step input comes straight from the layer
    # below (SSA values, no full-slab read), so step t of this layer only
    # depends on step t of the previous layer + step t-1 of this layer.
    for li in range(1, n_layers):
        wih = layer_refs[3 * li + 0][...]
        whh = layer_refs[3 * li + 1][...]
        b = layer_refs[3 * li + 2][...]
        h = jnp.zeros((Bp, H), jnp.float32)
        c = jnp.zeros((Bp, H), jnp.float32)
        new_hs = []
        for t in range(T):
            # x-projection dot is independent of h -> off the recurrent chain.
            gates = (jnp.dot(hs[t].astype(jnp.bfloat16), wih,
                             preferred_element_type=jnp.float32)
                     + jnp.dot(h.astype(jnp.bfloat16), whh,
                               preferred_element_type=jnp.float32)
                     + b)
            h, c = lstm_cell(gates, c)
            new_hs.append(h)
        hs = new_hs

    # ---- fc1 + ReLU, per timestep (off the recurrence critical chain);
    # stores are sublane-aligned thanks to the batch padding.
    w_fc = w_fc_ref[...]
    b_fc = b_fc_ref[...]
    for t in range(T):
        y = jnp.dot(hs[t].astype(jnp.bfloat16), w_fc,
                    preferred_element_type=jnp.float32) + b_fc
        out_ref[t * Bp:(t + 1) * Bp, :] = jnp.maximum(y, 0.0)


# ----------------------------------------------------------------------------
# Wrapper-side weight re-layout helpers
# ----------------------------------------------------------------------------
def _pad_gate_cols(w_t, H, GP):
    """(K, 4H) -> (K, 4*GP): gate k's H columns placed at lanes [k*GP, k*GP+H)."""
    if GP == H:
        return w_t
    K = w_t.shape[0]
    out = jnp.zeros((K, 4 * GP), w_t.dtype)
    for k in range(4):
        out = out.at[:, k * GP:k * GP + H].set(w_t[:, k * H:(k + 1) * H])
    return out


def mosi_sentiment_classifier_forward(inputs, params):
    """inputs: (T, B, D_in). Returns (1, T*B*D_out), matching label.view(1,-1)."""
    T, B, D_in = inputs.shape
    layers = params["lstm_layers"]
    n_layers = len(layers)
    H = layers[0]["w_hh_t"].shape[0]
    D_out = params["w_fc_t"].shape[1]

    Bp = ((B + 7) // 8) * 8            # pad batch to a full f32 sublane tile
    GP = ((H + 127) // 128) * 128      # lane-aligned per-gate pitch

    # Pad batch with zero rows (sliced off again after the kernel).
    x_pad = jnp.zeros((T, Bp, D_in), jnp.float32).at[:, :B, :].set(inputs)
    x2d = x_pad.reshape(T * Bp, D_in)

    # Gate-block padding + bf16 weight cast. (In a real deployment this packing
    # is done once at load time, not per forward call.)
    flat_args = [x2d]
    for layer in layers:
        flat_args += [
            _pad_gate_cols(layer["w_ih_t"], H, GP).astype(jnp.bfloat16),
            _pad_gate_cols(layer["w_hh_t"], H, GP).astype(jnp.bfloat16),
            _pad_gate_cols(layer["bias"], H, GP),          # bias stays f32
        ]
    flat_args += [params["w_fc_t"].astype(jnp.bfloat16), params["b_fc"]]

    vmem = pl.BlockSpec(memory_space=pltpu.MemorySpace.VMEM)
    out2d = pl.pallas_call(
        functools.partial(fused_mosi_kernel, T, Bp, H, GP, n_layers),
        out_shape=jax.ShapeDtypeStruct((T * Bp, D_out), jnp.float32),
        in_specs=[vmem] * len(flat_args),
        out_specs=vmem,
        scratch_shapes=[pltpu.VMEM((T * Bp, 4 * GP), jnp.float32)],
    )(*flat_args)

    out = out2d.reshape(T, Bp, D_out)[:, :B, :]
    return out.reshape(1, -1)


# ----------------------------------------------------------------------------
# Deterministic parameter init (PyTorch-style uniform(-1/sqrt(H), 1/sqrt(H)))
# ----------------------------------------------------------------------------
def init_params(key, D_in, D_h, D_out, n_layers):
    bound = 1.0 / jnp.sqrt(D_h)
    layers = []
    for layer_idx in range(n_layers):
        in_dim = D_in if layer_idx == 0 else D_h
        key, k1, k2, k3, k4 = jax.random.split(key, 5)
        w_ih = jax.random.uniform(k1, (4 * D_h, in_dim), jnp.float32, -bound, bound)
        w_hh = jax.random.uniform(k2, (4 * D_h, D_h), jnp.float32, -bound, bound)
        b_ih = jax.random.uniform(k3, (4 * D_h,), jnp.float32, -bound, bound)
        b_hh = jax.random.uniform(k4, (4 * D_h,), jnp.float32, -bound, bound)
        layers.append({
            "w_ih_t": w_ih.T,                       # (in_dim, 4H), gates i|f|g|o
            "w_hh_t": w_hh.T,                       # (H, 4H)
            "bias": (b_ih + b_hh)[None, :],         # (1, 4H)
        })
    key, k5, k6 = jax.random.split(key, 3)
    fc_bound = 1.0 / jnp.sqrt(D_h)
    w_fc = jax.random.uniform(k5, (D_out, D_h), jnp.float32, -fc_bound, fc_bound)
    b_fc = jax.random.uniform(k6, (D_out,), jnp.float32, -fc_bound, fc_bound)
    return {
        "lstm_layers": layers,
        "w_fc_t": w_fc.T,            # (D_h, D_out)
        "b_fc": b_fc[None, :],       # (1, D_out)
    }


# ----------------------------------------------------------------------------
# Pure-JAX reference (cast_bf16=True mirrors the kernel's MXU operand cast)
# ----------------------------------------------------------------------------
def reference_forward(inputs, params, cast_bf16=False):
    def mm(a, b):
        if cast_bf16:
            a = a.astype(jnp.bfloat16)
            b = b.astype(jnp.bfloat16)
        return jnp.dot(a, b, preferred_element_type=jnp.float32)

    x = inputs
    for layer in params["lstm_layers"]:
        T, B, _ = x.shape
        H = layer["w_hh_t"].shape[0]
        h = jnp.zeros((B, H), jnp.float32)
        c = jnp.zeros((B, H), jnp.float32)
        outs = []
        for t in range(T):
            gates = mm(x[t], layer["w_ih_t"]) + mm(h, layer["w_hh_t"]) + layer["bias"]
            i_g = jax.nn.sigmoid(gates[:, 0 * H:1 * H])
            f_g = jax.nn.sigmoid(gates[:, 1 * H:2 * H])
            g_g = jnp.tanh(gates[:, 2 * H:3 * H])
            o_g = jax.nn.sigmoid(gates[:, 3 * H:4 * H])
            c = f_g * c + i_g * g_g
            h = o_g * jnp.tanh(c)
            outs.append(h)
        x = jnp.stack(outs, axis=0)
    T, B, D_h = x.shape
    y = jnp.maximum(mm(x.reshape(T * B, D_h), params["w_fc_t"]) + params["b_fc"], 0.0)
    return y.reshape(1, -1)


# ----------------------------------------------------------------------------
# Main
# ----------------------------------------------------------------------------
if __name__ == "__main__":
    # Small MOSI-like config: seq=8, batch=2, D_in=32, D_h=32, D_out=1, 2 layers.
    T, B, D_in, D_h, D_out, n_layers = 8, 2, 32, 32, 1, 2

    key = jax.random.PRNGKey(0)
    key, k_in = jax.random.split(key)
    inputs = jax.random.normal(k_in, (T, B, D_in), jnp.float32)   # (seq, batch, feat)

    params = init_params(key, D_in, D_h, D_out, n_layers)

    out = mosi_sentiment_classifier_forward(inputs, params)
    out = jax.block_until_ready(out)
    assert out.shape == (1, T * B * D_out), out.shape

    # Tight check vs a reference that uses the same bf16 MXU-operand cast.
    ref_bf16 = reference_forward(inputs, params, cast_bf16=True)
    assert jnp.allclose(out, ref_bf16, atol=2e-3, rtol=2e-3), "mismatch vs bf16 reference"

    # Looser check vs the pure-f32 PyTorch-semantics reference (bf16 rounding).
    ref_f32 = reference_forward(inputs, params, cast_bf16=False)
    assert jnp.allclose(out, ref_f32, atol=7.5e-2, rtol=7.5e-2), "mismatch vs f32 reference"

    print("KERNEL_OK")
</pallas_src>

<mosaic_0001>
module attributes {stable_mosaic.version = 11 : i64} {
  func.func @fused_mosi_kernel(%arg0: memref<64x32xf32, #tpu.memory_space<vmem>>, %arg1: memref<32x512xbf16, #tpu.memory_space<vmem>>, %arg2: memref<32x512xbf16, #tpu.memory_space<vmem>>, %arg3: memref<1x512xf32, #tpu.memory_space<vmem>>, %arg4: memref<32x512xbf16, #tpu.memory_space<vmem>>, %arg5: memref<32x512xbf16, #tpu.memory_space<vmem>>, %arg6: memref<1x512xf32, #tpu.memory_space<vmem>>, %arg7: memref<32x1xbf16, #tpu.memory_space<vmem>>, %arg8: memref<1x1xf32, #tpu.memory_space<vmem>>, %arg9: memref<64x1xf32, #tpu.memory_space<vmem>>, %arg10: memref<64x512xf32, #tpu.memory_space<vmem>>) attributes {dimension_semantics = [], scalar_prefetch = 0 : i64, scratch_operands = 1 : i64, tpu.core_type = #tpu.core_type<tc>} {
    %c0 = arith.constant 0 : index
    %c0_0 = arith.constant 0 : index
    %0 = vector.load %arg0[%c0, %c0_0] : memref<64x32xf32, #tpu.memory_space<vmem>>, vector<64x32xf32>
    %1 = arith.truncf %0 : vector<64x32xf32> to vector<64x32xbf16>
    %c0_1 = arith.constant 0 : index
    %c0_2 = arith.constant 0 : index
    %2 = vector.load %arg1[%c0_1, %c0_2] : memref<32x512xbf16, #tpu.memory_space<vmem>>, vector<32x512xbf16>
    %c0_3 = arith.constant 0 : index
    %c0_4 = arith.constant 0 : index
    %3 = vector.load %arg2[%c0_3, %c0_4] : memref<32x512xbf16, #tpu.memory_space<vmem>>, vector<32x512xbf16>
    %c0_5 = arith.constant 0 : index
    %c0_6 = arith.constant 0 : index
    %4 = vector.load %arg3[%c0_5, %c0_6] : memref<1x512xf32, #tpu.memory_space<vmem>>, vector<1x512xf32>
    %cst = arith.constant dense<0.000000e+00> : vector<64x512xf32>
    %5 = tpu.matmul %1, %2, %cst {dimension_numbers = #tpu.dot_dimension_numbers<[1], [0], [0], [1], [0, 0, 1, 1], [], []>} : vector<64x32xbf16>, vector<32x512xbf16>, vector<64x512xf32> -> vector<64x512xf32>
    %6 = vector.broadcast %4 : vector<1x512xf32> to vector<64x512xf32>
    %7 = arith.addf %5, %6 : vector<64x512xf32>
    %c0_7 = arith.constant 0 : index
    %c0_8 = arith.constant 0 : index
    %8 = vector.load %arg10[%c0_7, %c0_8] : memref<64x512xf32, #tpu.memory_space<vmem>>, vector<64x512xf32>
    tpu.vector_store %arg10[%c0_7, %c0_8], %7 {strides = array<i32>} : memref<64x512xf32, #tpu.memory_space<vmem>>, vector<64x512xf32>,
    %cst_9 = arith.constant 0.000000e+00 : f32
    %9 = vector.broadcast %cst_9 : f32 to vector<8x32xf32>
    %cst_10 = arith.constant 0.000000e+00 : f32
    %10 = vector.broadcast %cst_10 : f32 to vector<8x32xf32>
    %c0_11 = arith.constant 0 : index
    %c0_12 = arith.constant 0 : index
    %11 = vector.load %arg10[%c0_11, %c0_12] : memref<64x512xf32, #tpu.memory_space<vmem>>, vector<8x512xf32>
    %12 = arith.truncf %9 : vector<8x32xf32> to vector<8x32xbf16>
    %cst_13 = arith.constant dense<0.000000e+00> : vector<8x512xf32>
    %13 = tpu.matmul %12, %3, %cst_13 {dimension_numbers = #tpu.dot_dimension_numbers<[1], [0], [0], [1], [0, 0, 1, 1], [], []>} : vector<8x32xbf16>, vector<32x512xbf16>, vector<8x512xf32> -> vector<8x512xf32>
    %14 = arith.addf %11, %13 : vector<8x512xf32>
    %15 = vector.extract_strided_slice %14 {offsets = [0, 0], sizes = [8, 32], strides = [1, 1]} : vector<8x512xf32> to vector<8x32xf32>
    %16 = arith.negf %15 : vector<8x32xf32>
    %17 = math.exp %16 : vector<8x32xf32>
    %cst_14 = arith.constant 1.000000e+00 : f32
    %18 = vector.broadcast %cst_14 : f32 to vector<8x32xf32>
    %19 = arith.addf %18, %17 : vector<8x32xf32>
    %20 = arith.divf %18, %19 : vector<8x32xf32>
    %21 = vector.extract_strided_slice %14 {offsets = [0, 128], sizes = [8, 32], strides = [1, 1]} : vector<8x512xf32> to vector<8x32xf32>
    %22 = arith.negf %21 : vector<8x32xf32>
    %23 = math.exp %22 : vector<8x32xf32>
    %cst_15 = arith.constant 1.000000e+00 : f32
    %24 = vector.broadcast %cst_15 : f32 to vector<8x32xf32>
    %25 = arith.addf %24, %23 : vector<8x32xf32>
    %26 = arith.divf %24, %25 : vector<8x32xf32>
    %27 = vector.extract_strided_slice %14 {offsets = [0, 256], sizes = [8, 32], strides = [1, 1]} : vector<8x512xf32> to vector<8x32xf32>
    %28 = math.tanh %27 : vector<8x32xf32>
    %29 = vector.extract_strided_slice %14 {offsets = [0, 384], sizes = [8, 32], strides = [1, 1]} : vector<8x512xf32> to vector<8x32xf32>
    %30 = arith.negf %29 : vector<8x32xf32>
    %31 = math.exp %30 : vector<8x32xf32>
    %cst_16 = arith.constant 1.000000e+00 : f32
    %32 = vector.broadcast %cst_16 : f32 to vector<8x32xf32>
    %33 = arith.addf %32, %31 : vector<8x32xf32>
    %34 = arith.divf %32, %33 : vector<8x32xf32>
    %35 = arith.mulf %26, %10 : vector<8x32xf32>
    %36 = arith.mulf %20, %28 : vector<8x32xf32>
    %37 = arith.addf %35, %36 : vector<8x32xf32>
    %38 = math.tanh %37 : vector<8x32xf32>
    %39 = arith.mulf %34, %38 : vector<8x32xf32>
    %c8 = arith.constant 8 : index
    %c0_17 = arith.constant 0 : index
    %40 = vector.load %arg10[%c8, %c0_17] : memref<64x512xf32, #tpu.memory_space<vmem>>, vector<8x512xf32>
    %41 = arith.truncf %39 : vector<8x32xf32> to vector<8x32xbf16>
    %cst_18 = arith.constant dense<0.000000e+00> : vector<8x512xf32>
    %42 = tpu.matmul %41, %3, %cst_18 {dimension_numbers = #tpu.dot_dimension_numbers<[1], [0], [0], [1], [0, 0, 1, 1], [], []>} : vector<8x32xbf16>, vector<32x512xbf16>, vector<8x512xf32> -> vector<8x512xf32>
    %43 = arith.addf %40, %42 : vector<8x512xf32>
    %44 = vector.extract_strided_slice %43 {offsets = [0, 0], sizes = [8, 32], strides = [1, 1]} : vector<8x512xf32> to vector<8x32xf32>
    %45 = arith.negf %44 : vector<8x32xf32>
    %46 = math.exp %45 : vector<8x32xf32>
    %cst_19 = arith.constant 1.000000e+00 : f32
    %47 = vector.broadcast %cst_19 : f32 to vector<8x32xf32>
    %48 = arith.addf %47, %46 : vector<8x32xf32>
    %49 = arith.divf %47, %48 : vector<8x32xf32>
    %50 = vector.extract_strided_slice %43 {offsets = [0, 128], sizes = [8, 32], strides = [1, 1]} : vector<8x512xf32> to vector<8x32xf32>
    %51 = arith.negf %50 : vector<8x32xf32>
    %52 = math.exp %51 : vector<8x32xf32>
    %cst_20 = arith.constant 1.000000e+00 : f32
    %53 = vector.broadcast %cst_20 : f32 to vector<8x32xf32>
    %54 = arith.addf %53, %52 : vector<8x32xf32>
    %55 = arith.divf %53, %54 : vector<8x32xf32>
    %56 = vector.extract_strided_slice %43 {offsets = [0, 256], sizes = [8, 32], strides = [1, 1]} : vector<8x512xf32> to vector<8x32xf32>
    %57 = math.tanh %56 : vector<8x32xf32>
    %58 = vector.extract_strided_slice %43 {offsets = [0, 384], sizes = [8, 32], strides = [1, 1]} : vector<8x512xf32> to vector<8x32xf32>
    %59 = arith.negf %58 : vector<8x32xf32>
    %60 = math.exp %59 : vector<8x32xf32>
    %cst_21 = arith.constant 1.000000e+00 : f32
    %61 = vector.broadcast %cst_21 : f32 to vector<8x32xf32>
    %62 = arith.addf %61, %60 : vector<8x32xf32>
    %63 = arith.divf %61, %62 : vector<8x32xf32>
    %64 = arith.mulf %55, %37 : vector<8x32xf32>
    %65 = arith.mulf %49, %57 : vector<8x32xf32>
    %66 = arith.addf %64, %65 : vector<8x32xf32>
    %67 = math.tanh %66 : vector<8x32xf32>
    %68 = arith.mulf %63, %67 : vector<8x32xf32>
    %c16 = arith.constant 16 : index
    %c0_22 = arith.constant 0 : index
    %69 = vector.load %arg10[%c16, %c0_22] : memref<64x512xf32, #tpu.memory_space<vmem>>, vector<8x512xf32>
    %70 = arith.truncf %68 : vector<8x32xf32> to vector<8x32xbf16>
    %cst_23 = arith.constant dense<0.000000e+00> : vector<8x512xf32>
    %71 = tpu.matmul %70, %3, %cst_23 {dimension_numbers = #tpu.dot_dimension_numbers<[1], [0], [0], [1], [0, 0, 1, 1], [], []>} : vector<8x32xbf16>, vector<32x512xbf16>, vector<8x512xf32> -> vector<8x512xf32>
    %72 = arith.addf %69, %71 : vector<8x512xf32>
    %73 = vector.extract_strided_slice %72 {offsets = [0, 0], sizes = [8, 32], strides = [1, 1]} : vector<8x512xf32> to vector<8x32xf32>
    %74 = arith.negf %73 : vector<8x32xf32>
    %75 = math.exp %74 : vector<8x32xf32>
    %cst_24 = arith.constant 1.000000e+00 : f32
    %76 = vector.broadcast %cst_24 : f32 to vector<8x32xf32>
    %77 = arith.addf %76, %75 : vector<8x32xf32>
    %78 = arith.divf %76, %77 : vector<8x32xf32>
    %79 = vector.extract_strided_slice %72 {offsets = [0, 128], sizes = [8, 32], strides = [1, 1]} : vector<8x512xf32> to vector<8x32xf32>
    %80 = arith.negf %79 : vector<8x32xf32>
    %81 = math.exp %80 : vector<8x32xf32>
    %cst_25 = arith.constant 1.000000e+00 : f32
    %82 = vector.broadcast %cst_25 : f32 to vector<8x32xf32>
    %83 = arith.addf %82, %81 : vector<8x32xf32>
    %84 = arith.divf %82, %83 : vector<8x32xf32>
    %85 = vector.extract_strided_slice %72 {offsets = [0, 256], sizes = [8, 32], strides = [1, 1]} : vector<8x512xf32> to vector<8x32xf32>
    %86 = math.tanh %85 : vector<8x32xf32>
    %87 = vector.extract_strided_slice %72 {offsets = [0, 384], sizes = [8, 32], strides = [1, 1]} : vector<8x512xf32> to vector<8x32xf32>
    %88 = arith.negf %87 : vector<8x32xf32>
    %89 = math.exp %88 : vector<8x32xf32>
    %cst_26 = arith.constant 1.000000e+00 : f32
    %90 = vector.broadcast %cst_26 : f32 to vector<8x32xf32>
    %91 = arith.addf %90, %89 : vector<8x32xf32>
    %92 = arith.divf %90, %91 : vector<8x32xf32>
    %93 = arith.mulf %84, %66 : vector<8x32xf32>
    %94 = arith.mulf %78, %86 : vector<8x32xf32>
    %95 = arith.addf %93, %94 : vector<8x32xf32>
    %96 = math.tanh %95 : vector<8x32xf32>
    %97 = arith.mulf %92, %96 : vector<8x32xf32>
    %c24 = arith.constant 24 : index
    %c0_27 = arith.constant 0 : index
    %98 = vector.load %arg10[%c24, %c0_27] : memref<64x512xf32, #tpu.memory_space<vmem>>, vector<8x512xf32>
    %99 = arith.truncf %97 : vector<8x32xf32> to vector<8x32xbf16>
    %cst_28 = arith.constant dense<0.000000e+00> : vector<8x512xf32>
    %100 = tpu.matmul %99, %3, %cst_28 {dimension_numbers = #tpu.dot_dimension_numbers<[1], [0], [0], [1], [0, 0, 1, 1], [], []>} : vector<8x32xbf16>, vector<32x512xbf16>, vector<8x512xf32> -> vector<8x512xf32>
    %101 = arith.addf %98, %100 : vector<8x512xf32>
    %102 = vector.extract_strided_slice %101 {offsets = [0, 0], sizes = [8, 32], strides = [1, 1]} : vector<8x512xf32> to vector<8x32xf32>
    %103 = arith.negf %102 : vector<8x32xf32>
    %104 = math.exp %103 : vector<8x32xf32>
    %cst_29 = arith.constant 1.000000e+00 : f32
    %105 = vector.broadcast %cst_29 : f32 to vector<8x32xf32>
    %106 = arith.addf %105, %104 : vector<8x32xf32>
    %107 = arith.divf %105, %106 : vector<8x32xf32>
    %108 = vector.extract_strided_slice %101 {offsets = [0, 128], sizes = [8, 32], strides = [1, 1]} : vector<8x512xf32> to vector<8x32xf32>
    %109 = arith.negf %108 : vector<8x32xf32>
    %110 = math.exp %109 : vector<8x32xf32>
    %cst_30 = arith.constant 1.000000e+00 : f32
    %111 = vector.broadcast %cst_30 : f32 to vector<8x32xf32>
    %112 = arith.addf %111, %110 : vector<8x32xf32>
    %113 = arith.divf %111, %112 : vector<8x32xf32>
    %114 = vector.extract_strided_slice %101 {offsets = [0, 256], sizes = [8, 32], strides = [1, 1]} : vector<8x512xf32> to vector<8x32xf32>
    %115 = math.tanh %114 : vector<8x32xf32>
    %116 = vector.extract_strided_slice %101 {offsets = [0, 384], sizes = [8, 32], strides = [1, 1]} : vector<8x512xf32> to vector<8x32xf32>
    %117 = arith.negf %116 : vector<8x32xf32>
    %118 = math.exp %117 : vector<8x32xf32>
    %cst_31 = arith.constant 1.000000e+00 : f32
    %119 = vector.broadcast %cst_31 : f32 to vector<8x32xf32>
    %120 = arith.addf %119, %118 : vector<8x32xf32>
    %121 = arith.divf %119, %120 : vector<8x32xf32>
    %122 = arith.mulf %113, %95 : vector<8x32xf32>
    %123 = arith.mulf %107, %115 : vector<8x32xf32>
    %124 = arith.addf %122, %123 : vector<8x32xf32>
    %125 = math.tanh %124 : vector<8x32xf32>
    %126 = arith.mulf %121, %125 : vector<8x32xf32>
    %c32 = arith.constant 32 : index
    %c0_32 = arith.constant 0 : index
    %127 = vector.load %arg10[%c32, %c0_32] : memref<64x512xf32, #tpu.memory_space<vmem>>, vector<8x512xf32>
    %128 = arith.truncf %126 : vector<8x32xf32> to vector<8x32xbf16>
    %cst_33 = arith.constant dense<0.000000e+00> : vector<8x512xf32>
    %129 = tpu.matmul %128, %3, %cst_33 {dimension_numbers = #tpu.dot_dimension_numbers<[1], [0], [0], [1], [0, 0, 1, 1], [], []>} : vector<8x32xbf16>, vector<32x512xbf16>, vector<8x512xf32> -> vector<8x512xf32>
    %130 = arith.addf %127, %129 : vector<8x512xf32>
    %131 = vector.extract_strided_slice %130 {offsets = [0, 0], sizes = [8, 32], strides = [1, 1]} : vector<8x512xf32> to vector<8x32xf32>
    %132 = arith.negf %131 : vector<8x32xf32>
    %133 = math.exp %132 : vector<8x32xf32>
    %cst_34 = arith.constant 1.000000e+00 : f32
    %134 = vector.broadcast %cst_34 : f32 to vector<8x32xf32>
    %135 = arith.addf %134, %133 : vector<8x32xf32>
    %136 = arith.divf %134, %135 : vector<8x32xf32>
    %137 = vector.extract_strided_slice %130 {offsets = [0, 128], sizes = [8, 32], strides = [1, 1]} : vector<8x512xf32> to vector<8x32xf32>
    %138 = arith.negf %137 : vector<8x32xf32>
    %139 = math.exp %138 : vector<8x32xf32>
    %cst_35 = arith.constant 1.000000e+00 : f32
    %140 = vector.broadcast %cst_35 : f32 to vector<8x32xf32>
    %141 = arith.addf %140, %139 : vector<8x32xf32>
    %142 = arith.divf %140, %141 : vector<8x32xf32>
    %143 = vector.extract_strided_slice %130 {offsets = [0, 256], sizes = [8, 32], strides = [1, 1]} : vector<8x512xf32> to vector<8x32xf32>
    %144 = math.tanh %143 : vector<8x32xf32>
    %145 = vector.extract_strided_slice %130 {offsets = [0, 384], sizes = [8, 32], strides = [1, 1]} : vector<8x512xf32> to vector<8x32xf32>
    %146 = arith.negf %145 : vector<8x32xf32>
    %147 = math.exp %146 : vector<8x32xf32>
    %cst_36 = arith.constant 1.000000e+00 : f32
    %148 = vector.broadcast %cst_36 : f32 to vector<8x32xf32>
    %149 = arith.addf %148, %147 : vector<8x32xf32>
    %150 = arith.divf %148, %149 : vector<8x32xf32>
    %151 = arith.mulf %142, %124 : vector<8x32xf32>
    %152 = arith.mulf %136, %144 : vector<8x32xf32>
    %153 = arith.addf %151, %152 : vector<8x32xf32>
    %154 = math.tanh %153 : vector<8x32xf32>
    %155 = arith.mulf %150, %154 : vector<8x32xf32>
    %c40 = arith.constant 40 : index
    %c0_37 = arith.constant 0 : index
    %156 = vector.load %arg10[%c40, %c0_37] : memref<64x512xf32, #tpu.memory_space<vmem>>, vector<8x512xf32>
    %157 = arith.truncf %155 : vector<8x32xf32> to vector<8x32xbf16>
    %cst_38 = arith.constant dense<0.000000e+00> : vector<8x512xf32>
    %158 = tpu.matmul %157, %3, %cst_38 {dimension_numbers = #tpu.dot_dimension_numbers<[1], [0], [0], [1], [0, 0, 1, 1], [], []>} : vector<8x32xbf16>, vector<32x512xbf16>, vector<8x512xf32> -> vector<8x512xf32>
    %159 = arith.addf %156, %158 : vector<8x512xf32>
    %160 = vector.extract_strided_slice %159 {offsets = [0, 0], sizes = [8, 32], strides = [1, 1]} : vector<8x512xf32> to vector<8x32xf32>
    %161 = arith.negf %160 : vector<8x32xf32>
    %162 = math.exp %161 : vector<8x32xf32>
    %cst_39 = arith.constant 1.000000e+00 : f32
    %163 = vector.broadcast %cst_39 : f32 to vector<8x32xf32>
    %164 = arith.addf %163, %162 : vector<8x32xf32>
    %165 = arith.divf %163, %164 : vector<8x32xf32>
    %166 = vector.extract_strided_slice %159 {offsets = [0, 128], sizes = [8, 32], strides = [1, 1]} : vector<8x512xf32> to vector<8x32xf32>
    %167 = arith.negf %166 : vector<8x32xf32>
    %168 = math.exp %167 : vector<8x32xf32>
    %cst_40 = arith.constant 1.000000e+00 : f32
    %169 = vector.broadcast %cst_40 : f32 to vector<8x32xf32>
    %170 = arith.addf %169, %168 : vector<8x32xf32>
    %171 = arith.divf %169, %170 : vector<8x32xf32>
    %172 = vector.extract_strided_slice %159 {offsets = [0, 256], sizes = [8, 32], strides = [1, 1]} : vector<8x512xf32> to vector<8x32xf32>
    %173 = math.tanh %172 : vector<8x32xf32>
    %174 = vector.extract_strided_slice %159 {offsets = [0, 384], sizes = [8, 32], strides = [1, 1]} : vector<8x512xf32> to vector<8x32xf32>
    %175 = arith.negf %174 : vector<8x32xf32>
    %176 = math.exp %175 : vector<8x32xf32>
    %cst_41 = arith.constant 1.000000e+00 : f32
    %177 = vector.broadcast %cst_41 : f32 to vector<8x32xf32>
    %178 = arith.addf %177, %176 : vector<8x32xf32>
    %179 = arith.divf %177, %178 : vector<8x32xf32>
    %180 = arith.mulf %171, %153 : vector<8x32xf32>
    %181 = arith.mulf %165, %173 : vector<8x32xf32>
    %182 = arith.addf %180, %181 : vector<8x32xf32>
    %183 = math.tanh %182 : vector<8x32xf32>
    %184 = arith.mulf %179, %183 : vector<8x32xf32>
    %c48 = arith.constant 48 : index
    %c0_42 = arith.constant 0 : index
    %185 = vector.load %arg10[%c48, %c0_42] : memref<64x512xf32, #tpu.memory_space<vmem>>, vector<8x512xf32>
    %186 = arith.truncf %184 : vector<8x32xf32> to vector<8x32xbf16>
    %cst_43 = arith.constant dense<0.000000e+00> : vector<8x512xf32>
    %187 = tpu.matmul %186, %3, %cst_43 {dimension_numbers = #tpu.dot_dimension_numbers<[1], [0], [0], [1], [0, 0, 1, 1], [], []>} : vector<8x32xbf16>, vector<32x512xbf16>, vector<8x512xf32> -> vector<8x512xf32>
    %188 = arith.addf %185, %187 : vector<8x512xf32>
    %189 = vector.extract_strided_slice %188 {offsets = [0, 0], sizes = [8, 32], strides = [1, 1]} : vector<8x512xf32> to vector<8x32xf32>
    %190 = arith.negf %189 : vector<8x32xf32>
    %191 = math.exp %190 : vector<8x32xf32>
    %cst_44 = arith.constant 1.000000e+00 : f32
    %192 = vector.broadcast %cst_44 : f32 to vector<8x32xf32>
    %193 = arith.addf %192, %191 : vector<8x32xf32>
    %194 = arith.divf %192, %193 : vector<8x32xf32>
    %195 = vector.extract_strided_slice %188 {offsets = [0, 128], sizes = [8, 32], strides = [1, 1]} : vector<8x512xf32> to vector<8x32xf32>
    %196 = arith.negf %195 : vector<8x32xf32>
    %197 = math.exp %196 : vector<8x32xf32>
    %cst_45 = arith.constant 1.000000e+00 : f32
    %198 = vector.broadcast %cst_45 : f32 to vector<8x32xf32>
    %199 = arith.addf %198, %197 : vector<8x32xf32>
    %200 = arith.divf %198, %199 : vector<8x32xf32>
    %201 = vector.extract_strided_slice %188 {offsets = [0, 256], sizes = [8, 32], strides = [1, 1]} : vector<8x512xf32> to vector<8x32xf32>
    %202 = math.tanh %201 : vector<8x32xf32>
    %203 = vector.extract_strided_slice %188 {offsets = [0, 384], sizes = [8, 32], strides = [1, 1]} : vector<8x512xf32> to vector<8x32xf32>
    %204 = arith.negf %203 : vector<8x32xf32>
    %205 = math.exp %204 : vector<8x32xf32>
    %cst_46 = arith.constant 1.000000e+00 : f32
    %206 = vector.broadcast %cst_46 : f32 to vector<8x32xf32>
    %207 = arith.addf %206, %205 : vector<8x32xf32>
    %208 = arith.divf %206, %207 : vector<8x32xf32>
    %209 = arith.mulf %200, %182 : vector<8x32xf32>
    %210 = arith.mulf %194, %202 : vector<8x32xf32>
    %211 = arith.addf %209, %210 : vector<8x32xf32>
    %212 = math.tanh %211 : vector<8x32xf32>
    %213 = arith.mulf %208, %212 : vector<8x32xf32>
    %c56 = arith.constant 56 : index
    %c0_47 = arith.constant 0 : index
    %214 = vector.load %arg10[%c56, %c0_47] : memref<64x512xf32, #tpu.memory_space<vmem>>, vector<8x512xf32>
    %215 = arith.truncf %213 : vector<8x32xf32> to vector<8x32xbf16>
    %cst_48 = arith.constant dense<0.000000e+00> : vector<8x512xf32>
    %216 = tpu.matmul %215, %3, %cst_48 {dimension_numbers = #tpu.dot_dimension_numbers<[1], [0], [0], [1], [0, 0, 1, 1], [], []>} : vector<8x32xbf16>, vector<32x512xbf16>, vector<8x512xf32> -> vector<8x512xf32>
    %217 = arith.addf %214, %216 : vector<8x512xf32>
    %218 = vector.extract_strided_slice %217 {offsets = [0, 0], sizes = [8, 32], strides = [1, 1]} : vector<8x512xf32> to vector<8x32xf32>
    %219 = arith.negf %218 : vector<8x32xf32>
    %220 = math.exp %219 : vector<8x32xf32>
    %cst_49 = arith.constant 1.000000e+00 : f32
    %221 = vector.broadcast %cst_49 : f32 to vector<8x32xf32>
    %222 = arith.addf %221, %220 : vector<8x32xf32>
    %223 = arith.divf %221, %222 : vector<8x32xf32>
    %224 = vector.extract_strided_slice %217 {offsets = [0, 128], sizes = [8, 32], strides = [1, 1]} : vector<8x512xf32> to vector<8x32xf32>
    %225 = arith.negf %224 : vector<8x32xf32>
    %226 = math.exp %225 : vector<8x32xf32>
    %cst_50 = arith.constant 1.000000e+00 : f32
    %227 = vector.broadcast %cst_50 : f32 to vector<8x32xf32>
    %228 = arith.addf %227, %226 : vector<8x32xf32>
    %229 = arith.divf %227, %228 : vector<8x32xf32>
    %230 = vector.extract_strided_slice %217 {offsets = [0, 256], sizes = [8, 32], strides = [1, 1]} : vector<8x512xf32> to vector<8x32xf32>
    %231 = math.tanh %230 : vector<8x32xf32>
    %232 = vector.extract_strided_slice %217 {offsets = [0, 384], sizes = [8, 32], strides = [1, 1]} : vector<8x512xf32> to vector<8x32xf32>
    %233 = arith.negf %232 : vector<8x32xf32>
    %234 = math.exp %233 : vector<8x32xf32>
    %cst_51 = arith.constant 1.000000e+00 : f32
    %235 = vector.broadcast %cst_51 : f32 to vector<8x32xf32>
    %236 = arith.addf %235, %234 : vector<8x32xf32>
    %237 = arith.divf %235, %236 : vector<8x32xf32>
    %238 = arith.mulf %229, %211 : vector<8x32xf32>
    %239 = arith.mulf %223, %231 : vector<8x32xf32>
    %240 = arith.addf %238, %239 : vector<8x32xf32>
    %241 = math.tanh %240 : vector<8x32xf32>
    %242 = arith.mulf %237, %241 : vector<8x32xf32>
    %c0_52 = arith.constant 0 : index
    %c0_53 = arith.constant 0 : index
    %243 = vector.load %arg4[%c0_52, %c0_53] : memref<32x512xbf16, #tpu.memory_space<vmem>>, vector<32x512xbf16>
    %c0_54 = arith.constant 0 : index
    %c0_55 = arith.constant 0 : index
    %244 = vector.load %arg5[%c0_54, %c0_55] : memref<32x512xbf16, #tpu.memory_space<vmem>>, vector<32x512xbf16>
    %c0_56 = arith.constant 0 : index
    %c0_57 = arith.constant 0 : index
    %245 = vector.load %arg6[%c0_56, %c0_57] : memref<1x512xf32, #tpu.memory_space<vmem>>, vector<1x512xf32>
    %cst_58 = arith.constant 0.000000e+00 : f32
    %246 = vector.broadcast %cst_58 : f32 to vector<8x32xf32>
    %cst_59 = arith.constant 0.000000e+00 : f32
    %247 = vector.broadcast %cst_59 : f32 to vector<8x32xf32>
    %248 = arith.truncf %39 : vector<8x32xf32> to vector<8x32xbf16>
    %cst_60 = arith.constant dense<0.000000e+00> : vector<8x512xf32>
    %249 = tpu.matmul %248, %243, %cst_60 {dimension_numbers = #tpu.dot_dimension_numbers<[1], [0], [0], [1], [0, 0, 1, 1], [], []>} : vector<8x32xbf16>, vector<32x512xbf16>, vector<8x512xf32> -> vector<8x512xf32>
    %250 = arith.truncf %246 : vector<8x32xf32> to vector<8x32xbf16>
    %cst_61 = arith.constant dense<0.000000e+00> : vector<8x512xf32>
    %251 = tpu.matmul %250, %244, %cst_61 {dimension_numbers = #tpu.dot_dimension_numbers<[1], [0], [0], [1], [0, 0, 1, 1], [], []>} : vector<8x32xbf16>, vector<32x512xbf16>, vector<8x512xf32> -> vector<8x512xf32>
    %252 = arith.addf %249, %251 : vector<8x512xf32>
    %253 = vector.broadcast %245 : vector<1x512xf32> to vector<8x512xf32>
    %254 = arith.addf %252, %253 : vector<8x512xf32>
    %255 = vector.extract_strided_slice %254 {offsets = [0, 0], sizes = [8, 32], strides = [1, 1]} : vector<8x512xf32> to vector<8x32xf32>
    %256 = arith.negf %255 : vector<8x32xf32>
    %257 = math.exp %256 : vector<8x32xf32>
    %cst_62 = arith.constant 1.000000e+00 : f32
    %258 = vector.broadcast %cst_62 : f32 to vector<8x32xf32>
    %259 = arith.addf %258, %257 : vector<8x32xf32>
    %260 = arith.divf %258, %259 : vector<8x32xf32>
    %261 = vector.extract_strided_slice %254 {offsets = [0, 128], sizes = [8, 32], strides = [1, 1]} : vector<8x512xf32> to vector<8x32xf32>
    %262 = arith.negf %261 : vector<8x32xf32>
    %263 = math.exp %262 : vector<8x32xf32>
    %cst_63 = arith.constant 1.000000e+00 : f32
    %264 = vector.broadcast %cst_63 : f32 to vector<8x32xf32>
    %265 = arith.addf %264, %263 : vector<8x32xf32>
    %266 = arith.divf %264, %265 : vector<8x32xf32>
    %267 = vector.extract_strided_slice %254 {offsets = [0, 256], sizes = [8, 32], strides = [1, 1]} : vector<8x512xf32> to vector<8x32xf32>
    %268 = math.tanh %267 : vector<8x32xf32>
    %269 = vector.extract_strided_slice %254 {offsets = [0, 384], sizes = [8, 32], strides = [1, 1]} : vector<8x512xf32> to vector<8x32xf32>
    %270 = arith.negf %269 : vector<8x32xf32>
    %271 = math.exp %270 : vector<8x32xf32>
    %cst_64 = arith.constant 1.000000e+00 : f32
    %272 = vector.broadcast %cst_64 : f32 to vector<8x32xf32>
    %273 = arith.addf %272, %271 : vector<8x32xf32>
    %274 = arith.divf %272, %273 : vector<8x32xf32>
    %275 = arith.mulf %266, %247 : vector<8x32xf32>
    %276 = arith.mulf %260, %268 : vector<8x32xf32>
    %277 = arith.addf %275, %276 : vector<8x32xf32>
    %278 = math.tanh %277 : vector<8x32xf32>
    %279 = arith.mulf %274, %278 : vector<8x32xf32>
    %280 = arith.truncf %68 : vector<8x32xf32> to vector<8x32xbf16>
    %cst_65 = arith.constant dense<0.000000e+00> : vector<8x512xf32>
    %281 = tpu.matmul %280, %243, %cst_65 {dimension_numbers = #tpu.dot_dimension_numbers<[1], [0], [0], [1], [0, 0, 1, 1], [], []>} : vector<8x32xbf16>, vector<32x512xbf16>, vector<8x512xf32> -> vector<8x512xf32>
    %282 = arith.truncf %279 : vector<8x32xf32> to vector<8x32xbf16>
    %cst_66 = arith.constant dense<0.000000e+00> : vector<8x512xf32>
    %283 = tpu.matmul %282, %244, %cst_66 {dimension_numbers = #tpu.dot_dimension_numbers<[1], [0], [0], [1], [0, 0, 1, 1], [], []>} : vector<8x32xbf16>, vector<32x512xbf16>, vector<8x512xf32> -> vector<8x512xf32>
    %284 = arith.addf %281, %283 : vector<8x512xf32>
    %285 = vector.broadcast %245 : vector<1x512xf32> to vector<8x512xf32>
    %286 = arith.addf %284, %285 : vector<8x512xf32>
    %287 = vector.extract_strided_slice %286 {offsets = [0, 0], sizes = [8, 32], strides = [1, 1]} : vector<8x512xf32> to vector<8x32xf32>
    %288 = arith.negf %287 : vector<8x32xf32>
    %289 = math.exp %288 : vector<8x32xf32>
    %cst_67 = arith.constant 1.000000e+00 : f32
    %290 = vector.broadcast %cst_67 : f32 to vector<8x32xf32>
    %291 = arith.addf %290, %289 : vector<8x32xf32>
    %292 = arith.divf %290, %291 : vector<8x32xf32>
    %293 = vector.extract_strided_slice %286 {offsets = [0, 128], sizes = [8, 32], strides = [1, 1]} : vector<8x512xf32> to vector<8x32xf32>
    %294 = arith.negf %293 : vector<8x32xf32>
    %295 = math.exp %294 : vector<8x32xf32>
    %cst_68 = arith.constant 1.000000e+00 : f32
    %296 = vector.broadcast %cst_68 : f32 to vector<8x32xf32>
    %297 = arith.addf %296, %295 : vector<8x32xf32>
    %298 = arith.divf %296, %297 : vector<8x32xf32>
    %299 = vector.extract_strided_slice %286 {offsets = [0, 256], sizes = [8, 32], strides = [1, 1]} : vector<8x512xf32> to vector<8x32xf32>
    %300 = math.tanh %299 : vector<8x32xf32>
    %301 = vector.extract_strided_slice %286 {offsets = [0, 384], sizes = [8, 32], strides = [1, 1]} : vector<8x512xf32> to vector<8x32xf32>
    %302 = arith.negf %301 : vector<8x32xf32>
    %303 = math.exp %302 : vector<8x32xf32>
    %cst_69 = arith.constant 1.000000e+00 : f32
    %304 = vector.broadcast %cst_69 : f32 to vector<8x32xf32>
    %305 = arith.addf %304, %303 : vector<8x32xf32>
    %306 = arith.divf %304, %305 : vector<8x32xf32>
    %307 = arith.mulf %298, %277 : vector<8x32xf32>
    %308 = arith.mulf %292, %300 : vector<8x32xf32>
    %309 = arith.addf %307, %308 : vector<8x32xf32>
    %310 = math.tanh %309 : vector<8x32xf32>
    %311 = arith.mulf %306, %310 : vector<8x32xf32>
    %312 = arith.truncf %97 : vector<8x32xf32> to vector<8x32xbf16>
    %cst_70 = arith.constant dense<0.000000e+00> : vector<8x512xf32>
    %313 = tpu.matmul %312, %243, %cst_70 {dimension_numbers = #tpu.dot_dimension_numbers<[1], [0], [0], [1], [0, 0, 1, 1], [], []>} : vector<8x32xbf16>, vector<32x512xbf16>, vector<8x512xf32> -> vector<8x512xf32>
    %314 = arith.truncf %311 : vector<8x32xf32> to vector<8x32xbf16>
    %cst_71 = arith.constant dense<0.000000e+00> : vector<8x512xf32>
    %315 = tpu.matmul %314, %244, %cst_71 {dimension_numbers = #tpu.dot_dimension_numbers<[1], [0], [0], [1], [0, 0, 1, 1], [], []>} : vector<8x32xbf16>, vector<32x512xbf16>, vector<8x512xf32> -> vector<8x512xf32>
    %316 = arith.addf %313, %315 : vector<8x512xf32>
    %317 = vector.broadcast %245 : vector<1x512xf32> to vector<8x512xf32>
    %318 = arith.addf %316, %317 : vector<8x512xf32>
    %319 = vector.extract_strided_slice %318 {offsets = [0, 0], sizes = [8, 32], strides = [1, 1]} : vector<8x512xf32> to vector<8x32xf32>
    %320 = arith.negf %319 : vector<8x32xf32>
    %321 = math.exp %320 : vector<8x32xf32>
    %cst_72 = arith.constant 1.000000e+00 : f32
    %322 = vector.broadcast %cst_72 : f32 to vector<8x32xf32>
    %323 = arith.addf %322, %321 : vector<8x32xf32>
    %324 = arith.divf %322, %323 : vector<8x32xf32>
    %325 = vector.extract_strided_slice %318 {offsets = [0, 128], sizes = [8, 32], strides = [1, 1]} : vector<8x512xf32> to vector<8x32xf32>
    %326 = arith.negf %325 : vector<8x32xf32>
    %327 = math.exp %326 : vector<8x32xf32>
    %cst_73 = arith.constant 1.000000e+00 : f32
    %328 = vector.broadcast %cst_73 : f32 to vector<8x32xf32>
    %329 = arith.addf %328, %327 : vector<8x32xf32>
    %330 = arith.divf %328, %329 : vector<8x32xf32>
    %331 = vector.extract_strided_slice %318 {offsets = [0, 256], sizes = [8, 32], strides = [1, 1]} : vector<8x512xf32> to vector<8x32xf32>
    %332 = math.tanh %331 : vector<8x32xf32>
    %333 = vector.extract_strided_slice %318 {offsets = [0, 384], sizes = [8, 32], strides = [1, 1]} : vector<8x512xf32> to vector<8x32xf32>
    %334 = arith.negf %333 : vector<8x32xf32>
    %335 = math.exp %334 : vector<8x32xf32>
    %cst_74 = arith.constant 1.000000e+00 : f32
    %336 = vector.broadcast %cst_74 : f32 to vector<8x32xf32>
    %337 = arith.addf %336, %335 : vector<8x32xf32>
    %338 = arith.divf %336, %337 : vector<8x32xf32>
    %339 = arith.mulf %330, %309 : vector<8x32xf32>
    %340 = arith.mulf %324, %332 : vector<8x32xf32>
    %341 = arith.addf %339, %340 : vector<8x32xf32>
    %342 = math.tanh %341 : vector<8x32xf32>
    %343 = arith.mulf %338, %342 : vector<8x32xf32>
    %344 = arith.truncf %126 : vector<8x32xf32> to vector<8x32xbf16>
    %cst_75 = arith.constant dense<0.000000e+00> : vector<8x512xf32>
    %345 = tpu.matmul %344, %243, %cst_75 {dimension_numbers = #tpu.dot_dimension_numbers<[1], [0], [0], [1], [0, 0, 1, 1], [], []>} : vector<8x32xbf16>, vector<32x512xbf16>, vector<8x512xf32> -> vector<8x512xf32>
    %346 = arith.truncf %343 : vector<8x32xf32> to vector<8x32xbf16>
    %cst_76 = arith.constant dense<0.000000e+00> : vector<8x512xf32>
    %347 = tpu.matmul %346, %244, %cst_76 {dimension_numbers = #tpu.dot_dimension_numbers<[1], [0], [0], [1], [0, 0, 1, 1], [], []>} : vector<8x32xbf16>, vector<32x512xbf16>, vector<8x512xf32> -> vector<8x512xf32>
    %348 = arith.addf %345, %347 : vector<8x512xf32>
    %349 = vector.broadcast %245 : vector<1x512xf32> to vector<8x512xf32>
    %350 = arith.addf %348, %349 : vector<8x512xf32>
    %351 = vector.extract_strided_slice %350 {offsets = [0, 0], sizes = [8, 32], strides = [1, 1]} : vector<8x512xf32> to vector<8x32xf32>
    %352 = arith.negf %351 : vector<8x32xf32>
    %353 = math.exp %352 : vector<8x32xf32>
    %cst_77 = arith.constant 1.000000e+00 : f32
    %354 = vector.broadcast %cst_77 : f32 to vector<8x32xf32>
    %355 = arith.addf %354, %353 : vector<8x32xf32>
    %356 = arith.divf %354, %355 : vector<8x32xf32>
    %357 = vector.extract_strided_slice %350 {offsets = [0, 128], sizes = [8, 32], strides = [1, 1]} : vector<8x512xf32> to vector<8x32xf32>
    %358 = arith.negf %357 : vector<8x32xf32>
    %359 = math.exp %358 : vector<8x32xf32>
    %cst_78 = arith.constant 1.000000e+00 : f32
    %360 = vector.broadcast %cst_78 : f32 to vector<8x32xf32>
    %361 = arith.addf %360, %359 : vector<8x32xf32>
    %362 = arith.divf %360, %361 : vector<8x32xf32>
    %363 = vector.extract_strided_slice %350 {offsets = [0, 256], sizes = [8, 32], strides = [1, 1]} : vector<8x512xf32> to vector<8x32xf32>
    %364 = math.tanh %363 : vector<8x32xf32>
    %365 = vector.extract_strided_slice %350 {offsets = [0, 384], sizes = [8, 32], strides = [1, 1]} : vector<8x512xf32> to vector<8x32xf32>
    %366 = arith.negf %365 : vector<8x32xf32>
    %367 = math.exp %366 : vector<8x32xf32>
    %cst_79 = arith.constant 1.000000e+00 : f32
    %368 = vector.broadcast %cst_79 : f32 to vector<8x32xf32>
    %369 = arith.addf %368, %367 : vector<8x32xf32>
    %370 = arith.divf %368, %369 : vector<8x32xf32>
    %371 = arith.mulf %362, %341 : vector<8x32xf32>
    %372 = arith.mulf %356, %364 : vector<8x32xf32>
    %373 = arith.addf %371, %372 : vector<8x32xf32>
    %374 = math.tanh %373 : vector<8x32xf32>
    %375 = arith.mulf %370, %374 : vector<8x32xf32>
    %376 = arith.truncf %155 : vector<8x32xf32> to vector<8x32xbf16>
    %cst_80 = arith.constant dense<0.000000e+00> : vector<8x512xf32>
    %377 = tpu.matmul %376, %243, %cst_80 {dimension_numbers = #tpu.dot_dimension_numbers<[1], [0], [0], [1], [0, 0, 1, 1], [], []>} : vector<8x32xbf16>, vector<32x512xbf16>, vector<8x512xf32> -> vector<8x512xf32>
    %378 = arith.truncf %375 : vector<8x32xf32> to vector<8x32xbf16>
    %cst_81 = arith.constant dense<0.000000e+00> : vector<8x512xf32>
    %379 = tpu.matmul %378, %244, %cst_81 {dimension_numbers = #tpu.dot_dimension_numbers<[1], [0], [0], [1], [0, 0, 1, 1], [], []>} : vector<8x32xbf16>, vector<32x512xbf16>, vector<8x512xf32> -> vector<8x512xf32>
    %380 = arith.addf %377, %379 : vector<8x512xf32>
    %381 = vector.broadcast %245 : vector<1x512xf32> to vector<8x512xf32>
    %382 = arith.addf %380, %381 : vector<8x512xf32>
    %383 = vector.extract_strided_slice %382 {offsets = [0, 0], sizes = [8, 32], strides = [1, 1]} : vector<8x512xf32> to vector<8x32xf32>
    %384 = arith.negf %383 : vector<8x32xf32>
    %385 = math.exp %384 : vector<8x32xf32>
    %cst_82 = arith.constant 1.000000e+00 : f32
    %386 = vector.broadcast %cst_82 : f32 to vector<8x32xf32>
    %387 = arith.addf %386, %385 : vector<8x32xf32>
    %388 = arith.divf %386, %387 : vector<8x32xf32>
    %389 = vector.extract_strided_slice %382 {offsets = [0, 128], sizes = [8, 32], strides = [1, 1]} : vector<8x512xf32> to vector<8x32xf32>
    %390 = arith.negf %389 : vector<8x32xf32>
    %391 = math.exp %390 : vector<8x32xf32>
    %cst_83 = arith.constant 1.000000e+00 : f32
    %392 = vector.broadcast %cst_83 : f32 to vector<8x32xf32>
    %393 = arith.addf %392, %391 : vector<8x32xf32>
    %394 = arith.divf %392, %393 : vector<8x32xf32>
    %395 = vector.extract_strided_slice %382 {offsets = [0, 256], sizes = [8, 32], strides = [1, 1]} : vector<8x512xf32> to vector<8x32xf32>
    %396 = math.tanh %395 : vector<8x32xf32>
    %397 = vector.extract_strided_slice %382 {offsets = [0, 384], sizes = [8, 32], strides = [1, 1]} : vector<8x512xf32> to vector<8x32xf32>
    %398 = arith.negf %397 : vector<8x32xf32>
    %399 = math.exp %398 : vector<8x32xf32>
    %cst_84 = arith.constant 1.000000e+00 : f32
    %400 = vector.broadcast %cst_84 : f32 to vector<8x32xf32>
    %401 = arith.addf %400, %399 : vector<8x32xf32>
    %402 = arith.divf %400, %401 : vector<8x32xf32>
    %403 = arith.mulf %394, %373 : vector<8x32xf32>
    %404 = arith.mulf %388, %396 : vector<8x32xf32>
    %405 = arith.addf %403, %404 : vector<8x32xf32>
    %406 = math.tanh %405 : vector<8x32xf32>
    %407 = arith.mulf %402, %406 : vector<8x32xf32>
    %408 = arith.truncf %184 : vector<8x32xf32> to vector<8x32xbf16>
    %cst_85 = arith.constant dense<0.000000e+00> : vector<8x512xf32>
    %409 = tpu.matmul %408, %243, %cst_85 {dimension_numbers = #tpu.dot_dimension_numbers<[1], [0], [0], [1], [0, 0, 1, 1], [], []>} : vector<8x32xbf16>, vector<32x512xbf16>, vector<8x512xf32> -> vector<8x512xf32>
    %410 = arith.truncf %407 : vector<8x32xf32> to vector<8x32xbf16>
    %cst_86 = arith.constant dense<0.000000e+00> : vector<8x512xf32>
    %411 = tpu.matmul %410, %244, %cst_86 {dimension_numbers = #tpu.dot_dimension_numbers<[1], [0], [0], [1], [0, 0, 1, 1], [], []>} : vector<8x32xbf16>, vector<32x512xbf16>, vector<8x512xf32> -> vector<8x512xf32>
    %412 = arith.addf %409, %411 : vector<8x512xf32>
    %413 = vector.broadcast %245 : vector<1x512xf32> to vector<8x512xf32>
    %414 = arith.addf %412, %413 : vector<8x512xf32>
    %415 = vector.extract_strided_slice %414 {offsets = [0, 0], sizes = [8, 32], strides = [1, 1]} : vector<8x512xf32> to vector<8x32xf32>
    %416 = arith.negf %415 : vector<8x32xf32>
    %417 = math.exp %416 : vector<8x32xf32>
    %cst_87 = arith.constant 1.000000e+00 : f32
    %418 = vector.broadcast %cst_87 : f32 to vector<8x32xf32>
    %419 = arith.addf %418, %417 : vector<8x32xf32>
    %420 = arith.divf %418, %419 : vector<8x32xf32>
    %421 = vector.extract_strided_slice %414 {offsets = [0, 128], sizes = [8, 32], strides = [1, 1]} : vector<8x512xf32> to vector<8x32xf32>
    %422 = arith.negf %421 : vector<8x32xf32>
    %423 = math.exp %422 : vector<8x32xf32>
    %cst_88 = arith.constant 1.000000e+00 : f32
    %424 = vector.broadcast %cst_88 : f32 to vector<8x32xf32>
    %425 = arith.addf %424, %423 : vector<8x32xf32>
    %426 = arith.divf %424, %425 : vector<8x32xf32>
    %427 = vector.extract_strided_slice %414 {offsets = [0, 256], sizes = [8, 32], strides = [1, 1]} : vector<8x512xf32> to vector<8x32xf32>
    %428 = math.tanh %427 : vector<8x32xf32>
    %429 = vector.extract_strided_slice %414 {offsets = [0, 384], sizes = [8, 32], strides = [1, 1]} : vector<8x512xf32> to vector<8x32xf32>
    %430 = arith.negf %429 : vector<8x32xf32>
    %431 = math.exp %430 : vector<8x32xf32>
    %cst_89 = arith.constant 1.000000e+00 : f32
    %432 = vector.broadcast %cst_89 : f32 to vector<8x32xf32>
    %433 = arith.addf %432, %431 : vector<8x32xf32>
    %434 = arith.divf %432, %433 : vector<8x32xf32>
    %435 = arith.mulf %426, %405 : vector<8x32xf32>
    %436 = arith.mulf %420, %428 : vector<8x32xf32>
    %437 = arith.addf %435, %436 : vector<8x32xf32>
    %438 = math.tanh %437 : vector<8x32xf32>
    %439 = arith.mulf %434, %438 : vector<8x32xf32>
    %440 = arith.truncf %213 : vector<8x32xf32> to vector<8x32xbf16>
    %cst_90 = arith.constant dense<0.000000e+00> : vector<8x512xf32>
    %441 = tpu.matmul %440, %243, %cst_90 {dimension_numbers = #tpu.dot_dimension_numbers<[1], [0], [0], [1], [0, 0, 1, 1], [], []>} : vector<8x32xbf16>, vector<32x512xbf16>, vector<8x512xf32> -> vector<8x512xf32>
    %442 = arith.truncf %439 : vector<8x32xf32> to vector<8x32xbf16>
    %cst_91 = arith.constant dense<0.000000e+00> : vector<8x512xf32>
    %443 = tpu.matmul %442, %244, %cst_91 {dimension_numbers = #tpu.dot_dimension_numbers<[1], [0], [0], [1], [0, 0, 1, 1], [], []>} : vector<8x32xbf16>, vector<32x512xbf16>, vector<8x512xf32> -> vector<8x512xf32>
    %444 = arith.addf %441, %443 : vector<8x512xf32>
    %445 = vector.broadcast %245 : vector<1x512xf32> to vector<8x512xf32>
    %446 = arith.addf %444, %445 : vector<8x512xf32>
    %447 = vector.extract_strided_slice %446 {offsets = [0, 0], sizes = [8, 32], strides = [1, 1]} : vector<8x512xf32> to vector<8x32xf32>
    %448 = arith.negf %447 : vector<8x32xf32>
    %449 = math.exp %448 : vector<8x32xf32>
    %cst_92 = arith.constant 1.000000e+00 : f32
    %450 = vector.broadcast %cst_92 : f32 to vector<8x32xf32>
    %451 = arith.addf %450, %449 : vector<8x32xf32>
    %452 = arith.divf %450, %451 : vector<8x32xf32>
    %453 = vector.extract_strided_slice %446 {offsets = [0, 128], sizes = [8, 32], strides = [1, 1]} : vector<8x512xf32> to vector<8x32xf32>
    %454 = arith.negf %453 : vector<8x32xf32>
    %455 = math.exp %454 : vector<8x32xf32>
    %cst_93 = arith.constant 1.000000e+00 : f32
    %456 = vector.broadcast %cst_93 : f32 to vector<8x32xf32>
    %457 = arith.addf %456, %455 : vector<8x32xf32>
    %458 = arith.divf %456, %457 : vector<8x32xf32>
    %459 = vector.extract_strided_slice %446 {offsets = [0, 256], sizes = [8, 32], strides = [1, 1]} : vector<8x512xf32> to vector<8x32xf32>
    %460 = math.tanh %459 : vector<8x32xf32>
    %461 = vector.extract_strided_slice %446 {offsets = [0, 384], sizes = [8, 32], strides = [1, 1]} : vector<8x512xf32> to vector<8x32xf32>
    %462 = arith.negf %461 : vector<8x32xf32>
    %463 = math.exp %462 : vector<8x32xf32>
    %cst_94 = arith.constant 1.000000e+00 : f32
    %464 = vector.broadcast %cst_94 : f32 to vector<8x32xf32>
    %465 = arith.addf %464, %463 : vector<8x32xf32>
    %466 = arith.divf %464, %465 : vector<8x32xf32>
    %467 = arith.mulf %458, %437 : vector<8x32xf32>
    %468 = arith.mulf %452, %460 : vector<8x32xf32>
    %469 = arith.addf %467, %468 : vector<8x32xf32>
    %470 = math.tanh %469 : vector<8x32xf32>
    %471 = arith.mulf %466, %470 : vector<8x32xf32>
    %472 = arith.truncf %242 : vector<8x32xf32> to vector<8x32xbf16>
    %cst_95 = arith.constant dense<0.000000e+00> : vector<8x512xf32>
    %473 = tpu.matmul %472, %243, %cst_95 {dimension_numbers = #tpu.dot_dimension_numbers<[1], [0], [0], [1], [0, 0, 1, 1], [], []>} : vector<8x32xbf16>, vector<32x512xbf16>, vector<8x512xf32> -> vector<8x512xf32>
    %474 = arith.truncf %471 : vector<8x32xf32> to vector<8x32xbf16>
    %cst_96 = arith.constant dense<0.000000e+00> : vector<8x512xf32>
    %475 = tpu.matmul %474, %244, %cst_96 {dimension_numbers = #tpu.dot_dimension_numbers<[1], [0], [0], [1], [0, 0, 1, 1], [], []>} : vector<8x32xbf16>, vector<32x512xbf16>, vector<8x512xf32> -> vector<8x512xf32>
    %476 = arith.addf %473, %475 : vector<8x512xf32>
    %477 = vector.broadcast %245 : vector<1x512xf32> to vector<8x512xf32>
    %478 = arith.addf %476, %477 : vector<8x512xf32>
    %479 = vector.extract_strided_slice %478 {offsets = [0, 0], sizes = [8, 32], strides = [1, 1]} : vector<8x512xf32> to vector<8x32xf32>
    %480 = arith.negf %479 : vector<8x32xf32>
    %481 = math.exp %480 : vector<8x32xf32>
    %cst_97 = arith.constant 1.000000e+00 : f32
    %482 = vector.broadcast %cst_97 : f32 to vector<8x32xf32>
    %483 = arith.addf %482, %481 : vector<8x32xf32>
    %484 = arith.divf %482, %483 : vector<8x32xf32>
    %485 = vector.extract_strided_slice %478 {offsets = [0, 128], sizes = [8, 32], strides = [1, 1]} : vector<8x512xf32> to vector<8x32xf32>
    %486 = arith.negf %485 : vector<8x32xf32>
    %487 = math.exp %486 : vector<8x32xf32>
    %cst_98 = arith.constant 1.000000e+00 : f32
    %488 = vector.broadcast %cst_98 : f32 to vector<8x32xf32>
    %489 = arith.addf %488, %487 : vector<8x32xf32>
    %490 = arith.divf %488, %489 : vector<8x32xf32>
    %491 = vector.extract_strided_slice %478 {offsets = [0, 256], sizes = [8, 32], strides = [1, 1]} : vector<8x512xf32> to vector<8x32xf32>
    %492 = math.tanh %491 : vector<8x32xf32>
    %493 = vector.extract_strided_slice %478 {offsets = [0, 384], sizes = [8, 32], strides = [1, 1]} : vector<8x512xf32> to vector<8x32xf32>
    %494 = arith.negf %493 : vector<8x32xf32>
    %495 = math.exp %494 : vector<8x32xf32>
    %cst_99 = arith.constant 1.000000e+00 : f32
    %496 = vector.broadcast %cst_99 : f32 to vector<8x32xf32>
    %497 = arith.addf %496, %495 : vector<8x32xf32>
    %498 = arith.divf %496, %497 : vector<8x32xf32>
    %499 = arith.mulf %490, %469 : vector<8x32xf32>
    %500 = arith.mulf %484, %492 : vector<8x32xf32>
    %501 = arith.addf %499, %500 : vector<8x32xf32>
    %502 = math.tanh %501 : vector<8x32xf32>
    %503 = arith.mulf %498, %502 : vector<8x32xf32>
    %c0_100 = arith.constant 0 : index
    %c0_101 = arith.constant 0 : index
    %504 = vector.load %arg7[%c0_100, %c0_101] : memref<32x1xbf16, #tpu.memory_space<vmem>>, vector<32x1xbf16>
    %c0_102 = arith.constant 0 : index
    %c0_103 = arith.constant 0 : index
    %505 = vector.load %arg8[%c0_102, %c0_103] : memref<1x1xf32, #tpu.memory_space<vmem>>, vector<1x1xf32>
    %506 = arith.truncf %279 : vector<8x32xf32> to vector<8x32xbf16>
    %cst_104 = arith.constant dense<0.000000e+00> : vector<8x1xf32>
    %507 = tpu.matmul %506, %504, %cst_104 {dimension_numbers = #tpu.dot_dimension_numbers<[1], [0], [0], [1], [0, 0, 1, 1], [], []>} : vector<8x32xbf16>, vector<32x1xbf16>, vector<8x1xf32> -> vector<8x1xf32>
    %508 = vector.broadcast %505 : vector<1x1xf32> to vector<8x1xf32>
    %509 = arith.addf %507, %508 : vector<8x1xf32>
    %cst_105 = arith.constant 0.000000e+00 : f32
    %510 = vector.broadcast %cst_105 : f32 to vector<8x1xf32>
    %511 = arith.maximumf %509, %510 : vector<8x1xf32>
    %c0_106 = arith.constant 0 : index
    %c0_107 = arith.constant 0 : index
    %512 = vector.load %arg9[%c0_106, %c0_107] : memref<64x1xf32, #tpu.memory_space<vmem>>, vector<8x1xf32>
    tpu.vector_store %arg9[%c0_106, %c0_107], %511 {strides = array<i32>} : memref<64x1xf32, #tpu.memory_space<vmem>>, vector<8x1xf32>,
    %513 = arith.truncf %311 : vector<8x32xf32> to vector<8x32xbf16>
    %cst_108 = arith.constant dense<0.000000e+00> : vector<8x1xf32>
    %514 = tpu.matmul %513, %504, %cst_108 {dimension_numbers = #tpu.dot_dimension_numbers<[1], [0], [0], [1], [0, 0, 1, 1], [], []>} : vector<8x32xbf16>, vector<32x1xbf16>, vector<8x1xf32> -> vector<8x1xf32>
    %515 = vector.broadcast %505 : vector<1x1xf32> to vector<8x1xf32>
    %516 = arith.addf %514, %515 : vector<8x1xf32>
    %cst_109 = arith.constant 0.000000e+00 : f32
    %517 = vector.broadcast %cst_109 : f32 to vector<8x1xf32>
    %518 = arith.maximumf %516, %517 : vector<8x1xf32>
    %c8_110 = arith.constant 8 : index
    %c0_111 = arith.constant 0 : index
    %519 = vector.load %arg9[%c8_110, %c0_111] : memref<64x1xf32, #tpu.memory_space<vmem>>, vector<8x1xf32>
    tpu.vector_store %arg9[%c8_110, %c0_111], %518 {strides = array<i32>} : memref<64x1xf32, #tpu.memory_space<vmem>>, vector<8x1xf32>,
    %520 = arith.truncf %343 : vector<8x32xf32> to vector<8x32xbf16>
    %cst_112 = arith.constant dense<0.000000e+00> : vector<8x1xf32>
    %521 = tpu.matmul %520, %504, %cst_112 {dimension_numbers = #tpu.dot_dimension_numbers<[1], [0], [0], [1], [0, 0, 1, 1], [], []>} : vector<8x32xbf16>, vector<32x1xbf16>, vector<8x1xf32> -> vector<8x1xf32>
    %522 = vector.broadcast %505 : vector<1x1xf32> to vector<8x1xf32>
    %523 = arith.addf %521, %522 : vector<8x1xf32>
    %cst_113 = arith.constant 0.000000e+00 : f32
    %524 = vector.broadcast %cst_113 : f32 to vector<8x1xf32>
    %525 = arith.maximumf %523, %524 : vector<8x1xf32>
    %c16_114 = arith.constant 16 : index
    %c0_115 = arith.constant 0 : index
    %526 = vector.load %arg9[%c16_114, %c0_115] : memref<64x1xf32, #tpu.memory_space<vmem>>, vector<8x1xf32>
    tpu.vector_store %arg9[%c16_114, %c0_115], %525 {strides = array<i32>} : memref<64x1xf32, #tpu.memory_space<vmem>>, vector<8x1xf32>,
    %527 = arith.truncf %375 : vector<8x32xf32> to vector<8x32xbf16>
    %cst_116 = arith.constant dense<0.000000e+00> : vector<8x1xf32>
    %528 = tpu.matmul %527, %504, %cst_116 {dimension_numbers = #tpu.dot_dimension_numbers<[1], [0], [0], [1], [0, 0, 1, 1], [], []>} : vector<8x32xbf16>, vector<32x1xbf16>, vector<8x1xf32> -> vector<8x1xf32>
    %529 = vector.broadcast %505 : vector<1x1xf32> to vector<8x1xf32>
    %530 = arith.addf %528, %529 : vector<8x1xf32>
    %cst_117 = arith.constant 0.000000e+00 : f32
    %531 = vector.broadcast %cst_117 : f32 to vector<8x1xf32>
    %532 = arith.maximumf %530, %531 : vector<8x1xf32>
    %c24_118 = arith.constant 24 : index
    %c0_119 = arith.constant 0 : index
    %533 = vector.load %arg9[%c24_118, %c0_119] : memref<64x1xf32, #tpu.memory_space<vmem>>, vector<8x1xf32>
    tpu.vector_store %arg9[%c24_118, %c0_119], %532 {strides = array<i32>} : memref<64x1xf32, #tpu.memory_space<vmem>>, vector<8x1xf32>,
    %534 = arith.truncf %407 : vector<8x32xf32> to vector<8x32xbf16>
    %cst_120 = arith.constant dense<0.000000e+00> : vector<8x1xf32>
    %535 = tpu.matmul %534, %504, %cst_120 {dimension_numbers = #tpu.dot_dimension_numbers<[1], [0], [0], [1], [0, 0, 1, 1], [], []>} : vector<8x32xbf16>, vector<32x1xbf16>, vector<8x1xf32> -> vector<8x1xf32>
    %536 = vector.broadcast %505 : vector<1x1xf32> to vector<8x1xf32>
    %537 = arith.addf %535, %536 : vector<8x1xf32>
    %cst_121 = arith.constant 0.000000e+00 : f32
    %538 = vector.broadcast %cst_121 : f32 to vector<8x1xf32>
    %539 = arith.maximumf %537, %538 : vector<8x1xf32>
    %c32_122 = arith.constant 32 : index
    %c0_123 = arith.constant 0 : index
    %540 = vector.load %arg9[%c32_122, %c0_123] : memref<64x1xf32, #tpu.memory_space<vmem>>, vector<8x1xf32>
    tpu.vector_store %arg9[%c32_122, %c0_123], %539 {strides = array<i32>} : memref<64x1xf32, #tpu.memory_space<vmem>>, vector<8x1xf32>,
    %541 = arith.truncf %439 : vector<8x32xf32> to vector<8x32xbf16>
    %cst_124 = arith.constant dense<0.000000e+00> : vector<8x1xf32>
    %542 = tpu.matmul %541, %504, %cst_124 {dimension_numbers = #tpu.dot_dimension_numbers<[1], [0], [0], [1], [0, 0, 1, 1], [], []>} : vector<8x32xbf16>, vector<32x1xbf16>, vector<8x1xf32> -> vector<8x1xf32>
    %543 = vector.broadcast %505 : vector<1x1xf32> to vector<8x1xf32>
    %544 = arith.addf %542, %543 : vector<8x1xf32>
    %cst_125 = arith.constant 0.000000e+00 : f32
    %545 = vector.broadcast %cst_125 : f32 to vector<8x1xf32>
    %546 = arith.maximumf %544, %545 : vector<8x1xf32>
    %c40_126 = arith.constant 40 : index
    %c0_127 = arith.constant 0 : index
    %547 = vector.load %arg9[%c40_126, %c0_127] : memref<64x1xf32, #tpu.memory_space<vmem>>, vector<8x1xf32>
    tpu.vector_store %arg9[%c40_126, %c0_127], %546 {strides = array<i32>} : memref<64x1xf32, #tpu.memory_space<vmem>>, vector<8x1xf32>,
    %548 = arith.truncf %471 : vector<8x32xf32> to vector<8x32xbf16>
    %cst_128 = arith.constant dense<0.000000e+00> : vector<8x1xf32>
    %549 = tpu.matmul %548, %504, %cst_128 {dimension_numbers = #tpu.dot_dimension_numbers<[1], [0], [0], [1], [0, 0, 1, 1], [], []>} : vector<8x32xbf16>, vector<32x1xbf16>, vector<8x1xf32> -> vector<8x1xf32>
    %550 = vector.broadcast %505 : vector<1x1xf32> to vector<8x1xf32>
    %551 = arith.addf %549, %550 : vector<8x1xf32>
    %cst_129 = arith.constant 0.000000e+00 : f32
    %552 = vector.broadcast %cst_129 : f32 to vector<8x1xf32>
    %553 = arith.maximumf %551, %552 : vector<8x1xf32>
    %c48_130 = arith.constant 48 : index
    %c0_131 = arith.constant 0 : index
    %554 = vector.load %arg9[%c48_130, %c0_131] : memref<64x1xf32, #tpu.memory_space<vmem>>, vector<8x1xf32>
    tpu.vector_store %arg9[%c48_130, %c0_131], %553 {strides = array<i32>} : memref<64x1xf32, #tpu.memory_space<vmem>>, vector<8x1xf32>,
    %555 = arith.truncf %503 : vector<8x32xf32> to vector<8x32xbf16>
    %cst_132 = arith.constant dense<0.000000e+00> : vector<8x1xf32>
    %556 = tpu.matmul %555, %504, %cst_132 {dimension_numbers = #tpu.dot_dimension_numbers<[1], [0], [0], [1], [0, 0, 1, 1], [], []>} : vector<8x32xbf16>, vector<32x1xbf16>, vector<8x1xf32> -> vector<8x1xf32>
    %557 = vector.broadcast %505 : vector<1x1xf32> to vector<8x1xf32>
    %558 = arith.addf %556, %557 : vector<8x1xf32>
    %cst_133 = arith.constant 0.000000e+00 : f32
    %559 = vector.broadcast %cst_133 : f32 to vector<8x1xf32>
    %560 = arith.maximumf %558, %559 : vector<8x1xf32>
    %c56_134 = arith.constant 56 : index
    %c0_135 = arith.constant 0 : index
    %561 = vector.load %arg9[%c56_134, %c0_135] : memref<64x1xf32, #tpu.memory_space<vmem>>, vector<8x1xf32>
    tpu.vector_store %arg9[%c56_134, %c0_135], %560 {strides = array<i32>} : memref<64x1xf32, #tpu.memory_space<vmem>>, vector<8x1xf32>,
    return
  }
}

</mosaic_0001>

<llo_original>
// kernel: tpu_custom_call.1
$region0: #{tpu_custom_call.1}
  #allocation0 [shape = 'u32[]', space=smem, size = 0x4, offset = 0x4, fixed_abs, tag = 'smem constant byte address 0x4 - core index']
  #allocation1 [shape = 'u32[144,128]{1,0:T(1,128)}', space=vmem, size = 0x12000, scoped, tag = 'internal scratch']
  #allocation2 [shape = 'f32[64,512]{1,0:T(8,128)}', space=vmem, size = 0x20000, scoped, tag = 'scratch operand']
  #allocation3 [shape = 'f32[1,1]{1,0:T(1,128)S(1)}', space=vmem, size = 0x200, scoped, tag = 'scoped memory for tpu_custom_call.1']
  %s0 = inlined_call_operand.vmem [shape: f32[64,32], index: 0, kind: input, shape index: {}]
  %s1 = inlined_call_operand.vmem [shape: bf16[32,512], index: 1, kind: input, shape index: {}]
  %s2 = inlined_call_operand.hbm [shape: bf16[32,512], index: 2, kind: input, shape index: {}]
  %s3 = inlined_call_operand.hbm [shape: f32[1,512], index: 3, kind: input, shape index: {}]
  %s4 = inlined_call_operand.vmem [shape: bf16[32,512], index: 4, kind: input, shape index: {}]
  %s5 = inlined_call_operand.hbm [shape: bf16[32,512], index: 5, kind: input, shape index: {}]
  %s6 = inlined_call_operand.vmem [shape: f32[1,512], index: 6, kind: input, shape index: {}]
  %s7 = inlined_call_operand.vmem [shape: bf16[32,1], index: 7, kind: input, shape index: {}]
  %s8 = inlined_call_operand.<no memory space> [shape: f32[1,1], index: 8, kind: input, shape index: {}]
  %s9 = inlined_call_operand.vmem [shape: f32[64,1], index: 9, kind: output, shape index: {}]
  %s10 = sld [smem:[#allocation0]]
  $region58: #{tpu_custom_call.1} parent=0
    _
  %s12 = ssub.s32 1, %s10
  %s13 = scalar_select 0, %s12, %s10
  %v14 = vstv %s8
  %15 = vst [vmem:[#allocation3] sm:$0x1] %v14
  $region1: #{tpu_custom_call.1} parent=0
    #allocation4 [shape = 'u8[32768]{0}', space=vmem, size = 0x8000, scoped, tag = 'input window, operand 2, single buffered']
    #allocation5 [shape = 's32[1]{0}', space=sflag, size = 0x4, scoped, tag = 'scoped memory for tpu_custom_call.1']
    #allocation6 [shape = 'u8[2048]{0}', space=vmem, size = 0x800, scoped, tag = 'input window, operand 3, single buffered']
    #allocation7 [shape = 's32[1]{0}', space=sflag, size = 0x4, scoped, tag = 'scoped memory for tpu_custom_call.1']
    #allocation8 [shape = 'u8[32768]{0}', space=vmem, size = 0x8000, scoped, tag = 'input window, operand 5, single buffered']
    %16 = vsyncpa [#allocation5], 0
    %17 = vsyncpa [#allocation7], 0
    // Predicated region
    $region2: #{tpu_custom_call.1} parent=1 // pred_check
      _
    $region3: #{tpu_custom_call.1} parent=1 // pred_check_branch
      %19 = sbr.rel (0) target = $region5
    $region4: #{tpu_custom_call.1} parent=1 // pred_region
      _
    $region5: #{tpu_custom_call.1} parent=1 // pred_fallthru
      _
    // Predicated region
    $region6: #{tpu_custom_call.1} parent=1 // pred_check
      _
    $region7: #{tpu_custom_call.1} parent=1 // pred_check_branch
      %21 = sbr.rel (0) target = $region9
    $region8: #{tpu_custom_call.1} parent=1 // pred_region
      _
    $region9: #{tpu_custom_call.1} parent=1 // pred_fallthru
      _
    // Predicated region
    $region10: #{tpu_custom_call.1} parent=1 // pred_check
      _
    $region11: #{tpu_custom_call.1} parent=1 // pred_check_branch
      %23 = sbr.rel (0) target = $region13
    $region12: #{tpu_custom_call.1} parent=1 // pred_region
      %s25 = ssub.s32 1024, 1024
      %26 = vsyncadd [#allocation5], %s25
      %s27 = sshll.u32 [#allocation4], 4
      %s28 = int_to_ptr.vmem [resolvable:$true] %s27
      %33 = dma.hbm_to_vmem [thread:$0]  %s2, 1024, %s28, [#allocation5], 256, 256, 16
    $region13: #{tpu_custom_call.1} parent=1 // pred_fallthru
      _
    // Predicated region
    $region14: #{tpu_custom_call.1} parent=1 // pred_check
      _
    $region15: #{tpu_custom_call.1} parent=1 // pred_check_branch
      %35 = sbr.rel (0) target = $region17
    $region16: #{tpu_custom_call.1} parent=1 // pred_region
      %s37 = ssub.s32 64, 64
      %38 = vsyncadd [#allocation7], %s37
      %s40 = sshll.u32 [#allocation6], 4
      %s41 = int_to_ptr.vmem [resolvable:$true] %s40
      %43 = dma.hbm_to_vmem [thread:$0]  %s3, 64, %s41, [#allocation7]
    $region17: #{tpu_custom_call.1} parent=1 // pred_fallthru
      _
    // Predicated region
    $region18: #{tpu_custom_call.1} parent=1 // pred_check
      _
    $region19: #{tpu_custom_call.1} parent=1 // pred_check_branch
      %45 = sbr.rel (0) target = $region21
    $region20: #{tpu_custom_call.1} parent=1 // pred_region
      _
    $region21: #{tpu_custom_call.1} parent=1 // pred_fallthru
      _
    // Predicated region
    $region22: #{tpu_custom_call.1} parent=1 // pred_check
      _
    $region23: #{tpu_custom_call.1} parent=1 // pred_check_branch
      %47 = sbr.rel (0) target = $region25
    $region24: #{tpu_custom_call.1} parent=1 // pred_region
      %s49 = ssub.s32 1024, 1024
      %50 = vsyncadd [#allocation7], %s49
      %s51 = sshll.u32 [#allocation8], 4
      %s52 = int_to_ptr.vmem [resolvable:$true] %s51
      %57 = dma.hbm_to_vmem [thread:$0]  %s5, 1024, %s52, [#allocation7], 256, 256, 16
    $region25: #{tpu_custom_call.1} parent=1 // pred_fallthru
      _
    // Predicated region
    $region26: #{tpu_custom_call.1} parent=1 // pred_check
      _
    $region27: #{tpu_custom_call.1} parent=1 // pred_check_branch
      %59 = sbr.rel (0) target = $region29
    $region28: #{tpu_custom_call.1} parent=1 // pred_region
      _
    $region29: #{tpu_custom_call.1} parent=1 // pred_fallthru
      _
    // Predicated region
    $region30: #{tpu_custom_call.1} parent=1 // pred_check
      _
    $region31: #{tpu_custom_call.1} parent=1 // pred_check_branch
      %61 = sbr.rel (0) target = $region33
    $region32: #{tpu_custom_call.1} parent=1 // pred_region
      _
    $region33: #{tpu_custom_call.1} parent=1 // pred_fallthru
      _
    // Predicated region
    $region34: #{tpu_custom_call.1} parent=1 // pred_check
      _
    $region35: #{tpu_custom_call.1} parent=1 // pred_check_branch
      %63 = sbr.rel (0) target = $region37
    $region36: #{tpu_custom_call.1} parent=1 // pred_region
      _
    $region37: #{tpu_custom_call.1} parent=1 // pred_fallthru
      _
    // Predicated region
    $region38: #{tpu_custom_call.1} parent=1 // pred_check
      _
    $region39: #{tpu_custom_call.1} parent=1 // pred_check_branch
      %65 = sbr.rel (0) target = $region41
    $region40: #{tpu_custom_call.1} parent=1 // pred_region
      %66 = dma.done [#allocation5], 1024
    $region41: #{tpu_custom_call.1} parent=1 // pred_fallthru
      _
    // Predicated region
    $region42: #{tpu_custom_call.1} parent=1 // pred_check
      _
    $region43: #{tpu_custom_call.1} parent=1 // pred_check_branch
      %68 = sbr.rel (0) target = $region45
    $region44: #{tpu_custom_call.1} parent=1 // pred_region
      %69 = dma.done [#allocation7], 64
    $region45: #{tpu_custom_call.1} parent=1 // pred_fallthru
      _
    // Predicated region
    $region46: #{tpu_custom_call.1} parent=1 // pred_check
      _
    $region47: #{tpu_custom_call.1} parent=1 // pred_check_branch
      %71 = sbr.rel (0) target = $region49
    $region48: #{tpu_custom_call.1} parent=1 // pred_region
      %72 = dma.done [#allocation7], 1024
    $region49: #{tpu_custom_call.1} parent=1 // pred_fallthru
      _
    %v74 = vld [vmem:[%s0] sm:$0xff]
    %v75 = vld [vmem:[%s0 + $0x8] sm:$0xff]
    %v76 = vld [vmem:[%s0 + $0x10] sm:$0xff]
    %v77 = vld [vmem:[%s0 + $0x18] sm:$0xff]
    %v78 = vld [vmem:[%s0 + $0x20] sm:$0xff]
    %v79 = vld [vmem:[%s0 + $0x28] sm:$0xff]
    %v80 = vld [vmem:[%s0 + $0x30] sm:$0xff]
    %v81 = vld [vmem:[%s0 + $0x38] sm:$0xff]
    %v82 = vpack.c.bf16 %v75, %v74
    %v83 = vpack.c.bf16 %v77, %v76
    %v84 = vpack.c.bf16 %v79, %v78
    %v85 = vpack.c.bf16 %v81, %v80
    %v86 = vld [vmem:[%s1] sm:$0xff]
    %v87 = vld [vmem:[%s1 + $0x8] sm:$0xff]
    %v88 = vld [vmem:[%s1 + $0x10] sm:$0xff]
    %v89 = vld [vmem:[%s1 + $0x18] sm:$0xff]
    %v90 = vld [vmem:[%s1 + $0x20] sm:$0xff]
    %v91 = vld [vmem:[%s1 + $0x28] sm:$0xff]
    %v92 = vld [vmem:[%s1 + $0x30] sm:$0xff]
    %v93 = vld [vmem:[%s1 + $0x38] sm:$0xff]
    %v94 = vld [vmem:[#allocation4] sm:$0xff]
    %v95 = vld [vmem:[#allocation4 + $0x8] sm:$0xff]
    %v96 = vld [vmem:[#allocation4 + $0x10] sm:$0xff]
    %v97 = vld [vmem:[#allocation4 + $0x18] sm:$0xff]
    %v98 = vld [vmem:[#allocation4 + $0x20] sm:$0xff]
    %v99 = vld [vmem:[#allocation4 + $0x28] sm:$0xff]
    %v100 = vld [vmem:[#allocation4 + $0x30] sm:$0xff]
    %v101 = vld [vmem:[#allocation4 + $0x38] sm:$0xff]
    %v102 = vld [vmem:[#allocation6] sm:$0xf]
    %v104 = vlaneseq
    %v105 = vshrl.u32 %v104, 7
    %v106 = vsub.s32 0, %v105
    %v107 = vrot.slane %v102, %v106
    %v108 = vlaneseq
    %v109 = vshrl.u32 %v108, 7
    %v110 = vsub.s32 1, %v109
    %v111 = vrot.slane %v102, %v110
    %v112 = vlaneseq
    %v113 = vshrl.u32 %v112, 7
    %v114 = vsub.s32 2, %v113
    %v115 = vrot.slane %v102, %v114
    %v116 = vlaneseq
    %v117 = vshrl.u32 %v116, 7
    %v118 = vsub.s32 3, %v117
    %v119 = vrot.slane %v102, %v118
    %v132 = vunpack.c.l.b16 %v86
    %v133 = vunpack.c.h.b16 %v86
    %v134 = vunpack.c.l.b16 %v87
    %v135 = vunpack.c.h.b16 %v87
    %v136 = vunpack.c.l.b16 %v88
    %v137 = vunpack.c.h.b16 %v88
    %v138 = vunpack.c.l.b16 %v89
    %v139 = vunpack.c.h.b16 %v89
    %v140 = vunpack.c.l.b16 %v90
    %v141 = vunpack.c.h.b16 %v90
    %v142 = vunpack.c.l.b16 %v91
    %v143 = vunpack.c.h.b16 %v91
    %v144 = vunpack.c.l.b16 %v92
    %v145 = vunpack.c.h.b16 %v92
    %v146 = vunpack.c.l.b16 %v93
    %v147 = vunpack.c.h.b16 %v93
    %v148 = vpack.c.b16 %v136, %v132
    %v149 = vpack.c.b16 %v137, %v133
    %v150 = vpack.c.b16 %v138, %v134
    %v151 = vpack.c.b16 %v139, %v135
    %v152 = vpack.c.b16 %v144, %v140
    %v153 = vpack.c.b16 %v145, %v141
    %v154 = vpack.c.b16 %v146, %v142
    %v155 = vpack.c.b16 %v147, %v143
    %vm164 = vcmask 261120
    %v166 = vsel %vm164, %v82, 0
    %v169 = vsel %vm164, %v83, 0
    %v172 = vsel %vm164, %v84, 0
    %v175 = vsel %vm164, %v85, 0
    %177 = vmatprep.subr.bf16.mxu0 %v149
    %178 = vmatpush1.bf16.msra.mxu0 %v148
    %179 = vmatprep.subr.bf16.mxu0 %v153
    %180 = vmatpush1.bf16.msra.mxu0 %v152
    %181 = vmatprep.subr.bf16.mxu0 0
    %182 = vmatpush1.bf16.msra.mxu0 0
    %183 = vmatprep.subr.bf16.mxu0 0
    %184 = vmatpush1.bf16.msra.mxu0 0
    %185 = vmatprep.subr.bf16.mxu0 0
    %186 = vmatpush1.bf16.msra.mxu0 0
    %187 = vmatprep.subr.bf16.mxu0 0
    %188 = vmatpush1.bf16.msra.mxu0 0
    %189 = vmatprep.subr.bf16.mxu0 0
    %190 = vmatpush1.bf16.msra.mxu0 0
    %191 = vmatprep.subr.bf16.mxu0 0
    %192 = vmatpush1.bf16.msra.mxu0 0
    %193 = vmatprep.subr.bf16.mxu0 0
    %194 = vmatpush1.bf16.msra.mxu0 0
    %195 = vmatprep.subr.bf16.mxu0 0
    %196 = vmatpush1.bf16.msra.mxu0 0
    %197 = vmatprep.subr.bf16.mxu0 0
    %198 = vmatpush1.bf16.msra.mxu0 0
    %199 = vmatprep.subr.bf16.mxu0 0
    %200 = vmatpush1.bf16.msra.mxu0 0
    %201 = vmatprep.subr.bf16.mxu0 0
    %202 = vmatpush1.bf16.msra.mxu0 0
    %203 = vmatprep.subr.bf16.mxu0 0
    %204 = vmatpush1.bf16.msra.mxu0 0
    %205 = vmatprep.subr.bf16.mxu0 0
    %206 = vmatpush1.bf16.msra.mxu0 0
    %207 = vmatprep.subr.bf16.mxu0 0
    %208 = vmatpush1.bf16.msra.mxu0 0
    %209 = vmatprep.mubr.bf16.mxu0 0
    %210 = vmatmul.mubr.bf16.gmra.mrb[0].mxu0 %v166
    %v211 = vpop.f32.mrb[0].mxu0
    %v212 = vadd.f32 %v107, %v211
    %v213 = vpop.f32.mrb[0].mxu0
    %v214 = vadd.f32 %v111, %v213
    %v215 = vpop.f32.mrb[0].mxu0
    %v216 = vadd.f32 %v107, %v215
    %v217 = vpop.f32.mrb[0].mxu0
    %v218 = vadd.f32 %v111, %v217
    %219 = vmatprep.mubr.bf16.mxu0 0
    %220 = vmatmul.mubr.bf16.gmra.mrb[0].mxu0 %v169
    %v221 = vpop.f32.mrb[0].mxu0
    %v222 = vadd.f32 %v107, %v221
    %v223 = vpop.f32.mrb[0].mxu0
    %v224 = vadd.f32 %v111, %v223
    %v225 = vpop.f32.mrb[0].mxu0
    %v226 = vadd.f32 %v107, %v225
    %v227 = vpop.f32.mrb[0].mxu0
    %v228 = vadd.f32 %v111, %v227
    %229 = vmatprep.mubr.bf16.mxu0 0
    %230 = vmatmul.mubr.bf16.gmra.mrb[0].mxu0 %v172
    %v231 = vpop.f32.mrb[0].mxu0
    %v232 = vadd.f32 %v107, %v231
    %v233 = vpop.f32.mrb[0].mxu0
    %v234 = vadd.f32 %v111, %v233
    %v235 = vpop.f32.mrb[0].mxu0
    %v236 = vadd.f32 %v107, %v235
    %v237 = vpop.f32.mrb[0].mxu0
    %v238 = vadd.f32 %v111, %v237
    %239 = vmatprep.mubr.bf16.mxu0 0
    %240 = vmatmul.mubr.bf16.gmra.mrb[0].mxu0 %v175
    %v241 = vpop.f32.mrb[0].mxu0
    %v242 = vadd.f32 %v107, %v241
    %v243 = vpop.f32.mrb[0].mxu0
    %v244 = vadd.f32 %v111, %v243
    %v245 = vpop.f32.mrb[0].mxu0
    %v246 = vadd.f32 %v107, %v245
    %v247 = vpop.f32.mrb[0].mxu0
    %v248 = vadd.f32 %v111, %v247
    %249 = vdwg.mxu0
    %250 = vmatprep.subr.bf16.mxu0 %v151
    %251 = vmatpush1.bf16.msra.mxu0 %v150
    %252 = vmatprep.subr.bf16.mxu0 %v155
    %253 = vmatpush1.bf16.msra.mxu0 %v154
    %254 = vmatprep.subr.bf16.mxu0 0
    %255 = vmatpush1.bf16.msra.mxu0 0
    %256 = vmatprep.subr.bf16.mxu0 0
    %257 = vmatpush1.bf16.msra.mxu0 0
    %258 = vmatprep.subr.bf16.mxu0 0
    %259 = vmatpush1.bf16.msra.mxu0 0
    %260 = vmatprep.subr.bf16.mxu0 0
    %261 = vmatpush1.bf16.msra.mxu0 0
    %262 = vmatprep.subr.bf16.mxu0 0
    %263 = vmatpush1.bf16.msra.mxu0 0
    %264 = vmatprep.subr.bf16.mxu0 0
    %265 = vmatpush1.bf16.msra.mxu0 0
    %266 = vmatprep.subr.bf16.mxu0 0
    %267 = vmatpush1.bf16.msra.mxu0 0
    %268 = vmatprep.subr.bf16.mxu0 0
    %269 = vmatpush1.bf16.msra.mxu0 0
    %270 = vmatprep.subr.bf16.mxu0 0
    %271 = vmatpush1.bf16.msra.mxu0 0
    %272 = vmatprep.subr.bf16.mxu0 0
    %273 = vmatpush1.bf16.msra.mxu0 0
    %274 = vmatprep.subr.bf16.mxu0 0
    %275 = vmatpush1.bf16.msra.mxu0 0
    %276 = vmatprep.subr.bf16.mxu0 0
    %277 = vmatpush1.bf16.msra.mxu0 0
    %278 = vmatprep.subr.bf16.mxu0 0
    %279 = vmatpush1.bf16.msra.mxu0 0
    %280 = vmatprep.subr.bf16.mxu0 0
    %281 = vmatpush1.bf16.msra.mxu0 0
    %282 = vmatprep.mubr.bf16.mxu0 0
    %283 = vmatmul.mubr.bf16.gmra.mrb[0].mxu0 %v166
    %v284 = vpop.f32.mrb[0].mxu0
    %v285 = vadd.f32 %v115, %v284
    %v286 = vpop.f32.mrb[0].mxu0
    %v287 = vadd.f32 %v119, %v286
    %v288 = vpop.f32.mrb[0].mxu0
    %v289 = vadd.f32 %v115, %v288
    %v290 = vpop.f32.mrb[0].mxu0
    %v291 = vadd.f32 %v119, %v290
    %292 = vmatprep.mubr.bf16.mxu0 0
    %293 = vmatmul.mubr.bf16.gmra.mrb[0].mxu0 %v169
    %v294 = vpop.f32.mrb[0].mxu0
    %v295 = vadd.f32 %v115, %v294
    %v296 = vpop.f32.mrb[0].mxu0
    %v297 = vadd.f32 %v119, %v296
    %v298 = vpop.f32.mrb[0].mxu0
    %v299 = vadd.f32 %v115, %v298
    %v300 = vpop.f32.mrb[0].mxu0
    %v301 = vadd.f32 %v119, %v300
    %302 = vmatprep.mubr.bf16.mxu0 0
    %303 = vmatmul.mubr.bf16.gmra.mrb[0].mxu0 %v172
    %v304 = vpop.f32.mrb[0].mxu0
    %v305 = vadd.f32 %v115, %v304
    %v306 = vpop.f32.mrb[0].mxu0
    %v307 = vadd.f32 %v119, %v306
    %v308 = vpop.f32.mrb[0].mxu0
    %v309 = vadd.f32 %v115, %v308
    %v310 = vpop.f32.mrb[0].mxu0
    %v311 = vadd.f32 %v119, %v310
    %312 = vmatprep.mubr.bf16.mxu0 0
    %313 = vmatmul.mubr.bf16.gmra.mrb[0].mxu0 %v175
    %v314 = vpop.f32.mrb[0].mxu0
    %v315 = vadd.f32 %v115, %v314
    %v316 = vpop.f32.mrb[0].mxu0
    %v317 = vadd.f32 %v119, %v316
    %v318 = vpop.f32.mrb[0].mxu0
    %v319 = vadd.f32 %v115, %v318
    %v320 = vpop.f32.mrb[0].mxu0
    %v321 = vadd.f32 %v119, %v320
    %322 = vdwg.mxu0
    %323 = vst [vmem:[#allocation2] sm:$0xff] %v212
    %324 = vst [vmem:[#allocation2 + $0x8] sm:$0xff] %v214
    %325 = vst [vmem:[#allocation2 + $0x10] sm:$0xff] %v285
    %326 = vst [vmem:[#allocation2 + $0x18] sm:$0xff] %v287
    %327 = vst [vmem:[#allocation2 + $0x20] sm:$0xff] %v216
    %328 = vst [vmem:[#allocation2 + $0x28] sm:$0xff] %v218
    %329 = vst [vmem:[#allocation2 + $0x30] sm:$0xff] %v289
    %330 = vst [vmem:[#allocation2 + $0x38] sm:$0xff] %v291
    %331 = vst [vmem:[#allocation2 + $0x40] sm:$0xff] %v222
    %332 = vst [vmem:[#allocation2 + $0x48] sm:$0xff] %v224
    %333 = vst [vmem:[#allocation2 + $0x50] sm:$0xff] %v295
    %334 = vst [vmem:[#allocation2 + $0x58] sm:$0xff] %v297
    %335 = vst [vmem:[#allocation2 + $0x60] sm:$0xff] %v226
    %336 = vst [vmem:[#allocation2 + $0x68] sm:$0xff] %v228
    %337 = vst [vmem:[#allocation2 + $0x70] sm:$0xff] %v299
    %338 = vst [vmem:[#allocation2 + $0x78] sm:$0xff] %v301
    %339 = vst [vmem:[#allocation2 + $0x80] sm:$0xff] %v232
    %340 = vst [vmem:[#allocation2 + $0x88] sm:$0xff] %v234
    %341 = vst [vmem:[#allocation2 + $0x90] sm:$0xff] %v305
    %342 = vst [vmem:[#allocation2 + $0x98] sm:$0xff] %v307
    %343 = vst [vmem:[#allocation2 + $0xa0] sm:$0xff] %v236
    %344 = vst [vmem:[#allocation2 + $0xa8] sm:$0xff] %v238
    %345 = vst [vmem:[#allocation2 + $0xb0] sm:$0xff] %v309
    %346 = vst [vmem:[#allocation2 + $0xb8] sm:$0xff] %v311
    %347 = vst [vmem:[#allocation2 + $0xc0] sm:$0xff] %v242
    %348 = vst [vmem:[#allocation2 + $0xc8] sm:$0xff] %v244
    %349 = vst [vmem:[#allocation2 + $0xd0] sm:$0xff] %v315
    %350 = vst [vmem:[#allocation2 + $0xd8] sm:$0xff] %v317
    %351 = vst [vmem:[#allocation2 + $0xe0] sm:$0xff] %v246
    %352 = vst [vmem:[#allocation2 + $0xe8] sm:$0xff] %v248
    %353 = vst [vmem:[#allocation2 + $0xf0] sm:$0xff] %v319
    %354 = vst [vmem:[#allocation2 + $0xf8] sm:$0xff] %v321
    %v355 = vld [vmem:[#allocation2] sm:$0xff]
    %v356 = vld [vmem:[#allocation2 + $0x8] sm:$0xff]
    %v357 = vld [vmem:[#allocation2 + $0x10] sm:$0xff]
    %v358 = vld [vmem:[#allocation2 + $0x18] sm:$0xff]
    %v367 = vunpack.c.l.b16 %v94
    %v368 = vunpack.c.h.b16 %v94
    %v369 = vunpack.c.l.b16 %v95
    %v370 = vunpack.c.h.b16 %v95
    %v371 = vunpack.c.l.b16 %v96
    %v372 = vunpack.c.h.b16 %v96
    %v373 = vunpack.c.l.b16 %v97
    %v374 = vunpack.c.h.b16 %v97
    %v375 = vunpack.c.l.b16 %v98
    %v376 = vunpack.c.h.b16 %v98
    %v377 = vunpack.c.l.b16 %v99
    %v378 = vunpack.c.h.b16 %v99
    %v379 = vunpack.c.l.b16 %v100
    %v380 = vunpack.c.h.b16 %v100
    %v381 = vunpack.c.l.b16 %v101
    %v382 = vunpack.c.h.b16 %v101
    %v383 = vpack.c.b16 %v371, %v367
    %v384 = vpack.c.b16 %v372, %v368
    %v385 = vpack.c.b16 %v373, %v369
    %v386 = vpack.c.b16 %v374, %v370
    %v387 = vpack.c.b16 %v379, %v375
    %v388 = vpack.c.b16 %v380, %v376
    %v389 = vpack.c.b16 %v381, %v377
    %v390 = vpack.c.b16 %v382, %v378
    %v400 = vsel %vm164, 0, 0
    %402 = vmatprep.subr.bf16.mxu0 %v384
    %403 = vmatpush1.bf16.msra.mxu0 %v383
    %404 = vmatprep.subr.bf16.mxu0 %v388
    %405 = vmatpush1.bf16.msra.mxu0 %v387
    %406 = vmatprep.subr.bf16.mxu0 0
    %407 = vmatpush1.bf16.msra.mxu0 0
    %408 = vmatprep.subr.bf16.mxu0 0
    %409 = vmatpush1.bf16.msra.mxu0 0
    %410 = vmatprep.subr.bf16.mxu0 0
    %411 = vmatpush1.bf16.msra.mxu0 0
    %412 = vmatprep.subr.bf16.mxu0 0
    %413 = vmatpush1.bf16.msra.mxu0 0
    %414 = vmatprep.subr.bf16.mxu0 0
    %415 = vmatpush1.bf16.msra.mxu0 0
    %416 = vmatprep.subr.bf16.mxu0 0
    %417 = vmatpush1.bf16.msra.mxu0 0
    %418 = vmatprep.subr.bf16.mxu0 0
    %419 = vmatpush1.bf16.msra.mxu0 0
    %420 = vmatprep.subr.bf16.mxu0 0
    %421 = vmatpush1.bf16.msra.mxu0 0
    %422 = vmatprep.subr.bf16.mxu0 0
    %423 = vmatpush1.bf16.msra.mxu0 0
    %424 = vmatprep.subr.bf16.mxu0 0
    %425 = vmatpush1.bf16.msra.mxu0 0
    %426 = vmatprep.subr.bf16.mxu0 0
    %427 = vmatpush1.bf16.msra.mxu0 0
    %428 = vmatprep.subr.bf16.mxu0 0
    %429 = vmatpush1.bf16.msra.mxu0 0
    %430 = vmatprep.subr.bf16.mxu0 0
    %431 = vmatpush1.bf16.msra.mxu0 0
    %432 = vmatprep.subr.bf16.mxu0 0
    %433 = vmatpush1.bf16.msra.mxu0 0
    %434 = vmatprep.mubr.bf16.mxu0 0
    %435 = vmatmul.mubr.bf16.gmra.mrb[0].mxu0 %v400
    %v436 = vpop.f32.mrb[0].mxu0
    %v437 = vadd.f32 0.0, %v436
    %v438 = vpop.f32.mrb[0].mxu0
    %v439 = vadd.f32 0.0, %v438
    %v440 = vpop.f32.mrb[0].mxu0
    %v441 = vpop.f32.mrb[0].mxu0
    %442 = vdwg.mxu0
    %443 = vmatprep.subr.bf16.mxu0 %v386
    %444 = vmatpush1.bf16.msra.mxu0 %v385
    %445 = vmatprep.subr.bf16.mxu0 %v390
    %446 = vmatpush1.bf16.msra.mxu0 %v389
    %447 = vmatprep.subr.bf16.mxu0 0
    %448 = vmatpush1.bf16.msra.mxu0 0
    %449 = vmatprep.subr.bf16.mxu0 0
    %450 = vmatpush1.bf16.msra.mxu0 0
    %451 = vmatprep.subr.bf16.mxu0 0
    %452 = vmatpush1.bf16.msra.mxu0 0
    %453 = vmatprep.subr.bf16.mxu0 0
    %454 = vmatpush1.bf16.msra.mxu0 0
    %455 = vmatprep.subr.bf16.mxu0 0
    %456 = vmatpush1.bf16.msra.mxu0 0
    %457 = vmatprep.subr.bf16.mxu0 0
    %458 = vmatpush1.bf16.msra.mxu0 0
    %459 = vmatprep.subr.bf16.mxu0 0
    %460 = vmatpush1.bf16.msra.mxu0 0
    %461 = vmatprep.subr.bf16.mxu0 0
    %462 = vmatpush1.bf16.msra.mxu0 0
    %463 = vmatprep.subr.bf16.mxu0 0
    %464 = vmatpush1.bf16.msra.mxu0 0
    %465 = vmatprep.subr.bf16.mxu0 0
    %466 = vmatpush1.bf16.msra.mxu0 0
    %467 = vmatprep.subr.bf16.mxu0 0
    %468 = vmatpush1.bf16.msra.mxu0 0
    %469 = vmatprep.subr.bf16.mxu0 0
    %470 = vmatpush1.bf16.msra.mxu0 0
    %471 = vmatprep.subr.bf16.mxu0 0
    %472 = vmatpush1.bf16.msra.mxu0 0
    %473 = vmatprep.subr.bf16.mxu0 0
    %474 = vmatpush1.bf16.msra.mxu0 0
    %475 = vmatprep.mubr.bf16.mxu0 0
    %476 = vmatmul.mubr.bf16.gmra.mrb[0].mxu0 %v400
    %v477 = vpop.f32.mrb[0].mxu0
    %v478 = vadd.f32 0.0, %v477
    %v479 = vpop.f32.mrb[0].mxu0
    %v480 = vadd.f32 0.0, %v479
    %v481 = vpop.f32.mrb[0].mxu0
    %v482 = vpop.f32.mrb[0].mxu0
    %483 = vdwg.mxu0
    %v484 = vadd.f32 %v355, %v437
    %v485 = vadd.f32 %v356, %v439
    %v486 = vadd.f32 %v357, %v478
    %v487 = vadd.f32 %v358, %v480
    %v488 = vxor.u32 %v484, 2147483648
    %v489 = vmul.f32 %v488, 1.442695
    %v490 = vpow.pop %v489
    %v491 = vadd.f32 %v490, 1.0
    %v492 = vrcp.pop %v491
    %v493 = vmul.f32 1.0, %v492
    %v494 = vxor.u32 %v485, 2147483648
    %v495 = vmul.f32 %v494, 1.442695
    %v496 = vpow.pop %v495
    %v497 = vadd.f32 %v496, 1.0
    %v498 = vrcp.pop %v497
    %v499 = vmul.f32 1.0, %v498
    %v500 = vtanh.pop %v486
    %v501 = vxor.u32 %v487, 2147483648
    %v502 = vmul.f32 %v501, 1.442695
    %v503 = vpow.pop %v502
    %v504 = vadd.f32 %v503, 1.0
    %v505 = vrcp.pop %v504
    %v506 = vmul.f32 1.0, %v505
    %v507 = vmul.f32 %v499, 0.0
    %v508 = vmul.f32 %v493, %v500
    %v509 = vadd.f32 %v507, %v508
    %v510 = vtanh.pop %v509
    %v511 = vmul.f32 %v506, %v510
    %v512 = vld [vmem:[#allocation2 + $0x20] sm:$0xff]
    %v513 = vld [vmem:[#allocation2 + $0x28] sm:$0xff]
    %v514 = vld [vmem:[#allocation2 + $0x30] sm:$0xff]
    %v515 = vld [vmem:[#allocation2 + $0x38] sm:$0xff]
    %v516 = vpack.c.bf16 %v511, %v511
    %v518 = vsel %vm164, %v516, 0
    %520 = vmatprep.subr.bf16.mxu0 %v384
    %521 = vmatpush1.bf16.msra.mxu0 %v383
    %522 = vmatprep.subr.bf16.mxu0 %v388
    %523 = vmatpush1.bf16.msra.mxu0 %v387
    %524 = vmatprep.subr.bf16.mxu0 0
    %525 = vmatpush1.bf16.msra.mxu0 0
    %526 = vmatprep.subr.bf16.mxu0 0
    %527 = vmatpush1.bf16.msra.mxu0 0
    %528 = vmatprep.subr.bf16.mxu0 0
    %529 = vmatpush1.bf16.msra.mxu0 0
    %530 = vmatprep.subr.bf16.mxu0 0
    %531 = vmatpush1.bf16.msra.mxu0 0
    %532 = vmatprep.subr.bf16.mxu0 0
    %533 = vmatpush1.bf16.msra.mxu0 0
    %534 = vmatprep.subr.bf16.mxu0 0
    %535 = vmatpush1.bf16.msra.mxu0 0
    %536 = vmatprep.subr.bf16.mxu0 0
    %537 = vmatpush1.bf16.msra.mxu0 0
    %538 = vmatprep.subr.bf16.mxu0 0
    %539 = vmatpush1.bf16.msra.mxu0 0
    %540 = vmatprep.subr.bf16.mxu0 0
    %541 = vmatpush1.bf16.msra.mxu0 0
    %542 = vmatprep.subr.bf16.mxu0 0
    %543 = vmatpush1.bf16.msra.mxu0 0
    %544 = vmatprep.subr.bf16.mxu0 0
    %545 = vmatpush1.bf16.msra.mxu0 0
    %546 = vmatprep.subr.bf16.mxu0 0
    %547 = vmatpush1.bf16.msra.mxu0 0
    %548 = vmatprep.subr.bf16.mxu0 0
    %549 = vmatpush1.bf16.msra.mxu0 0
    %550 = vmatprep.subr.bf16.mxu0 0
    %551 = vmatpush1.bf16.msra.mxu0 0
    %552 = vmatprep.mubr.bf16.mxu0 0
    %553 = vmatmul.mubr.bf16.gmra.mrb[0].mxu0 %v518
    %v554 = vpop.f32.mrb[0].mxu0
    %v555 = vadd.f32 0.0, %v554
    %v556 = vpop.f32.mrb[0].mxu0
    %v557 = vadd.f32 0.0, %v556
    %v558 = vpop.f32.mrb[0].mxu0
    %v559 = vpop.f32.mrb[0].mxu0
    %560 = vdwg.mxu0
    %561 = vmatprep.subr.bf16.mxu0 %v386
    %562 = vmatpush1.bf16.msra.mxu0 %v385
    %563 = vmatprep.subr.bf16.mxu0 %v390
    %564 = vmatpush1.bf16.msra.mxu0 %v389
    %565 = vmatprep.subr.bf16.mxu0 0
    %566 = vmatpush1.bf16.msra.mxu0 0
    %567 = vmatprep.subr.bf16.mxu0 0
    %568 = vmatpush1.bf16.msra.mxu0 0
    %569 = vmatprep.subr.bf16.mxu0 0
    %570 = vmatpush1.bf16.msra.mxu0 0
    %571 = vmatprep.subr.bf16.mxu0 0
    %572 = vmatpush1.bf16.msra.mxu0 0
    %573 = vmatprep.subr.bf16.mxu0 0
    %574 = vmatpush1.bf16.msra.mxu0 0
    %575 = vmatprep.subr.bf16.mxu0 0
    %576 = vmatpush1.bf16.msra.mxu0 0
    %577 = vmatprep.subr.bf16.mxu0 0
    %578 = vmatpush1.bf16.msra.mxu0 0
    %579 = vmatprep.subr.bf16.mxu0 0
    %580 = vmatpush1.bf16.msra.mxu0 0
    %581 = vmatprep.subr.bf16.mxu0 0
    %582 = vmatpush1.bf16.msra.mxu0 0
    %583 = vmatprep.subr.bf16.mxu0 0
    %584 = vmatpush1.bf16.msra.mxu0 0
    %585 = vmatprep.subr.bf16.mxu0 0
    %586 = vmatpush1.bf16.msra.mxu0 0
    %587 = vmatprep.subr.bf16.mxu0 0
    %588 = vmatpush1.bf16.msra.mxu0 0
    %589 = vmatprep.subr.bf16.mxu0 0
    %590 = vmatpush1.bf16.msra.mxu0 0
    %591 = vmatprep.subr.bf16.mxu0 0
    %592 = vmatpush1.bf16.msra.mxu0 0
    %593 = vmatprep.mubr.bf16.mxu0 0
    %594 = vmatmul.mubr.bf16.gmra.mrb[0].mxu0 %v518
    %v595 = vpop.f32.mrb[0].mxu0
    %v596 = vadd.f32 0.0, %v595
    %v597 = vpop.f32.mrb[0].mxu0
    %v598 = vadd.f32 0.0, %v597
    %v599 = vpop.f32.mrb[0].mxu0
    %v600 = vpop.f32.mrb[0].mxu0
    %601 = vdwg.mxu0
    %v602 = vadd.f32 %v512, %v555
    %v603 = vadd.f32 %v513, %v557
    %v604 = vadd.f32 %v514, %v596
    %v605 = vadd.f32 %v515, %v598
    %v606 = vxor.u32 %v602, 2147483648
    %v607 = vmul.f32 %v606, 1.442695
    %v608 = vpow.pop %v607
    %v609 = vadd.f32 %v608, 1.0
    %v610 = vrcp.pop %v609
    %v611 = vmul.f32 1.0, %v610
    %v612 = vxor.u32 %v603, 2147483648
    %v613 = vmul.f32 %v612, 1.442695
    %v614 = vpow.pop %v613
    %v615 = vadd.f32 %v614, 1.0
    %v616 = vrcp.pop %v615
    %v617 = vmul.f32 1.0, %v616
    %v618 = vtanh.pop %v604
    %v619 = vxor.u32 %v605, 2147483648
    %v620 = vmul.f32 %v619, 1.442695
    %v621 = vpow.pop %v620
    %v622 = vadd.f32 %v621, 1.0
    %v623 = vrcp.pop %v622
    %v624 = vmul.f32 1.0, %v623
    %v625 = vmul.f32 %v617, %v509
    %v626 = vmul.f32 %v611, %v618
    %v627 = vadd.f32 %v625, %v626
    %v628 = vtanh.pop %v627
    %v629 = vmul.f32 %v624, %v628
    %v630 = vld [vmem:[#allocation2 + $0x40] sm:$0xff]
    %v631 = vld [vmem:[#allocation2 + $0x48] sm:$0xff]
    %v632 = vld [vmem:[#allocation2 + $0x50] sm:$0xff]
    %v633 = vld [vmem:[#allocation2 + $0x58] sm:$0xff]
    %v634 = vpack.c.bf16 %v629, %v629
    %v636 = vsel %vm164, %v634, 0
    %638 = vmatprep.subr.bf16.mxu0 %v384
    %639 = vmatpush1.bf16.msra.mxu0 %v383
    %640 = vmatprep.subr.bf16.mxu0 %v388
    %641 = vmatpush1.bf16.msra.mxu0 %v387
    %642 = vmatprep.subr.bf16.mxu0 0
    %643 = vmatpush1.bf16.msra.mxu0 0
    %644 = vmatprep.subr.bf16.mxu0 0
    %645 = vmatpush1.bf16.msra.mxu0 0
    %646 = vmatprep.subr.bf16.mxu0 0
    %647 = vmatpush1.bf16.msra.mxu0 0
    %648 = vmatprep.subr.bf16.mxu0 0
    %649 = vmatpush1.bf16.msra.mxu0 0
    %650 = vmatprep.subr.bf16.mxu0 0
    %651 = vmatpush1.bf16.msra.mxu0 0
    %652 = vmatprep.subr.bf16.mxu0 0
    %653 = vmatpush1.bf16.msra.mxu0 0
    %654 = vmatprep.subr.bf16.mxu0 0
    %655 = vmatpush1.bf16.msra.mxu0 0
    %656 = vmatprep.subr.bf16.mxu0 0
    %657 = vmatpush1.bf16.msra.mxu0 0
    %658 = vmatprep.subr.bf16.mxu0 0
    %659 = vmatpush1.bf16.msra.mxu0 0
    %660 = vmatprep.subr.bf16.mxu0 0
    %661 = vmatpush1.bf16.msra.mxu0 0
    %662 = vmatprep.subr.bf16.mxu0 0
    %663 = vmatpush1.bf16.msra.mxu0 0
    %664 = vmatprep.subr.bf16.mxu0 0
    %665 = vmatpush1.bf16.msra.mxu0 0
    %666 = vmatprep.subr.bf16.mxu0 0
    %667 = vmatpush1.bf16.msra.mxu0 0
    %668 = vmatprep.subr.bf16.mxu0 0
    %669 = vmatpush1.bf16.msra.mxu0 0
    %670 = vmatprep.mubr.bf16.mxu0 0
    %671 = vmatmul.mubr.bf16.gmra.mrb[0].mxu0 %v636
    %v672 = vpop.f32.mrb[0].mxu0
    %v673 = vadd.f32 0.0, %v672
    %v674 = vpop.f32.mrb[0].mxu0
    %v675 = vadd.f32 0.0, %v674
    %v676 = vpop.f32.mrb[0].mxu0
    %v677 = vpop.f32.mrb[0].mxu0
    %678 = vdwg.mxu0
    %679 = vmatprep.subr.bf16.mxu0 %v386
    %680 = vmatpush1.bf16.msra.mxu0 %v385
    %681 = vmatprep.subr.bf16.mxu0 %v390
    %682 = vmatpush1.bf16.msra.mxu0 %v389
    %683 = vmatprep.subr.bf16.mxu0 0
    %684 = vmatpush1.bf16.msra.mxu0 0
    %685 = vmatprep.subr.bf16.mxu0 0
    %686 = vmatpush1.bf16.msra.mxu0 0
    %687 = vmatprep.subr.bf16.mxu0 0
    %688 = vmatpush1.bf16.msra.mxu0 0
    %689 = vmatprep.subr.bf16.mxu0 0
    %690 = vmatpush1.bf16.msra.mxu0 0
    %691 = vmatprep.subr.bf16.mxu0 0
    %692 = vmatpush1.bf16.msra.mxu0 0
    %693 = vmatprep.subr.bf16.mxu0 0
    %694 = vmatpush1.bf16.msra.mxu0 0
    %695 = vmatprep.subr.bf16.mxu0 0
    %696 = vmatpush1.bf16.msra.mxu0 0
    %697 = vmatprep.subr.bf16.mxu0 0
    %698 = vmatpush1.bf16.msra.mxu0 0
    %699 = vmatprep.subr.bf16.mxu0 0
    %700 = vmatpush1.bf16.msra.mxu0 0
    %701 = vmatprep.subr.bf16.mxu0 0
    %702 = vmatpush1.bf16.msra.mxu0 0
    %703 = vmatprep.subr.bf16.mxu0 0
    %704 = vmatpush1.bf16.msra.mxu0 0
    %705 = vmatprep.subr.bf16.mxu0 0
    %706 = vmatpush1.bf16.msra.mxu0 0
    %707 = vmatprep.subr.bf16.mxu0 0
    %708 = vmatpush1.bf16.msra.mxu0 0
    %709 = vmatprep.subr.bf16.mxu0 0
    %710 = vmatpush1.bf16.msra.mxu0 0
    %711 = vmatprep.mubr.bf16.mxu0 0
    %712 = vmatmul.mubr.bf16.gmra.mrb[0].mxu0 %v636
    %v713 = vpop.f32.mrb[0].mxu0
    %v714 = vadd.f32 0.0, %v713
    %v715 = vpop.f32.mrb[0].mxu0
    %v716 = vadd.f32 0.0, %v715
    %v717 = vpop.f32.mrb[0].mxu0
    %v718 = vpop.f32.mrb[0].mxu0
    %719 = vdwg.mxu0
    %v720 = vadd.f32 %v630, %v673
    %v721 = vadd.f32 %v631, %v675
    %v722 = vadd.f32 %v632, %v714
    %v723 = vadd.f32 %v633, %v716
    %v724 = vxor.u32 %v720, 2147483648
    %v725 = vmul.f32 %v724, 1.442695
    %v726 = vpow.pop %v725
    %v727 = vadd.f32 %v726, 1.0
    %v728 = vrcp.pop %v727
    %v729 = vmul.f32 1.0, %v728
    %v730 = vxor.u32 %v721, 2147483648
    %v731 = vmul.f32 %v730, 1.442695
    %v732 = vpow.pop %v731
    %v733 = vadd.f32 %v732, 1.0
    %v734 = vrcp.pop %v733
    %v735 = vmul.f32 1.0, %v734
    %v736 = vtanh.pop %v722
    %v737 = vxor.u32 %v723, 2147483648
    %v738 = vmul.f32 %v737, 1.442695
    %v739 = vpow.pop %v738
    %v740 = vadd.f32 %v739, 1.0
    %v741 = vrcp.pop %v740
    %v742 = vmul.f32 1.0, %v741
    %v743 = vmul.f32 %v735, %v627
    %v744 = vmul.f32 %v729, %v736
    %v745 = vadd.f32 %v743, %v744
    %v746 = vtanh.pop %v745
    %v747 = vmul.f32 %v742, %v746
    %v748 = vld [vmem:[#allocation2 + $0x60] sm:$0xff]
    %v749 = vld [vmem:[#allocation2 + $0x68] sm:$0xff]
    %v750 = vld [vmem:[#allocation2 + $0x70] sm:$0xff]
    %v751 = vld [vmem:[#allocation2 + $0x78] sm:$0xff]
    %v752 = vpack.c.bf16 %v747, %v747
    %v754 = vsel %vm164, %v752, 0
    %756 = vmatprep.subr.bf16.mxu0 %v384
    %757 = vmatpush1.bf16.msra.mxu0 %v383
    %758 = vmatprep.subr.bf16.mxu0 %v388
    %759 = vmatpush1.bf16.msra.mxu0 %v387
    %760 = vmatprep.subr.bf16.mxu0 0
    %761 = vmatpush1.bf16.msra.mxu0 0
    %762 = vmatprep.subr.bf16.mxu0 0
    %763 = vmatpush1.bf16.msra.mxu0 0
    %764 = vmatprep.subr.bf16.mxu0 0
    %765 = vmatpush1.bf16.msra.mxu0 0
    %766 = vmatprep.subr.bf16.mxu0 0
    %767 = vmatpush1.bf16.msra.mxu0 0
    %768 = vmatprep.subr.bf16.mxu0 0
    %769 = vmatpush1.bf16.msra.mxu0 0
    %770 = vmatprep.subr.bf16.mxu0 0
    %771 = vmatpush1.bf16.msra.mxu0 0
    %772 = vmatprep.subr.bf16.mxu0 0
    %773 = vmatpush1.bf16.msra.mxu0 0
    %774 = vmatprep.subr.bf16.mxu0 0
    %775 = vmatpush1.bf16.msra.mxu0 0
    %776 = vmatprep.subr.bf16.mxu0 0
    %777 = vmatpush1.bf16.msra.mxu0 0
    %778 = vmatprep.subr.bf16.mxu0 0
    %779 = vmatpush1.bf16.msra.mxu0 0
    %780 = vmatprep.subr.bf16.mxu0 0
    %781 = vmatpush1.bf16.msra.mxu0 0
    %782 = vmatprep.subr.bf16.mxu0 0
    %783 = vmatpush1.bf16.msra.mxu0 0
    %784 = vmatprep.subr.bf16.mxu0 0
    %785 = vmatpush1.bf16.msra.mxu0 0
    %786 = vmatprep.subr.bf16.mxu0 0
    %787 = vmatpush1.bf16.msra.mxu0 0
    %788 = vmatprep.mubr.bf16.mxu0 0
    %789 = vmatmul.mubr.bf16.gmra.mrb[0].mxu0 %v754
    %v790 = vpop.f32.mrb[0].mxu0
    %v791 = vadd.f32 0.0, %v790
    %v792 = vpop.f32.mrb[0].mxu0
    %v793 = vadd.f32 0.0, %v792
    %v794 = vpop.f32.mrb[0].mxu0
    %v795 = vpop.f32.mrb[0].mxu0
    %796 = vdwg.mxu0
    %797 = vmatprep.subr.bf16.mxu0 %v386
    %798 = vmatpush1.bf16.msra.mxu0 %v385
    %799 = vmatprep.subr.bf16.mxu0 %v390
    %800 = vmatpush1.bf16.msra.mxu0 %v389
    %801 = vmatprep.subr.bf16.mxu0 0
    %802 = vmatpush1.bf16.msra.mxu0 0
    %803 = vmatprep.subr.bf16.mxu0 0
    %804 = vmatpush1.bf16.msra.mxu0 0
    %805 = vmatprep.subr.bf16.mxu0 0
    %806 = vmatpush1.bf16.msra.mxu0 0
    %807 = vmatprep.subr.bf16.mxu0 0
    %808 = vmatpush1.bf16.msra.mxu0 0
    %809 = vmatprep.subr.bf16.mxu0 0
    %810 = vmatpush1.bf16.msra.mxu0 0
    %811 = vmatprep.subr.bf16.mxu0 0
    %812 = vmatpush1.bf16.msra.mxu0 0
    %813 = vmatprep.subr.bf16.mxu0 0
    %814 = vmatpush1.bf16.msra.mxu0 0
    %815 = vmatprep.subr.bf16.mxu0 0
    %816 = vmatpush1.bf16.msra.mxu0 0
    %817 = vmatprep.subr.bf16.mxu0 0
    %818 = vmatpush1.bf16.msra.mxu0 0
    %819 = vmatprep.subr.bf16.mxu0 0
    %820 = vmatpush1.bf16.msra.mxu0 0
    %821 = vmatprep.subr.bf16.mxu0 0
    %822 = vmatpush1.bf16.msra.mxu0 0
    %823 = vmatprep.subr.bf16.mxu0 0
    %824 = vmatpush1.bf16.msra.mxu0 0
    %825 = vmatprep.subr.bf16.mxu0 0
    %826 = vmatpush1.bf16.msra.mxu0 0
    %827 = vmatprep.subr.bf16.mxu0 0
    %828 = vmatpush1.bf16.msra.mxu0 0
    %829 = vmatprep.mubr.bf16.mxu0 0
    %830 = vmatmul.mubr.bf16.gmra.mrb[0].mxu0 %v754
    %v831 = vpop.f32.mrb[0].mxu0
    %v832 = vadd.f32 0.0, %v831
    %v833 = vpop.f32.mrb[0].mxu0
    %v834 = vadd.f32 0.0, %v833
    %v835 = vpop.f32.mrb[0].mxu0
    %v836 = vpop.f32.mrb[0].mxu0
    %837 = vdwg.mxu0
    %v838 = vadd.f32 %v748, %v791
    %v839 = vadd.f32 %v749, %v793
    %v840 = vadd.f32 %v750, %v832
    %v841 = vadd.f32 %v751, %v834
    %v842 = vxor.u32 %v838, 2147483648
    %v843 = vmul.f32 %v842, 1.442695
    %v844 = vpow.pop %v843
    %v845 = vadd.f32 %v844, 1.0
    %v846 = vrcp.pop %v845
    %v847 = vmul.f32 1.0, %v846
    %v848 = vxor.u32 %v839, 2147483648
    %v849 = vmul.f32 %v848, 1.442695
    %v850 = vpow.pop %v849
    %v851 = vadd.f32 %v850, 1.0
    %v852 = vrcp.pop %v851
    %v853 = vmul.f32 1.0, %v852
    %v854 = vtanh.pop %v840
    %v855 = vxor.u32 %v841, 2147483648
    %v856 = vmul.f32 %v855, 1.442695
    %v857 = vpow.pop %v856
    %v858 = vadd.f32 %v857, 1.0
    %v859 = vrcp.pop %v858
    %v860 = vmul.f32 1.0, %v859
    %v861 = vmul.f32 %v853, %v745
    %v862 = vmul.f32 %v847, %v854
    %v863 = vadd.f32 %v861, %v862
    %v864 = vtanh.pop %v863
    %v865 = vmul.f32 %v860, %v864
    %v866 = vld [vmem:[#allocation2 + $0x80] sm:$0xff]
    %v867 = vld [vmem:[#allocation2 + $0x88] sm:$0xff]
    %v868 = vld [vmem:[#allocation2 + $0x90] sm:$0xff]
    %v869 = vld [vmem:[#allocation2 + $0x98] sm:$0xff]
    %v870 = vpack.c.bf16 %v865, %v865
    %v872 = vsel %vm164, %v870, 0
    %874 = vmatprep.subr.bf16.mxu0 %v384
    %875 = vmatpush1.bf16.msra.mxu0 %v383
    %876 = vmatprep.subr.bf16.mxu0 %v388
    %877 = vmatpush1.bf16.msra.mxu0 %v387
    %878 = vmatprep.subr.bf16.mxu0 0
    %879 = vmatpush1.bf16.msra.mxu0 0
    %880 = vmatprep.subr.bf16.mxu0 0
    %881 = vmatpush1.bf16.msra.mxu0 0
    %882 = vmatprep.subr.bf16.mxu0 0
    %883 = vmatpush1.bf16.msra.mxu0 0
    %884 = vmatprep.subr.bf16.mxu0 0
    %885 = vmatpush1.bf16.msra.mxu0 0
    %886 = vmatprep.subr.bf16.mxu0 0
    %887 = vmatpush1.bf16.msra.mxu0 0
    %888 = vmatprep.subr.bf16.mxu0 0
    %889 = vmatpush1.bf16.msra.mxu0 0
    %890 = vmatprep.subr.bf16.mxu0 0
    %891 = vmatpush1.bf16.msra.mxu0 0
    %892 = vmatprep.subr.bf16.mxu0 0
    %893 = vmatpush1.bf16.msra.mxu0 0
    %894 = vmatprep.subr.bf16.mxu0 0
    %895 = vmatpush1.bf16.msra.mxu0 0
    %896 = vmatprep.subr.bf16.mxu0 0
    %897 = vmatpush1.bf16.msra.mxu0 0
    %898 = vmatprep.subr.bf16.mxu0 0
    %899 = vmatpush1.bf16.msra.mxu0 0
    %900 = vmatprep.subr.bf16.mxu0 0
    %901 = vmatpush1.bf16.msra.mxu0 0
    %902 = vmatprep.subr.bf16.mxu0 0
    %903 = vmatpush1.bf16.msra.mxu0 0
    %904 = vmatprep.subr.bf16.mxu0 0
    %905 = vmatpush1.bf16.msra.mxu0 0
    %906 = vmatprep.mubr.bf16.mxu0 0
    %907 = vmatmul.mubr.bf16.gmra.mrb[0].mxu0 %v872
    %v908 = vpop.f32.mrb[0].mxu0
    %v909 = vadd.f32 0.0, %v908
    %v910 = vpop.f32.mrb[0].mxu0
    %v911 = vadd.f32 0.0, %v910
    %v912 = vpop.f32.mrb[0].mxu0
    %v913 = vpop.f32.mrb[0].mxu0
    %914 = vdwg.mxu0
    %915 = vmatprep.subr.bf16.mxu0 %v386
    %916 = vmatpush1.bf16.msra.mxu0 %v385
    %917 = vmatprep.subr.bf16.mxu0 %v390
    %918 = vmatpush1.bf16.msra.mxu0 %v389
    %919 = vmatprep.subr.bf16.mxu0 0
    %920 = vmatpush1.bf16.msra.mxu0 0
    %921 = vmatprep.subr.bf16.mxu0 0
    %922 = vmatpush1.bf16.msra.mxu0 0
    %923 = vmatprep.subr.bf16.mxu0 0
    %924 = vmatpush1.bf16.msra.mxu0 0
    %925 = vmatprep.subr.bf16.mxu0 0
    %926 = vmatpush1.bf16.msra.mxu0 0
    %927 = vmatprep.subr.bf16.mxu0 0
    %928 = vmatpush1.bf16.msra.mxu0 0
    %929 = vmatprep.subr.bf16.mxu0 0
    %930 = vmatpush1.bf16.msra.mxu0 0
    %931 = vmatprep.subr.bf16.mxu0 0
    %932 = vmatpush1.bf16.msra.mxu0 0
    %933 = vmatprep.subr.bf16.mxu0 0
    %934 = vmatpush1.bf16.msra.mxu0 0
    %935 = vmatprep.subr.bf16.mxu0 0
    %936 = vmatpush1.bf16.msra.mxu0 0
    %937 = vmatprep.subr.bf16.mxu0 0
    %938 = vmatpush1.bf16.msra.mxu0 0
    %939 = vmatprep.subr.bf16.mxu0 0
    %940 = vmatpush1.bf16.msra.mxu0 0
    %941 = vmatprep.subr.bf16.mxu0 0
    %942 = vmatpush1.bf16.msra.mxu0 0
    %943 = vmatprep.subr.bf16.mxu0 0
    %944 = vmatpush1.bf16.msra.mxu0 0
    %945 = vmatprep.subr.bf16.mxu0 0
    %946 = vmatpush1.bf16.msra.mxu0 0
    %947 = vmatprep.mubr.bf16.mxu0 0
    %948 = vmatmul.mubr.bf16.gmra.mrb[0].mxu0 %v872
    %v949 = vpop.f32.mrb[0].mxu0
    %v950 = vadd.f32 0.0, %v949
    %v951 = vpop.f32.mrb[0].mxu0
    %v952 = vadd.f32 0.0, %v951
    %v953 = vpop.f32.mrb[0].mxu0
    %v954 = vpop.f32.mrb[0].mxu0
    %955 = vdwg.mxu0
    %v956 = vadd.f32 %v866, %v909
    %v957 = vadd.f32 %v867, %v911
    %v958 = vadd.f32 %v868, %v950
    %v959 = vadd.f32 %v869, %v952
    %v960 = vxor.u32 %v956, 2147483648
    %v961 = vmul.f32 %v960, 1.442695
    %v962 = vpow.pop %v961
    %v963 = vadd.f32 %v962, 1.0
    %v964 = vrcp.pop %v963
    %v965 = vmul.f32 1.0, %v964
    %v966 = vxor.u32 %v957, 2147483648
    %v967 = vmul.f32 %v966, 1.442695
    %v968 = vpow.pop %v967
    %v969 = vadd.f32 %v968, 1.0
    %v970 = vrcp.pop %v969
    %v971 = vmul.f32 1.0, %v970
    %v972 = vtanh.pop %v958
    %v973 = vxor.u32 %v959, 2147483648
    %v974 = vmul.f32 %v973, 1.442695
    %v975 = vpow.pop %v974
    %v976 = vadd.f32 %v975, 1.0
    %v977 = vrcp.pop %v976
    %v978 = vmul.f32 1.0, %v977
    %v979 = vmul.f32 %v971, %v863
    %v980 = vmul.f32 %v965, %v972
    %v981 = vadd.f32 %v979, %v980
    %v982 = vtanh.pop %v981
    %v983 = vmul.f32 %v978, %v982
    %v984 = vld [vmem:[#allocation2 + $0xa0] sm:$0xff]
    %v985 = vld [vmem:[#allocation2 + $0xa8] sm:$0xff]
    %v986 = vld [vmem:[#allocation2 + $0xb0] sm:$0xff]
    %v987 = vld [vmem:[#allocation2 + $0xb8] sm:$0xff]
    %v988 = vpack.c.bf16 %v983, %v983
    %v990 = vsel %vm164, %v988, 0
    %992 = vmatprep.subr.bf16.mxu0 %v384
    %993 = vmatpush1.bf16.msra.mxu0 %v383
    %994 = vmatprep.subr.bf16.mxu0 %v388
    %995 = vmatpush1.bf16.msra.mxu0 %v387
    %996 = vmatprep.subr.bf16.mxu0 0
    %997 = vmatpush1.bf16.msra.mxu0 0
    %998 = vmatprep.subr.bf16.mxu0 0
    %999 = vmatpush1.bf16.msra.mxu0 0
    %1000 = vmatprep.subr.bf16.mxu0 0
    %1001 = vmatpush1.bf16.msra.mxu0 0
    %1002 = vmatprep.subr.bf16.mxu0 0
    %1003 = vmatpush1.bf16.msra.mxu0 0
    %1004 = vmatprep.subr.bf16.mxu0 0
    %1005 = vmatpush1.bf16.msra.mxu0 0
    %1006 = vmatprep.subr.bf16.mxu0 0
    %1007 = vmatpush1.bf16.msra.mxu0 0
    %1008 = vmatprep.subr.bf16.mxu0 0
    %1009 = vmatpush1.bf16.msra.mxu0 0
    %1010 = vmatprep.subr.bf16.mxu0 0
    %1011 = vmatpush1.bf16.msra.mxu0 0
    %1012 = vmatprep.subr.bf16.mxu0 0
    %1013 = vmatpush1.bf16.msra.mxu0 0
    %1014 = vmatprep.subr.bf16.mxu0 0
    %1015 = vmatpush1.bf16.msra.mxu0 0
    %1016 = vmatprep.subr.bf16.mxu0 0
    %1017 = vmatpush1.bf16.msra.mxu0 0
    %1018 = vmatprep.subr.bf16.mxu0 0
    %1019 = vmatpush1.bf16.msra.mxu0 0
    %1020 = vmatprep.subr.bf16.mxu0 0
    %1021 = vmatpush1.bf16.msra.mxu0 0
    %1022 = vmatprep.subr.bf16.mxu0 0
    %1023 = vmatpush1.bf16.msra.mxu0 0
    %1024 = vmatprep.mubr.bf16.mxu0 0
    %1025 = vmatmul.mubr.bf16.gmra.mrb[0].mxu0 %v990
    %v1026 = vpop.f32.mrb[0].mxu0
    %v1027 = vadd.f32 0.0, %v1026
    %v1028 = vpop.f32.mrb[0].mxu0
    %v1029 = vadd.f32 0.0, %v1028
    %v1030 = vpop.f32.mrb[0].mxu0
    %v1031 = vpop.f32.mrb[0].mxu0
    %1032 = vdwg.mxu0
    %1033 = vmatprep.subr.bf16.mxu0 %v386
    %1034 = vmatpush1.bf16.msra.mxu0 %v385
    %1035 = vmatprep.subr.bf16.mxu0 %v390
    %1036 = vmatpush1.bf16.msra.mxu0 %v389
    %1037 = vmatprep.subr.bf16.mxu0 0
    %1038 = vmatpush1.bf16.msra.mxu0 0
    %1039 = vmatprep.subr.bf16.mxu0 0
    %1040 = vmatpush1.bf16.msra.mxu0 0
    %1041 = vmatprep.subr.bf16.mxu0 0
    %1042 = vmatpush1.bf16.msra.mxu0 0
    %1043 = vmatprep.subr.bf16.mxu0 0
    %1044 = vmatpush1.bf16.msra.mxu0 0
    %1045 = vmatprep.subr.bf16.mxu0 0
    %1046 = vmatpush1.bf16.msra.mxu0 0
    %1047 = vmatprep.subr.bf16.mxu0 0
    %1048 = vmatpush1.bf16.msra.mxu0 0
    %1049 = vmatprep.subr.bf16.mxu0 0
    %1050 = vmatpush1.bf16.msra.mxu0 0
    %1051 = vmatprep.subr.bf16.mxu0 0
    %1052 = vmatpush1.bf16.msra.mxu0 0
    %1053 = vmatprep.subr.bf16.mxu0 0
    %1054 = vmatpush1.bf16.msra.mxu0 0
    %1055 = vmatprep.subr.bf16.mxu0 0
    %1056 = vmatpush1.bf16.msra.mxu0 0
    %1057 = vmatprep.subr.bf16.mxu0 0
    %1058 = vmatpush1.bf16.msra.mxu0 0
    %1059 = vmatprep.subr.bf16.mxu0 0
    %1060 = vmatpush1.bf16.msra.mxu0 0
    %1061 = vmatprep.subr.bf16.mxu0 0
    %1062 = vmatpush1.bf16.msra.mxu0 0
    %1063 = vmatprep.subr.bf16.mxu0 0
    %1064 = vmatpush1.bf16.msra.mxu0 0
    %1065 = vmatprep.mubr.bf16.mxu0 0
    %1066 = vmatmul.mubr.bf16.gmra.mrb[0].mxu0 %v990
    %v1067 = vpop.f32.mrb[0].mxu0
    %v1068 = vadd.f32 0.0, %v1067
    %v1069 = vpop.f32.mrb[0].mxu0
    %v1070 = vadd.f32 0.0, %v1069
    %v1071 = vpop.f32.mrb[0].mxu0
    %v1072 = vpop.f32.mrb[0].mxu0
    %1073 = vdwg.mxu0
    %v1074 = vadd.f32 %v984, %v1027
    %v1075 = vadd.f32 %v985, %v1029
    %v1076 = vadd.f32 %v986, %v1068
    %v1077 = vadd.f32 %v987, %v1070
    %v1078 = vxor.u32 %v1074, 2147483648
    %v1079 = vmul.f32 %v1078, 1.442695
    %v1080 = vpow.pop %v1079
    %v1081 = vadd.f32 %v1080, 1.0
    %v1082 = vrcp.pop %v1081
    %v1083 = vmul.f32 1.0, %v1082
    %v1084 = vxor.u32 %v1075, 2147483648
    %v1085 = vmul.f32 %v1084, 1.442695
    %v1086 = vpow.pop %v1085
    %v1087 = vadd.f32 %v1086, 1.0
    %v1088 = vrcp.pop %v1087
    %v1089 = vmul.f32 1.0, %v1088
    %v1090 = vtanh.pop %v1076
    %v1091 = vxor.u32 %v1077, 2147483648
    %v1092 = vmul.f32 %v1091, 1.442695
    %v1093 = vpow.pop %v1092
    %v1094 = vadd.f32 %v1093, 1.0
    %v1095 = vrcp.pop %v1094
    %v1096 = vmul.f32 1.0, %v1095
    %v1097 = vmul.f32 %v1089, %v981
    %v1098 = vmul.f32 %v1083, %v1090
    %v1099 = vadd.f32 %v1097, %v1098
    %v1100 = vtanh.pop %v1099
    %v1101 = vmul.f32 %v1096, %v1100
    %v1102 = vld [vmem:[#allocation2 + $0xc0] sm:$0xff]
    %v1103 = vld [vmem:[#allocation2 + $0xc8] sm:$0xff]
    %v1104 = vld [vmem:[#allocation2 + $0xd0] sm:$0xff]
    %v1105 = vld [vmem:[#allocation2 + $0xd8] sm:$0xff]
    %v1106 = vpack.c.bf16 %v1101, %v1101
    %v1108 = vsel %vm164, %v1106, 0
    %1110 = vmatprep.subr.bf16.mxu0 %v384
    %1111 = vmatpush1.bf16.msra.mxu0 %v383
    %1112 = vmatprep.subr.bf16.mxu0 %v388
    %1113 = vmatpush1.bf16.msra.mxu0 %v387
    %1114 = vmatprep.subr.bf16.mxu0 0
    %1115 = vmatpush1.bf16.msra.mxu0 0
    %1116 = vmatprep.subr.bf16.mxu0 0
    %1117 = vmatpush1.bf16.msra.mxu0 0
    %1118 = vmatprep.subr.bf16.mxu0 0
    %1119 = vmatpush1.bf16.msra.mxu0 0
    %1120 = vmatprep.subr.bf16.mxu0 0
    %1121 = vmatpush1.bf16.msra.mxu0 0
    %1122 = vmatprep.subr.bf16.mxu0 0
    %1123 = vmatpush1.bf16.msra.mxu0 0
    %1124 = vmatprep.subr.bf16.mxu0 0
    %1125 = vmatpush1.bf16.msra.mxu0 0
    %1126 = vmatprep.subr.bf16.mxu0 0
    %1127 = vmatpush1.bf16.msra.mxu0 0
    %1128 = vmatprep.subr.bf16.mxu0 0
    %1129 = vmatpush1.bf16.msra.mxu0 0
    %1130 = vmatprep.subr.bf16.mxu0 0
    %1131 = vmatpush1.bf16.msra.mxu0 0
    %1132 = vmatprep.subr.bf16.mxu0 0
    %1133 = vmatpush1.bf16.msra.mxu0 0
    %1134 = vmatprep.subr.bf16.mxu0 0
    %1135 = vmatpush1.bf16.msra.mxu0 0
    %1136 = vmatprep.subr.bf16.mxu0 0
    %1137 = vmatpush1.bf16.msra.mxu0 0
    %1138 = vmatprep.subr.bf16.mxu0 0
    %1139 = vmatpush1.bf16.msra.mxu0 0
    %1140 = vmatprep.subr.bf16.mxu0 0
    %1141 = vmatpush1.bf16.msra.mxu0 0
    %1142 = vmatprep.mubr.bf16.mxu0 0
    %1143 = vmatmul.mubr.bf16.gmra.mrb[0].mxu0 %v1108
    %v1144 = vpop.f32.mrb[0].mxu0
    %v1145 = vadd.f32 0.0, %v1144
    %v1146 = vpop.f32.mrb[0].mxu0
    %v1147 = vadd.f32 0.0, %v1146
    %v1148 = vpop.f32.mrb[0].mxu0
    %v1149 = vpop.f32.mrb[0].mxu0
    %1150 = vdwg.mxu0
    %1151 = vmatprep.subr.bf16.mxu0 %v386
    %1152 = vmatpush1.bf16.msra.mxu0 %v385
    %1153 = vmatprep.subr.bf16.mxu0 %v390
    %1154 = vmatpush1.bf16.msra.mxu0 %v389
    %1155 = vmatprep.subr.bf16.mxu0 0
    %1156 = vmatpush1.bf16.msra.mxu0 0
    %1157 = vmatprep.subr.bf16.mxu0 0
    %1158 = vmatpush1.bf16.msra.mxu0 0
    %1159 = vmatprep.subr.bf16.mxu0 0
    %1160 = vmatpush1.bf16.msra.mxu0 0
    %1161 = vmatprep.subr.bf16.mxu0 0
    %1162 = vmatpush1.bf16.msra.mxu0 0
    %1163 = vmatprep.subr.bf16.mxu0 0
    %1164 = vmatpush1.bf16.msra.mxu0 0
    %1165 = vmatprep.subr.bf16.mxu0 0
    %1166 = vmatpush1.bf16.msra.mxu0 0
    %1167 = vmatprep.subr.bf16.mxu0 0
    %1168 = vmatpush1.bf16.msra.mxu0 0
    %1169 = vmatprep.subr.bf16.mxu0 0
    %1170 = vmatpush1.bf16.msra.mxu0 0
    %1171 = vmatprep.subr.bf16.mxu0 0
    %1172 = vmatpush1.bf16.msra.mxu0 0
    %1173 = vmatprep.subr.bf16.mxu0 0
    %1174 = vmatpush1.bf16.msra.mxu0 0
    %1175 = vmatprep.subr.bf16.mxu0 0
    %1176 = vmatpush1.bf16.msra.mxu0 0
    %1177 = vmatprep.subr.bf16.mxu0 0
    %1178 = vmatpush1.bf16.msra.mxu0 0
    %1179 = vmatprep.subr.bf16.mxu0 0
    %1180 = vmatpush1.bf16.msra.mxu0 0
    %1181 = vmatprep.subr.bf16.mxu0 0
    %1182 = vmatpush1.bf16.msra.mxu0 0
    %1183 = vmatprep.mubr.bf16.mxu0 0
    %1184 = vmatmul.mubr.bf16.gmra.mrb[0].mxu0 %v1108
    %v1185 = vpop.f32.mrb[0].mxu0
    %v1186 = vadd.f32 0.0, %v1185
    %v1187 = vpop.f32.mrb[0].mxu0
    %v1188 = vadd.f32 0.0, %v1187
    %v1189 = vpop.f32.mrb[0].mxu0
    %v1190 = vpop.f32.mrb[0].mxu0
    %1191 = vdwg.mxu0
    %v1192 = vadd.f32 %v1102, %v1145
    %v1193 = vadd.f32 %v1103, %v1147
    %v1194 = vadd.f32 %v1104, %v1186
    %v1195 = vadd.f32 %v1105, %v1188
    %v1196 = vxor.u32 %v1192, 2147483648
    %v1197 = vmul.f32 %v1196, 1.442695
    %v1198 = vpow.pop %v1197
    %v1199 = vadd.f32 %v1198, 1.0
    %v1200 = vrcp.pop %v1199
    %v1201 = vmul.f32 1.0, %v1200
    %v1202 = vxor.u32 %v1193, 2147483648
    %v1203 = vmul.f32 %v1202, 1.442695
    %v1204 = vpow.pop %v1203
    %v1205 = vadd.f32 %v1204, 1.0
    %v1206 = vrcp.pop %v1205
    %v1207 = vmul.f32 1.0, %v1206
    %v1208 = vtanh.pop %v1194
    %v1209 = vxor.u32 %v1195, 2147483648
    %v1210 = vmul.f32 %v1209, 1.442695
    %v1211 = vpow.pop %v1210
    %v1212 = vadd.f32 %v1211, 1.0
    %v1213 = vrcp.pop %v1212
    %v1214 = vmul.f32 1.0, %v1213
    %v1215 = vmul.f32 %v1207, %v1099
    %v1216 = vmul.f32 %v1201, %v1208
    %v1217 = vadd.f32 %v1215, %v1216
    %v1218 = vtanh.pop %v1217
    %v1219 = vmul.f32 %v1214, %v1218
    %v1220 = vld [vmem:[#allocation2 + $0xe0] sm:$0xff]
    %v1221 = vld [vmem:[#allocation2 + $0xe8] sm:$0xff]
    %v1222 = vld [vmem:[#allocation2 + $0xf0] sm:$0xff]
    %v1223 = vld [vmem:[#allocation2 + $0xf8] sm:$0xff]
    %v1224 = vpack.c.bf16 %v1219, %v1219
    %v1226 = vsel %vm164, %v1224, 0
    %1228 = vmatprep.subr.bf16.mxu0 %v384
    %1229 = vmatpush1.bf16.msra.mxu0 %v383
    %1230 = vmatprep.subr.bf16.mxu0 %v388
    %1231 = vmatpush1.bf16.msra.mxu0 %v387
    %1232 = vmatprep.subr.bf16.mxu0 0
    %1233 = vmatpush1.bf16.msra.mxu0 0
    %1234 = vmatprep.subr.bf16.mxu0 0
    %1235 = vmatpush1.bf16.msra.mxu0 0
    %1236 = vmatprep.subr.bf16.mxu0 0
    %1237 = vmatpush1.bf16.msra.mxu0 0
    %1238 = vmatprep.subr.bf16.mxu0 0
    %1239 = vmatpush1.bf16.msra.mxu0 0
    %1240 = vmatprep.subr.bf16.mxu0 0
    %1241 = vmatpush1.bf16.msra.mxu0 0
    %1242 = vmatprep.subr.bf16.mxu0 0
    %1243 = vmatpush1.bf16.msra.mxu0 0
    %1244 = vmatprep.subr.bf16.mxu0 0
    %1245 = vmatpush1.bf16.msra.mxu0 0
    %1246 = vmatprep.subr.bf16.mxu0 0
    %1247 = vmatpush1.bf16.msra.mxu0 0
    %1248 = vmatprep.subr.bf16.mxu0 0
    %1249 = vmatpush1.bf16.msra.mxu0 0
    %1250 = vmatprep.subr.bf16.mxu0 0
    %1251 = vmatpush1.bf16.msra.mxu0 0
    %1252 = vmatprep.subr.bf16.mxu0 0
    %1253 = vmatpush1.bf16.msra.mxu0 0
    %1254 = vmatprep.subr.bf16.mxu0 0
    %1255 = vmatpush1.bf16.msra.mxu0 0
    %1256 = vmatprep.subr.bf16.mxu0 0
    %1257 = vmatpush1.bf16.msra.mxu0 0
    %1258 = vmatprep.subr.bf16.mxu0 0
    %1259 = vmatpush1.bf16.msra.mxu0 0
    %1260 = vmatprep.mubr.bf16.mxu0 0
    %1261 = vmatmul.mubr.bf16.gmra.mrb[0].mxu0 %v1226
    %v1262 = vpop.f32.mrb[0].mxu0
    %v1263 = vadd.f32 0.0, %v1262
    %v1264 = vpop.f32.mrb[0].mxu0
    %v1265 = vadd.f32 0.0, %v1264
    %v1266 = vpop.f32.mrb[0].mxu0
    %v1267 = vpop.f32.mrb[0].mxu0
    %1268 = vdwg.mxu0
    %1269 = vmatprep.subr.bf16.mxu0 %v386
    %1270 = vmatpush1.bf16.msra.mxu0 %v385
    %1271 = vmatprep.subr.bf16.mxu0 %v390
    %1272 = vmatpush1.bf16.msra.mxu0 %v389
    %1273 = vmatprep.subr.bf16.mxu0 0
    %1274 = vmatpush1.bf16.msra.mxu0 0
    %1275 = vmatprep.subr.bf16.mxu0 0
    %1276 = vmatpush1.bf16.msra.mxu0 0
    %1277 = vmatprep.subr.bf16.mxu0 0
    %1278 = vmatpush1.bf16.msra.mxu0 0
    %1279 = vmatprep.subr.bf16.mxu0 0
    %1280 = vmatpush1.bf16.msra.mxu0 0
    %1281 = vmatprep.subr.bf16.mxu0 0
    %1282 = vmatpush1.bf16.msra.mxu0 0
    %1283 = vmatprep.subr.bf16.mxu0 0
    %1284 = vmatpush1.bf16.msra.mxu0 0
    %1285 = vmatprep.subr.bf16.mxu0 0
    %1286 = vmatpush1.bf16.msra.mxu0 0
    %1287 = vmatprep.subr.bf16.mxu0 0
    %1288 = vmatpush1.bf16.msra.mxu0 0
    %1289 = vmatprep.subr.bf16.mxu0 0
    %1290 = vmatpush1.bf16.msra.mxu0 0
    %1291 = vmatprep.subr.bf16.mxu0 0
    %1292 = vmatpush1.bf16.msra.mxu0 0
    %1293 = vmatprep.subr.bf16.mxu0 0
    %1294 = vmatpush1.bf16.msra.mxu0 0
    %1295 = vmatprep.subr.bf16.mxu0 0
    %1296 = vmatpush1.bf16.msra.mxu0 0
    %1297 = vmatprep.subr.bf16.mxu0 0
    %1298 = vmatpush1.bf16.msra.mxu0 0
    %1299 = vmatprep.subr.bf16.mxu0 0
    %1300 = vmatpush1.bf16.msra.mxu0 0
    %1301 = vmatprep.mubr.bf16.mxu0 0
    %1302 = vmatmul.mubr.bf16.gmra.mrb[0].mxu0 %v1226
    %v1303 = vpop.f32.mrb[0].mxu0
    %v1304 = vadd.f32 0.0, %v1303
    %v1305 = vpop.f32.mrb[0].mxu0
    %v1306 = vadd.f32 0.0, %v1305
    %v1307 = vpop.f32.mrb[0].mxu0
    %v1308 = vpop.f32.mrb[0].mxu0
    %1309 = vdwg.mxu0
    %v1310 = vadd.f32 %v1220, %v1263
    %v1311 = vadd.f32 %v1221, %v1265
    %v1312 = vadd.f32 %v1222, %v1304
    %v1313 = vadd.f32 %v1223, %v1306
    %v1314 = vxor.u32 %v1310, 2147483648
    %v1315 = vmul.f32 %v1314, 1.442695
    %v1316 = vpow.pop %v1315
    %v1317 = vadd.f32 %v1316, 1.0
    %v1318 = vrcp.pop %v1317
    %v1319 = vmul.f32 1.0, %v1318
    %v1320 = vxor.u32 %v1311, 2147483648
    %v1321 = vmul.f32 %v1320, 1.442695
    %v1322 = vpow.pop %v1321
    %v1323 = vadd.f32 %v1322, 1.0
    %v1324 = vrcp.pop %v1323
    %v1325 = vmul.f32 1.0, %v1324
    %v1326 = vtanh.pop %v1312
    %v1327 = vxor.u32 %v1313, 2147483648
    %v1328 = vmul.f32 %v1327, 1.442695
    %v1329 = vpow.pop %v1328
    %v1330 = vadd.f32 %v1329, 1.0
    %v1331 = vrcp.pop %v1330
    %v1332 = vmul.f32 1.0, %v1331
    %v1333 = vmul.f32 %v1325, %v1217
    %v1334 = vmul.f32 %v1319, %v1326
    %v1335 = vadd.f32 %v1333, %v1334
    %v1336 = vtanh.pop %v1335
    %v1337 = vmul.f32 %v1332, %v1336
    %v1338 = vld [vmem:[%s4] sm:$0xff]
    %v1339 = vld [vmem:[%s4 + $0x8] sm:$0xff]
    %v1340 = vld [vmem:[%s4 + $0x10] sm:$0xff]
    %v1341 = vld [vmem:[%s4 + $0x18] sm:$0xff]
    %v1342 = vld [vmem:[%s4 + $0x20] sm:$0xff]
    %v1343 = vld [vmem:[%s4 + $0x28] sm:$0xff]
    %v1344 = vld [vmem:[%s4 + $0x30] sm:$0xff]
    %v1345 = vld [vmem:[%s4 + $0x38] sm:$0xff]
    %v1346 = vld [vmem:[#allocation8] sm:$0xff]
    %v1347 = vld [vmem:[#allocation8 + $0x8] sm:$0xff]
    %v1348 = vld [vmem:[#allocation8 + $0x10] sm:$0xff]
    %v1349 = vld [vmem:[#allocation8 + $0x18] sm:$0xff]
    %v1350 = vld [vmem:[#allocation8 + $0x20] sm:$0xff]
    %v1351 = vld [vmem:[#allocation8 + $0x28] sm:$0xff]
    %v1352 = vld [vmem:[#allocation8 + $0x30] sm:$0xff]
    %v1353 = vld [vmem:[#allocation8 + $0x38] sm:$0xff]
    %v1354 = vld [vmem:[%s6] sm:$0xf]
    %v1363 = vunpack.c.l.b16 %v1346
    %v1364 = vunpack.c.h.b16 %v1346
    %v1365 = vunpack.c.l.b16 %v1347
    %v1366 = vunpack.c.h.b16 %v1347
    %v1367 = vunpack.c.l.b16 %v1348
    %v1368 = vunpack.c.h.b16 %v1348
    %v1369 = vunpack.c.l.b16 %v1349
    %v1370 = vunpack.c.h.b16 %v1349
    %v1371 = vunpack.c.l.b16 %v1350
    %v1372 = vunpack.c.h.b16 %v1350
    %v1373 = vunpack.c.l.b16 %v1351
    %v1374 = vunpack.c.h.b16 %v1351
    %v1375 = vunpack.c.l.b16 %v1352
    %v1376 = vunpack.c.h.b16 %v1352
    %v1377 = vunpack.c.l.b16 %v1353
    %v1378 = vunpack.c.h.b16 %v1353
    %v1379 = vpack.c.b16 %v1367, %v1363
    %v1380 = vpack.c.b16 %v1368, %v1364
    %v1381 = vpack.c.b16 %v1369, %v1365
    %v1382 = vpack.c.b16 %v1370, %v1366
    %v1383 = vpack.c.b16 %v1375, %v1371
    %v1384 = vpack.c.b16 %v1376, %v1372
    %v1385 = vpack.c.b16 %v1377, %v1373
    %v1386 = vpack.c.b16 %v1378, %v1374
    %1395 = vmatprep.subr.bf16.mxu0 %v1380
    %1396 = vmatpush1.bf16.msra.mxu0 %v1379
    %1397 = vmatprep.subr.bf16.mxu0 %v1384
    %1398 = vmatpush1.bf16.msra.mxu0 %v1383
    %1399 = vmatprep.subr.bf16.mxu0 0
    %1400 = vmatpush1.bf16.msra.mxu0 0
    %1401 = vmatprep.subr.bf16.mxu0 0
    %1402 = vmatpush1.bf16.msra.mxu0 0
    %1403 = vmatprep.subr.bf16.mxu0 0
    %1404 = vmatpush1.bf16.msra.mxu0 0
    %1405 = vmatprep.subr.bf16.mxu0 0
    %1406 = vmatpush1.bf16.msra.mxu0 0
    %1407 = vmatprep.subr.bf16.mxu0 0
    %1408 = vmatpush1.bf16.msra.mxu0 0
    %1409 = vmatprep.subr.bf16.mxu0 0
    %1410 = vmatpush1.bf16.msra.mxu0 0
    %1411 = vmatprep.subr.bf16.mxu0 0
    %1412 = vmatpush1.bf16.msra.mxu0 0
    %1413 = vmatprep.subr.bf16.mxu0 0
    %1414 = vmatpush1.bf16.msra.mxu0 0
    %1415 = vmatprep.subr.bf16.mxu0 0
    %1416 = vmatpush1.bf16.msra.mxu0 0
    %1417 = vmatprep.subr.bf16.mxu0 0
    %1418 = vmatpush1.bf16.msra.mxu0 0
    %1419 = vmatprep.subr.bf16.mxu0 0
    %1420 = vmatpush1.bf16.msra.mxu0 0
    %1421 = vmatprep.subr.bf16.mxu0 0
    %1422 = vmatpush1.bf16.msra.mxu0 0
    %1423 = vmatprep.subr.bf16.mxu0 0
    %1424 = vmatpush1.bf16.msra.mxu0 0
    %1425 = vmatprep.subr.bf16.mxu0 0
    %1426 = vmatpush1.bf16.msra.mxu0 0
    %1427 = vmatprep.mubr.bf16.mxu0 0
    %1428 = vmatmul.mubr.bf16.gmra.mrb[0].mxu0 %v400
    %v1429 = vpop.f32.mrb[0].mxu0
    %v1430 = vadd.f32 0.0, %v1429
    %v1431 = vpop.f32.mrb[0].mxu0
    %v1432 = vadd.f32 0.0, %v1431
    %v1433 = vpop.f32.mrb[0].mxu0
    %v1434 = vpop.f32.mrb[0].mxu0
    %1435 = vdwg.mxu0
    %1436 = vmatprep.subr.bf16.mxu0 %v1382
    %1437 = vmatpush1.bf16.msra.mxu0 %v1381
    %1438 = vmatprep.subr.bf16.mxu0 %v1386
    %1439 = vmatpush1.bf16.msra.mxu0 %v1385
    %1440 = vmatprep.subr.bf16.mxu0 0
    %1441 = vmatpush1.bf16.msra.mxu0 0
    %1442 = vmatprep.subr.bf16.mxu0 0
    %1443 = vmatpush1.bf16.msra.mxu0 0
    %1444 = vmatprep.subr.bf16.mxu0 0
    %1445 = vmatpush1.bf16.msra.mxu0 0
    %1446 = vmatprep.subr.bf16.mxu0 0
    %1447 = vmatpush1.bf16.msra.mxu0 0
    %1448 = vmatprep.subr.bf16.mxu0 0
    %1449 = vmatpush1.bf16.msra.mxu0 0
    %1450 = vmatprep.subr.bf16.mxu0 0
    %1451 = vmatpush1.bf16.msra.mxu0 0
    %1452 = vmatprep.subr.bf16.mxu0 0
    %1453 = vmatpush1.bf16.msra.mxu0 0
    %1454 = vmatprep.subr.bf16.mxu0 0
    %1455 = vmatpush1.bf16.msra.mxu0 0
    %1456 = vmatprep.subr.bf16.mxu0 0
    %1457 = vmatpush1.bf16.msra.mxu0 0
    %1458 = vmatprep.subr.bf16.mxu0 0
    %1459 = vmatpush1.bf16.msra.mxu0 0
    %1460 = vmatprep.subr.bf16.mxu0 0
    %1461 = vmatpush1.bf16.msra.mxu0 0
    %1462 = vmatprep.subr.bf16.mxu0 0
    %1463 = vmatpush1.bf16.msra.mxu0 0
    %1464 = vmatprep.subr.bf16.mxu0 0
    %1465 = vmatpush1.bf16.msra.mxu0 0
    %1466 = vmatprep.subr.bf16.mxu0 0
    %1467 = vmatpush1.bf16.msra.mxu0 0
    %1468 = vmatprep.mubr.bf16.mxu0 0
    %1469 = vmatmul.mubr.bf16.gmra.mrb[0].mxu0 %v400
    %v1470 = vpop.f32.mrb[0].mxu0
    %v1471 = vadd.f32 0.0, %v1470
    %v1472 = vpop.f32.mrb[0].mxu0
    %v1473 = vadd.f32 0.0, %v1472
    %v1474 = vpop.f32.mrb[0].mxu0
    %v1475 = vpop.f32.mrb[0].mxu0
    %1476 = vdwg.mxu0
    %v1485 = vunpack.c.l.b16 %v1338
    %v1486 = vunpack.c.h.b16 %v1338
    %v1487 = vunpack.c.l.b16 %v1339
    %v1488 = vunpack.c.h.b16 %v1339
    %v1489 = vunpack.c.l.b16 %v1340
    %v1490 = vunpack.c.h.b16 %v1340
    %v1491 = vunpack.c.l.b16 %v1341
    %v1492 = vunpack.c.h.b16 %v1341
    %v1493 = vunpack.c.l.b16 %v1342
    %v1494 = vunpack.c.h.b16 %v1342
    %v1495 = vunpack.c.l.b16 %v1343
    %v1496 = vunpack.c.h.b16 %v1343
    %v1497 = vunpack.c.l.b16 %v1344
    %v1498 = vunpack.c.h.b16 %v1344
    %v1499 = vunpack.c.l.b16 %v1345
    %v1500 = vunpack.c.h.b16 %v1345
    %v1501 = vpack.c.b16 %v1489, %v1485
    %v1502 = vpack.c.b16 %v1490, %v1486
    %v1503 = vpack.c.b16 %v1491, %v1487
    %v1504 = vpack.c.b16 %v1492, %v1488
    %v1505 = vpack.c.b16 %v1497, %v1493
    %v1506 = vpack.c.b16 %v1498, %v1494
    %v1507 = vpack.c.b16 %v1499, %v1495
    %v1508 = vpack.c.b16 %v1500, %v1496
    %1517 = vmatprep.subr.bf16.mxu0 %v1502
    %1518 = vmatpush1.bf16.msra.mxu0 %v1501
    %1519 = vmatprep.subr.bf16.mxu0 %v1506
    %1520 = vmatpush1.bf16.msra.mxu0 %v1505
    %1521 = vmatprep.subr.bf16.mxu0 0
    %1522 = vmatpush1.bf16.msra.mxu0 0
    %1523 = vmatprep.subr.bf16.mxu0 0
    %1524 = vmatpush1.bf16.msra.mxu0 0
    %1525 = vmatprep.subr.bf16.mxu0 0
    %1526 = vmatpush1.bf16.msra.mxu0 0
    %1527 = vmatprep.subr.bf16.mxu0 0
    %1528 = vmatpush1.bf16.msra.mxu0 0
    %1529 = vmatprep.subr.bf16.mxu0 0
    %1530 = vmatpush1.bf16.msra.mxu0 0
    %1531 = vmatprep.subr.bf16.mxu0 0
    %1532 = vmatpush1.bf16.msra.mxu0 0
    %1533 = vmatprep.subr.bf16.mxu0 0
    %1534 = vmatpush1.bf16.msra.mxu0 0
    %1535 = vmatprep.subr.bf16.mxu0 0
    %1536 = vmatpush1.bf16.msra.mxu0 0
    %1537 = vmatprep.subr.bf16.mxu0 0
    %1538 = vmatpush1.bf16.msra.mxu0 0
    %1539 = vmatprep.subr.bf16.mxu0 0
    %1540 = vmatpush1.bf16.msra.mxu0 0
    %1541 = vmatprep.subr.bf16.mxu0 0
    %1542 = vmatpush1.bf16.msra.mxu0 0
    %1543 = vmatprep.subr.bf16.mxu0 0
    %1544 = vmatpush1.bf16.msra.mxu0 0
    %1545 = vmatprep.subr.bf16.mxu0 0
    %1546 = vmatpush1.bf16.msra.mxu0 0
    %1547 = vmatprep.subr.bf16.mxu0 0
    %1548 = vmatpush1.bf16.msra.mxu0 0
    %1549 = vmatprep.mubr.bf16.mxu0 0
    %1550 = vmatmul.mubr.bf16.gmra.mrb[0].mxu0 %v518
    %v1551 = vpop.f32.mrb[0].mxu0
    %v1552 = vadd.f32 %v1430, %v1551
    %v1553 = vpop.f32.mrb[0].mxu0
    %v1554 = vadd.f32 %v1432, %v1553
    %v1555 = vpop.f32.mrb[0].mxu0
    %v1556 = vpop.f32.mrb[0].mxu0
    %1557 = vdwg.mxu0
    %1558 = vmatprep.subr.bf16.mxu0 %v1504
    %1559 = vmatpush1.bf16.msra.mxu0 %v1503
    %1560 = vmatprep.subr.bf16.mxu0 %v1508
    %1561 = vmatpush1.bf16.msra.mxu0 %v1507
    %1562 = vmatprep.subr.bf16.mxu0 0
    %1563 = vmatpush1.bf16.msra.mxu0 0
    %1564 = vmatprep.subr.bf16.mxu0 0
    %1565 = vmatpush1.bf16.msra.mxu0 0
    %1566 = vmatprep.subr.bf16.mxu0 0
    %1567 = vmatpush1.bf16.msra.mxu0 0
    %1568 = vmatprep.subr.bf16.mxu0 0
    %1569 = vmatpush1.bf16.msra.mxu0 0
    %1570 = vmatprep.subr.bf16.mxu0 0
    %1571 = vmatpush1.bf16.msra.mxu0 0
    %1572 = vmatprep.subr.bf16.mxu0 0
    %1573 = vmatpush1.bf16.msra.mxu0 0
    %1574 = vmatprep.subr.bf16.mxu0 0
    %1575 = vmatpush1.bf16.msra.mxu0 0
    %1576 = vmatprep.subr.bf16.mxu0 0
    %1577 = vmatpush1.bf16.msra.mxu0 0
    %1578 = vmatprep.subr.bf16.mxu0 0
    %1579 = vmatpush1.bf16.msra.mxu0 0
    %1580 = vmatprep.subr.bf16.mxu0 0
    %1581 = vmatpush1.bf16.msra.mxu0 0
    %1582 = vmatprep.subr.bf16.mxu0 0
    %1583 = vmatpush1.bf16.msra.mxu0 0
    %1584 = vmatprep.subr.bf16.mxu0 0
    %1585 = vmatpush1.bf16.msra.mxu0 0
    %1586 = vmatprep.subr.bf16.mxu0 0
    %1587 = vmatpush1.bf16.msra.mxu0 0
    %1588 = vmatprep.subr.bf16.mxu0 0
    %1589 = vmatpush1.bf16.msra.mxu0 0
    %1590 = vmatprep.mubr.bf16.mxu0 0
    %1591 = vmatmul.mubr.bf16.gmra.mrb[0].mxu0 %v518
    %v1592 = vpop.f32.mrb[0].mxu0
    %v1593 = vadd.f32 %v1471, %v1592
    %v1594 = vpop.f32.mrb[0].mxu0
    %v1595 = vadd.f32 %v1473, %v1594
    %v1596 = vpop.f32.mrb[0].mxu0
    %v1597 = vpop.f32.mrb[0].mxu0
    %1598 = vdwg.mxu0
    %v1600 = vlaneseq
    %v1601 = vshrl.u32 %v1600, 7
    %v1602 = vsub.s32 0, %v1601
    %v1603 = vrot.slane %v1354, %v1602
    %v1604 = vlaneseq
    %v1605 = vshrl.u32 %v1604, 7
    %v1606 = vsub.s32 1, %v1605
    %v1607 = vrot.slane %v1354, %v1606
    %v1608 = vlaneseq
    %v1609 = vshrl.u32 %v1608, 7
    %v1610 = vsub.s32 2, %v1609
    %v1611 = vrot.slane %v1354, %v1610
    %v1612 = vlaneseq
    %v1613 = vshrl.u32 %v1612, 7
    %v1614 = vsub.s32 3, %v1613
    %v1615 = vrot.slane %v1354, %v1614
    %v1620 = vadd.f32 %v1552, %v1603
    %v1621 = vadd.f32 %v1554, %v1607
    %v1622 = vadd.f32 %v1593, %v1611
    %v1623 = vadd.f32 %v1595, %v1615
    %v1624 = vxor.u32 %v1620, 2147483648
    %v1625 = vmul.f32 %v1624, 1.442695
    %v1626 = vpow.pop %v1625
    %v1627 = vadd.f32 %v1626, 1.0
    %v1628 = vrcp.pop %v1627
    %v1629 = vmul.f32 1.0, %v1628
    %v1630 = vxor.u32 %v1621, 2147483648
    %v1631 = vmul.f32 %v1630, 1.442695
    %v1632 = vpow.pop %v1631
    %v1633 = vadd.f32 %v1632, 1.0
    %v1634 = vrcp.pop %v1633
    %v1635 = vmul.f32 1.0, %v1634
    %v1636 = vtanh.pop %v1622
    %v1637 = vxor.u32 %v1623, 2147483648
    %v1638 = vmul.f32 %v1637, 1.442695
    %v1639 = vpow.pop %v1638
    %v1640 = vadd.f32 %v1639, 1.0
    %v1641 = vrcp.pop %v1640
    %v1642 = vmul.f32 1.0, %v1641
    %v1643 = vmul.f32 %v1635, 0.0
    %v1644 = vmul.f32 %v1629, %v1636
    %v1645 = vadd.f32 %v1643, %v1644
    %v1646 = vtanh.pop %v1645
    %v1647 = vmul.f32 %v1642, %v1646
    %v1648 = vpack.c.bf16 %v1647, %v1647
    %v1650 = vsel %vm164, %v1648, 0
    %1652 = vmatprep.subr.bf16.mxu0 %v1380
    %1653 = vmatpush1.bf16.msra.mxu0 %v1379
    %1654 = vmatprep.subr.bf16.mxu0 %v1384
    %1655 = vmatpush1.bf16.msra.mxu0 %v1383
    %1656 = vmatprep.subr.bf16.mxu0 0
    %1657 = vmatpush1.bf16.msra.mxu0 0
    %1658 = vmatprep.subr.bf16.mxu0 0
    %1659 = vmatpush1.bf16.msra.mxu0 0
    %1660 = vmatprep.subr.bf16.mxu0 0
    %1661 = vmatpush1.bf16.msra.mxu0 0
    %1662 = vmatprep.subr.bf16.mxu0 0
    %1663 = vmatpush1.bf16.msra.mxu0 0
    %1664 = vmatprep.subr.bf16.mxu0 0
    %1665 = vmatpush1.bf16.msra.mxu0 0
    %1666 = vmatprep.subr.bf16.mxu0 0
    %1667 = vmatpush1.bf16.msra.mxu0 0
    %1668 = vmatprep.subr.bf16.mxu0 0
    %1669 = vmatpush1.bf16.msra.mxu0 0
    %1670 = vmatprep.subr.bf16.mxu0 0
    %1671 = vmatpush1.bf16.msra.mxu0 0
    %1672 = vmatprep.subr.bf16.mxu0 0
    %1673 = vmatpush1.bf16.msra.mxu0 0
    %1674 = vmatprep.subr.bf16.mxu0 0
    %1675 = vmatpush1.bf16.msra.mxu0 0
    %1676 = vmatprep.subr.bf16.mxu0 0
    %1677 = vmatpush1.bf16.msra.mxu0 0
    %1678 = vmatprep.subr.bf16.mxu0 0
    %1679 = vmatpush1.bf16.msra.mxu0 0
    %1680 = vmatprep.subr.bf16.mxu0 0
    %1681 = vmatpush1.bf16.msra.mxu0 0
    %1682 = vmatprep.subr.bf16.mxu0 0
    %1683 = vmatpush1.bf16.msra.mxu0 0
    %1684 = vmatprep.mubr.bf16.mxu0 0
    %1685 = vmatmul.mubr.bf16.gmra.mrb[0].mxu0 %v1650
    %v1686 = vpop.f32.mrb[0].mxu0
    %v1687 = vadd.f32 0.0, %v1686
    %v1688 = vpop.f32.mrb[0].mxu0
    %v1689 = vadd.f32 0.0, %v1688
    %v1690 = vpop.f32.mrb[0].mxu0
    %v1691 = vpop.f32.mrb[0].mxu0
    %1692 = vdwg.mxu0
    %1693 = vmatprep.subr.bf16.mxu0 %v1382
    %1694 = vmatpush1.bf16.msra.mxu0 %v1381
    %1695 = vmatprep.subr.bf16.mxu0 %v1386
    %1696 = vmatpush1.bf16.msra.mxu0 %v1385
    %1697 = vmatprep.subr.bf16.mxu0 0
    %1698 = vmatpush1.bf16.msra.mxu0 0
    %1699 = vmatprep.subr.bf16.mxu0 0
    %1700 = vmatpush1.bf16.msra.mxu0 0
    %1701 = vmatprep.subr.bf16.mxu0 0
    %1702 = vmatpush1.bf16.msra.mxu0 0
    %1703 = vmatprep.subr.bf16.mxu0 0
    %1704 = vmatpush1.bf16.msra.mxu0 0
    %1705 = vmatprep.subr.bf16.mxu0 0
    %1706 = vmatpush1.bf16.msra.mxu0 0
    %1707 = vmatprep.subr.bf16.mxu0 0
    %1708 = vmatpush1.bf16.msra.mxu0 0
    %1709 = vmatprep.subr.bf16.mxu0 0
    %1710 = vmatpush1.bf16.msra.mxu0 0
    %1711 = vmatprep.subr.bf16.mxu0 0
    %1712 = vmatpush1.bf16.msra.mxu0 0
    %1713 = vmatprep.subr.bf16.mxu0 0
    %1714 = vmatpush1.bf16.msra.mxu0 0
    %1715 = vmatprep.subr.bf16.mxu0 0
    %1716 = vmatpush1.bf16.msra.mxu0 0
    %1717 = vmatprep.subr.bf16.mxu0 0
    %1718 = vmatpush1.bf16.msra.mxu0 0
    %1719 = vmatprep.subr.bf16.mxu0 0
    %1720 = vmatpush1.bf16.msra.mxu0 0
    %1721 = vmatprep.subr.bf16.mxu0 0
    %1722 = vmatpush1.bf16.msra.mxu0 0
    %1723 = vmatprep.subr.bf16.mxu0 0
    %1724 = vmatpush1.bf16.msra.mxu0 0
    %1725 = vmatprep.mubr.bf16.mxu0 0
    %1726 = vmatmul.mubr.bf16.gmra.mrb[0].mxu0 %v1650
    %v1727 = vpop.f32.mrb[0].mxu0
    %v1728 = vadd.f32 0.0, %v1727
    %v1729 = vpop.f32.mrb[0].mxu0
    %v1730 = vadd.f32 0.0, %v1729
    %v1731 = vpop.f32.mrb[0].mxu0
    %v1732 = vpop.f32.mrb[0].mxu0
    %1733 = vdwg.mxu0
    %1734 = vmatprep.subr.bf16.mxu0 %v1502
    %1735 = vmatpush1.bf16.msra.mxu0 %v1501
    %1736 = vmatprep.subr.bf16.mxu0 %v1506
    %1737 = vmatpush1.bf16.msra.mxu0 %v1505
    %1738 = vmatprep.subr.bf16.mxu0 0
    %1739 = vmatpush1.bf16.msra.mxu0 0
    %1740 = vmatprep.subr.bf16.mxu0 0
    %1741 = vmatpush1.bf16.msra.mxu0 0
    %1742 = vmatprep.subr.bf16.mxu0 0
    %1743 = vmatpush1.bf16.msra.mxu0 0
    %1744 = vmatprep.subr.bf16.mxu0 0
    %1745 = vmatpush1.bf16.msra.mxu0 0
    %1746 = vmatprep.subr.bf16.mxu0 0
    %1747 = vmatpush1.bf16.msra.mxu0 0
    %1748 = vmatprep.subr.bf16.mxu0 0
    %1749 = vmatpush1.bf16.msra.mxu0 0
    %1750 = vmatprep.subr.bf16.mxu0 0
    %1751 = vmatpush1.bf16.msra.mxu0 0
    %1752 = vmatprep.subr.bf16.mxu0 0
    %1753 = vmatpush1.bf16.msra.mxu0 0
    %1754 = vmatprep.subr.bf16.mxu0 0
    %1755 = vmatpush1.bf16.msra.mxu0 0
    %1756 = vmatprep.subr.bf16.mxu0 0
    %1757 = vmatpush1.bf16.msra.mxu0 0
    %1758 = vmatprep.subr.bf16.mxu0 0
    %1759 = vmatpush1.bf16.msra.mxu0 0
    %1760 = vmatprep.subr.bf16.mxu0 0
    %1761 = vmatpush1.bf16.msra.mxu0 0
    %1762 = vmatprep.subr.bf16.mxu0 0
    %1763 = vmatpush1.bf16.msra.mxu0 0
    %1764 = vmatprep.subr.bf16.mxu0 0
    %1765 = vmatpush1.bf16.msra.mxu0 0
    %1766 = vmatprep.mubr.bf16.mxu0 0
    %1767 = vmatmul.mubr.bf16.gmra.mrb[0].mxu0 %v636
    %v1768 = vpop.f32.mrb[0].mxu0
    %v1769 = vadd.f32 %v1687, %v1768
    %v1770 = vpop.f32.mrb[0].mxu0
    %v1771 = vadd.f32 %v1689, %v1770
    %v1772 = vpop.f32.mrb[0].mxu0
    %v1773 = vpop.f32.mrb[0].mxu0
    %1774 = vdwg.mxu0
    %1775 = vmatprep.subr.bf16.mxu0 %v1504
    %1776 = vmatpush1.bf16.msra.mxu0 %v1503
    %1777 = vmatprep.subr.bf16.mxu0 %v1508
    %1778 = vmatpush1.bf16.msra.mxu0 %v1507
    %1779 = vmatprep.subr.bf16.mxu0 0
    %1780 = vmatpush1.bf16.msra.mxu0 0
    %1781 = vmatprep.subr.bf16.mxu0 0
    %1782 = vmatpush1.bf16.msra.mxu0 0
    %1783 = vmatprep.subr.bf16.mxu0 0
    %1784 = vmatpush1.bf16.msra.mxu0 0
    %1785 = vmatprep.subr.bf16.mxu0 0
    %1786 = vmatpush1.bf16.msra.mxu0 0
    %1787 = vmatprep.subr.bf16.mxu0 0
    %1788 = vmatpush1.bf16.msra.mxu0 0
    %1789 = vmatprep.subr.bf16.mxu0 0
    %1790 = vmatpush1.bf16.msra.mxu0 0
    %1791 = vmatprep.subr.bf16.mxu0 0
    %1792 = vmatpush1.bf16.msra.mxu0 0
    %1793 = vmatprep.subr.bf16.mxu0 0
    %1794 = vmatpush1.bf16.msra.mxu0 0
    %1795 = vmatprep.subr.bf16.mxu0 0
    %1796 = vmatpush1.bf16.msra.mxu0 0
    %1797 = vmatprep.subr.bf16.mxu0 0
    %1798 = vmatpush1.bf16.msra.mxu0 0
    %1799 = vmatprep.subr.bf16.mxu0 0
    %1800 = vmatpush1.bf16.msra.mxu0 0
    %1801 = vmatprep.subr.bf16.mxu0 0
    %1802 = vmatpush1.bf16.msra.mxu0 0
    %1803 = vmatprep.subr.bf16.mxu0 0
    %1804 = vmatpush1.bf16.msra.mxu0 0
    %1805 = vmatprep.subr.bf16.mxu0 0
    %1806 = vmatpush1.bf16.msra.mxu0 0
    %1807 = vmatprep.mubr.bf16.mxu0 0
    %1808 = vmatmul.mubr.bf16.gmra.mrb[0].mxu0 %v636
    %v1809 = vpop.f32.mrb[0].mxu0
    %v1810 = vadd.f32 %v1728, %v1809
    %v1811 = vpop.f32.mrb[0].mxu0
    %v1812 = vadd.f32 %v1730, %v1811
    %v1813 = vpop.f32.mrb[0].mxu0
    %v1814 = vpop.f32.mrb[0].mxu0
    %1815 = vdwg.mxu0
    %v1816 = vadd.f32 %v1769, %v1603
    %v1817 = vadd.f32 %v1771, %v1607
    %v1818 = vadd.f32 %v1810, %v1611
    %v1819 = vadd.f32 %v1812, %v1615
    %v1820 = vxor.u32 %v1816, 2147483648
    %v1821 = vmul.f32 %v1820, 1.442695
    %v1822 = vpow.pop %v1821
    %v1823 = vadd.f32 %v1822, 1.0
    %v1824 = vrcp.pop %v1823
    %v1825 = vmul.f32 1.0, %v1824
    %v1826 = vxor.u32 %v1817, 2147483648
    %v1827 = vmul.f32 %v1826, 1.442695
    %v1828 = vpow.pop %v1827
    %v1829 = vadd.f32 %v1828, 1.0
    %v1830 = vrcp.pop %v1829
    %v1831 = vmul.f32 1.0, %v1830
    %v1832 = vtanh.pop %v1818
    %v1833 = vxor.u32 %v1819, 2147483648
    %v1834 = vmul.f32 %v1833, 1.442695
    %v1835 = vpow.pop %v1834
    %v1836 = vadd.f32 %v1835, 1.0
    %v1837 = vrcp.pop %v1836
    %v1838 = vmul.f32 1.0, %v1837
    %v1839 = vmul.f32 %v1831, %v1645
    %v1840 = vmul.f32 %v1825, %v1832
    %v1841 = vadd.f32 %v1839, %v1840
    %v1842 = vtanh.pop %v1841
    %v1843 = vmul.f32 %v1838, %v1842
    %v1844 = vpack.c.bf16 %v1843, %v1843
    %v1846 = vsel %vm164, %v1844, 0
    %1848 = vmatprep.subr.bf16.mxu0 %v1380
    %1849 = vmatpush1.bf16.msra.mxu0 %v1379
    %1850 = vmatprep.subr.bf16.mxu0 %v1384
    %1851 = vmatpush1.bf16.msra.mxu0 %v1383
    %1852 = vmatprep.subr.bf16.mxu0 0
    %1853 = vmatpush1.bf16.msra.mxu0 0
    %1854 = vmatprep.subr.bf16.mxu0 0
    %1855 = vmatpush1.bf16.msra.mxu0 0
    %1856 = vmatprep.subr.bf16.mxu0 0
    %1857 = vmatpush1.bf16.msra.mxu0 0
    %1858 = vmatprep.subr.bf16.mxu0 0
    %1859 = vmatpush1.bf16.msra.mxu0 0
    %1860 = vmatprep.subr.bf16.mxu0 0
    %1861 = vmatpush1.bf16.msra.mxu0 0
    %1862 = vmatprep.subr.bf16.mxu0 0
    %1863 = vmatpush1.bf16.msra.mxu0 0
    %1864 = vmatprep.subr.bf16.mxu0 0
    %1865 = vmatpush1.bf16.msra.mxu0 0
    %1866 = vmatprep.subr.bf16.mxu0 0
    %1867 = vmatpush1.bf16.msra.mxu0 0
    %1868 = vmatprep.subr.bf16.mxu0 0
    %1869 = vmatpush1.bf16.msra.mxu0 0
    %1870 = vmatprep.subr.bf16.mxu0 0
    %1871 = vmatpush1.bf16.msra.mxu0 0
    %1872 = vmatprep.subr.bf16.mxu0 0
    %1873 = vmatpush1.bf16.msra.mxu0 0
    %1874 = vmatprep.subr.bf16.mxu0 0
    %1875 = vmatpush1.bf16.msra.mxu0 0
    %1876 = vmatprep.subr.bf16.mxu0 0
    %1877 = vmatpush1.bf16.msra.mxu0 0
    %1878 = vmatprep.subr.bf16.mxu0 0
    %1879 = vmatpush1.bf16.msra.mxu0 0
    %1880 = vmatprep.mubr.bf16.mxu0 0
    %1881 = vmatmul.mubr.bf16.gmra.mrb[0].mxu0 %v1846
    %v1882 = vpop.f32.mrb[0].mxu0
    %v1883 = vadd.f32 0.0, %v1882
    %v1884 = vpop.f32.mrb[0].mxu0
    %v1885 = vadd.f32 0.0, %v1884
    %v1886 = vpop.f32.mrb[0].mxu0
    %v1887 = vpop.f32.mrb[0].mxu0
    %1888 = vdwg.mxu0
    %1889 = vmatprep.subr.bf16.mxu0 %v1382
    %1890 = vmatpush1.bf16.msra.mxu0 %v1381
    %1891 = vmatprep.subr.bf16.mxu0 %v1386
    %1892 = vmatpush1.bf16.msra.mxu0 %v1385
    %1893 = vmatprep.subr.bf16.mxu0 0
    %1894 = vmatpush1.bf16.msra.mxu0 0
    %1895 = vmatprep.subr.bf16.mxu0 0
    %1896 = vmatpush1.bf16.msra.mxu0 0
    %1897 = vmatprep.subr.bf16.mxu0 0
    %1898 = vmatpush1.bf16.msra.mxu0 0
    %1899 = vmatprep.subr.bf16.mxu0 0
    %1900 = vmatpush1.bf16.msra.mxu0 0
    %1901 = vmatprep.subr.bf16.mxu0 0
    %1902 = vmatpush1.bf16.msra.mxu0 0
    %1903 = vmatprep.subr.bf16.mxu0 0
    %1904 = vmatpush1.bf16.msra.mxu0 0
    %1905 = vmatprep.subr.bf16.mxu0 0
    %1906 = vmatpush1.bf16.msra.mxu0 0
    %1907 = vmatprep.subr.bf16.mxu0 0
    %1908 = vmatpush1.bf16.msra.mxu0 0
    %1909 = vmatprep.subr.bf16.mxu0 0
    %1910 = vmatpush1.bf16.msra.mxu0 0
    %1911 = vmatprep.subr.bf16.mxu0 0
    %1912 = vmatpush1.bf16.msra.mxu0 0
    %1913 = vmatprep.subr.bf16.mxu0 0
    %1914 = vmatpush1.bf16.msra.mxu0 0
    %1915 = vmatprep.subr.bf16.mxu0 0
    %1916 = vmatpush1.bf16.msra.mxu0 0
    %1917 = vmatprep.subr.bf16.mxu0 0
    %1918 = vmatpush1.bf16.msra.mxu0 0
    %1919 = vmatprep.subr.bf16.mxu0 0
    %1920 = vmatpush1.bf16.msra.mxu0 0
    %1921 = vmatprep.mubr.bf16.mxu0 0
    %1922 = vmatmul.mubr.bf16.gmra.mrb[0].mxu0 %v1846
    %v1923 = vpop.f32.mrb[0].mxu0
    %v1924 = vadd.f32 0.0, %v1923
    %v1925 = vpop.f32.mrb[0].mxu0
    %v1926 = vadd.f32 0.0, %v1925
    %v1927 = vpop.f32.mrb[0].mxu0
    %v1928 = vpop.f32.mrb[0].mxu0
    %1929 = vdwg.mxu0
    %1930 = vmatprep.subr.bf16.mxu0 %v1502
    %1931 = vmatpush1.bf16.msra.mxu0 %v1501
    %1932 = vmatprep.subr.bf16.mxu0 %v1506
    %1933 = vmatpush1.bf16.msra.mxu0 %v1505
    %1934 = vmatprep.subr.bf16.mxu0 0
    %1935 = vmatpush1.bf16.msra.mxu0 0
    %1936 = vmatprep.subr.bf16.mxu0 0
    %1937 = vmatpush1.bf16.msra.mxu0 0
    %1938 = vmatprep.subr.bf16.mxu0 0
    %1939 = vmatpush1.bf16.msra.mxu0 0
    %1940 = vmatprep.subr.bf16.mxu0 0
    %1941 = vmatpush1.bf16.msra.mxu0 0
    %1942 = vmatprep.subr.bf16.mxu0 0
    %1943 = vmatpush1.bf16.msra.mxu0 0
    %1944 = vmatprep.subr.bf16.mxu0 0
    %1945 = vmatpush1.bf16.msra.mxu0 0
    %1946 = vmatprep.subr.bf16.mxu0 0
    %1947 = vmatpush1.bf16.msra.mxu0 0
    %1948 = vmatprep.subr.bf16.mxu0 0
    %1949 = vmatpush1.bf16.msra.mxu0 0
    %1950 = vmatprep.subr.bf16.mxu0 0
    %1951 = vmatpush1.bf16.msra.mxu0 0
    %1952 = vmatprep.subr.bf16.mxu0 0
    %1953 = vmatpush1.bf16.msra.mxu0 0
    %1954 = vmatprep.subr.bf16.mxu0 0
    %1955 = vmatpush1.bf16.msra.mxu0 0
    %1956 = vmatprep.subr.bf16.mxu0 0
    %1957 = vmatpush1.bf16.msra.mxu0 0
    %1958 = vmatprep.subr.bf16.mxu0 0
    %1959 = vmatpush1.bf16.msra.mxu0 0
    %1960 = vmatprep.subr.bf16.mxu0 0
    %1961 = vmatpush1.bf16.msra.mxu0 0
    %1962 = vmatprep.mubr.bf16.mxu0 0
    %1963 = vmatmul.mubr.bf16.gmra.mrb[0].mxu0 %v754
    %v1964 = vpop.f32.mrb[0].mxu0
    %v1965 = vadd.f32 %v1883, %v1964
    %v1966 = vpop.f32.mrb[0].mxu0
    %v1967 = vadd.f32 %v1885, %v1966
    %v1968 = vpop.f32.mrb[0].mxu0
    %v1969 = vpop.f32.mrb[0].mxu0
    %1970 = vdwg.mxu0
    %1971 = vmatprep.subr.bf16.mxu0 %v1504
    %1972 = vmatpush1.bf16.msra.mxu0 %v1503
    %1973 = vmatprep.subr.bf16.mxu0 %v1508
    %1974 = vmatpush1.bf16.msra.mxu0 %v1507
    %1975 = vmatprep.subr.bf16.mxu0 0
    %1976 = vmatpush1.bf16.msra.mxu0 0
    %1977 = vmatprep.subr.bf16.mxu0 0
    %1978 = vmatpush1.bf16.msra.mxu0 0
    %1979 = vmatprep.subr.bf16.mxu0 0
    %1980 = vmatpush1.bf16.msra.mxu0 0
    %1981 = vmatprep.subr.bf16.mxu0 0
    %1982 = vmatpush1.bf16.msra.mxu0 0
    %1983 = vmatprep.subr.bf16.mxu0 0
    %1984 = vmatpush1.bf16.msra.mxu0 0
    %1985 = vmatprep.subr.bf16.mxu0 0
    %1986 = vmatpush1.bf16.msra.mxu0 0
    %1987 = vmatprep.subr.bf16.mxu0 0
    %1988 = vmatpush1.bf16.msra.mxu0 0
    %1989 = vmatprep.subr.bf16.mxu0 0
    %1990 = vmatpush1.bf16.msra.mxu0 0
    %1991 = vmatprep.subr.bf16.mxu0 0
    %1992 = vmatpush1.bf16.msra.mxu0 0
    %1993 = vmatprep.subr.bf16.mxu0 0
    %1994 = vmatpush1.bf16.msra.mxu0 0
    %1995 = vmatprep.subr.bf16.mxu0 0
    %1996 = vmatpush1.bf16.msra.mxu0 0
    %1997 = vmatprep.subr.bf16.mxu0 0
    %1998 = vmatpush1.bf16.msra.mxu0 0
    %1999 = vmatprep.subr.bf16.mxu0 0
    %2000 = vmatpush1.bf16.msra.mxu0 0
    %2001 = vmatprep.subr.bf16.mxu0 0
    %2002 = vmatpush1.bf16.msra.mxu0 0
    %2003 = vmatprep.mubr.bf16.mxu0 0
    %2004 = vmatmul.mubr.bf16.gmra.mrb[0].mxu0 %v754
    %v2005 = vpop.f32.mrb[0].mxu0
    %v2006 = vadd.f32 %v1924, %v2005
    %v2007 = vpop.f32.mrb[0].mxu0
    %v2008 = vadd.f32 %v1926, %v2007
    %v2009 = vpop.f32.mrb[0].mxu0
    %v2010 = vpop.f32.mrb[0].mxu0
    %2011 = vdwg.mxu0
    %v2012 = vadd.f32 %v1965, %v1603
    %v2013 = vadd.f32 %v1967, %v1607
    %v2014 = vadd.f32 %v2006, %v1611
    %v2015 = vadd.f32 %v2008, %v1615
    %v2016 = vxor.u32 %v2012, 2147483648
    %v2017 = vmul.f32 %v2016, 1.442695
    %v2018 = vpow.pop %v2017
    %v2019 = vadd.f32 %v2018, 1.0
    %v2020 = vrcp.pop %v2019
    %v2021 = vmul.f32 1.0, %v2020
    %v2022 = vxor.u32 %v2013, 2147483648
    %v2023 = vmul.f32 %v2022, 1.442695
    %v2024 = vpow.pop %v2023
    %v2025 = vadd.f32 %v2024, 1.0
    %v2026 = vrcp.pop %v2025
    %v2027 = vmul.f32 1.0, %v2026
    %v2028 = vtanh.pop %v2014
    %v2029 = vxor.u32 %v2015, 2147483648
    %v2030 = vmul.f32 %v2029, 1.442695
    %v2031 = vpow.pop %v2030
    %v2032 = vadd.f32 %v2031, 1.0
    %v2033 = vrcp.pop %v2032
    %v2034 = vmul.f32 1.0, %v2033
    %v2035 = vmul.f32 %v2027, %v1841
    %v2036 = vmul.f32 %v2021, %v2028
    %v2037 = vadd.f32 %v2035, %v2036
    %v2038 = vtanh.pop %v2037
    %v2039 = vmul.f32 %v2034, %v2038
    %v2040 = vpack.c.bf16 %v2039, %v2039
    %v2042 = vsel %vm164, %v2040, 0
    %2044 = vmatprep.subr.bf16.mxu0 %v1380
    %2045 = vmatpush1.bf16.msra.mxu0 %v1379
    %2046 = vmatprep.subr.bf16.mxu0 %v1384
    %2047 = vmatpush1.bf16.msra.mxu0 %v1383
    %2048 = vmatprep.subr.bf16.mxu0 0
    %2049 = vmatpush1.bf16.msra.mxu0 0
    %2050 = vmatprep.subr.bf16.mxu0 0
    %2051 = vmatpush1.bf16.msra.mxu0 0
    %2052 = vmatprep.subr.bf16.mxu0 0
    %2053 = vmatpush1.bf16.msra.mxu0 0
    %2054 = vmatprep.subr.bf16.mxu0 0
    %2055 = vmatpush1.bf16.msra.mxu0 0
    %2056 = vmatprep.subr.bf16.mxu0 0
    %2057 = vmatpush1.bf16.msra.mxu0 0
    %2058 = vmatprep.subr.bf16.mxu0 0
    %2059 = vmatpush1.bf16.msra.mxu0 0
    %2060 = vmatprep.subr.bf16.mxu0 0
    %2061 = vmatpush1.bf16.msra.mxu0 0
    %2062 = vmatprep.subr.bf16.mxu0 0
    %2063 = vmatpush1.bf16.msra.mxu0 0
    %2064 = vmatprep.subr.bf16.mxu0 0
    %2065 = vmatpush1.bf16.msra.mxu0 0
    %2066 = vmatprep.subr.bf16.mxu0 0
    %2067 = vmatpush1.bf16.msra.mxu0 0
    %2068 = vmatprep.subr.bf16.mxu0 0
    %2069 = vmatpush1.bf16.msra.mxu0 0
    %2070 = vmatprep.subr.bf16.mxu0 0
    %2071 = vmatpush1.bf16.msra.mxu0 0
    %2072 = vmatprep.subr.bf16.mxu0 0
    %2073 = vmatpush1.bf16.msra.mxu0 0
    %2074 = vmatprep.subr.bf16.mxu0 0
    %2075 = vmatpush1.bf16.msra.mxu0 0
    %2076 = vmatprep.mubr.bf16.mxu0 0
    %2077 = vmatmul.mubr.bf16.gmra.mrb[0].mxu0 %v2042
    %v2078 = vpop.f32.mrb[0].mxu0
    %v2079 = vadd.f32 0.0, %v2078
    %v2080 = vpop.f32.mrb[0].mxu0
    %v2081 = vadd.f32 0.0, %v2080
    %v2082 = vpop.f32.mrb[0].mxu0
    %v2083 = vpop.f32.mrb[0].mxu0
    %2084 = vdwg.mxu0
    %2085 = vmatprep.subr.bf16.mxu0 %v1382
    %2086 = vmatpush1.bf16.msra.mxu0 %v1381
    %2087 = vmatprep.subr.bf16.mxu0 %v1386
    %2088 = vmatpush1.bf16.msra.mxu0 %v1385
    %2089 = vmatprep.subr.bf16.mxu0 0
    %2090 = vmatpush1.bf16.msra.mxu0 0
    %2091 = vmatprep.subr.bf16.mxu0 0
    %2092 = vmatpush1.bf16.msra.mxu0 0
    %2093 = vmatprep.subr.bf16.mxu0 0
    %2094 = vmatpush1.bf16.msra.mxu0 0
    %2095 = vmatprep.subr.bf16.mxu0 0
    %2096 = vmatpush1.bf16.msra.mxu0 0
    %2097 = vmatprep.subr.bf16.mxu0 0
    %2098 = vmatpush1.bf16.msra.mxu0 0
    %2099 = vmatprep.subr.bf16.mxu0 0
    %2100 = vmatpush1.bf16.msra.mxu0 0
    %2101 = vmatprep.subr.bf16.mxu0 0
    %2102 = vmatpush1.bf16.msra.mxu0 0
    %2103 = vmatprep.subr.bf16.mxu0 0
    %2104 = vmatpush1.bf16.msra.mxu0 0
    %2105 = vmatprep.subr.bf16.mxu0 0
    %2106 = vmatpush1.bf16.msra.mxu0 0
    %2107 = vmatprep.subr.bf16.mxu0 0
    %2108 = vmatpush1.bf16.msra.mxu0 0
    %2109 = vmatprep.subr.bf16.mxu0 0
    %2110 = vmatpush1.bf16.msra.mxu0 0
    %2111 = vmatprep.subr.bf16.mxu0 0
    %2112 = vmatpush1.bf16.msra.mxu0 0
    %2113 = vmatprep.subr.bf16.mxu0 0
    %2114 = vmatpush1.bf16.msra.mxu0 0
    %2115 = vmatprep.subr.bf16.mxu0 0
    %2116 = vmatpush1.bf16.msra.mxu0 0
    %2117 = vmatprep.mubr.bf16.mxu0 0
    %2118 = vmatmul.mubr.bf16.gmra.mrb[0].mxu0 %v2042
    %v2119 = vpop.f32.mrb[0].mxu0
    %v2120 = vadd.f32 0.0, %v2119
    %v2121 = vpop.f32.mrb[0].mxu0
    %v2122 = vadd.f32 0.0, %v2121
    %v2123 = vpop.f32.mrb[0].mxu0
    %v2124 = vpop.f32.mrb[0].mxu0
    %2125 = vdwg.mxu0
    %2126 = vmatprep.subr.bf16.mxu0 %v1502
    %2127 = vmatpush1.bf16.msra.mxu0 %v1501
    %2128 = vmatprep.subr.bf16.mxu0 %v1506
    %2129 = vmatpush1.bf16.msra.mxu0 %v1505
    %2130 = vmatprep.subr.bf16.mxu0 0
    %2131 = vmatpush1.bf16.msra.mxu0 0
    %2132 = vmatprep.subr.bf16.mxu0 0
    %2133 = vmatpush1.bf16.msra.mxu0 0
    %2134 = vmatprep.subr.bf16.mxu0 0
    %2135 = vmatpush1.bf16.msra.mxu0 0
    %2136 = vmatprep.subr.bf16.mxu0 0
    %2137 = vmatpush1.bf16.msra.mxu0 0
    %2138 = vmatprep.subr.bf16.mxu0 0
    %2139 = vmatpush1.bf16.msra.mxu0 0
    %2140 = vmatprep.subr.bf16.mxu0 0
    %2141 = vmatpush1.bf16.msra.mxu0 0
    %2142 = vmatprep.subr.bf16.mxu0 0
    %2143 = vmatpush1.bf16.msra.mxu0 0
    %2144 = vmatprep.subr.bf16.mxu0 0
    %2145 = vmatpush1.bf16.msra.mxu0 0
    %2146 = vmatprep.subr.bf16.mxu0 0
    %2147 = vmatpush1.bf16.msra.mxu0 0
    %2148 = vmatprep.subr.bf16.mxu0 0
    %2149 = vmatpush1.bf16.msra.mxu0 0
    %2150 = vmatprep.subr.bf16.mxu0 0
    %2151 = vmatpush1.bf16.msra.mxu0 0
    %2152 = vmatprep.subr.bf16.mxu0 0
    %2153 = vmatpush1.bf16.msra.mxu0 0
    %2154 = vmatprep.subr.bf16.mxu0 0
    %2155 = vmatpush1.bf16.msra.mxu0 0
    %2156 = vmatprep.subr.bf16.mxu0 0
    %2157 = vmatpush1.bf16.msra.mxu0 0
    %2158 = vmatprep.mubr.bf16.mxu0 0
    %2159 = vmatmul.mubr.bf16.gmra.mrb[0].mxu0 %v872
    %v2160 = vpop.f32.mrb[0].mxu0
    %v2161 = vadd.f32 %v2079, %v2160
    %v2162 = vpop.f32.mrb[0].mxu0
    %v2163 = vadd.f32 %v2081, %v2162
    %v2164 = vpop.f32.mrb[0].mxu0
    %v2165 = vpop.f32.mrb[0].mxu0
    %2166 = vdwg.mxu0
    %2167 = vmatprep.subr.bf16.mxu0 %v1504
    %2168 = vmatpush1.bf16.msra.mxu0 %v1503
    %2169 = vmatprep.subr.bf16.mxu0 %v1508
    %2170 = vmatpush1.bf16.msra.mxu0 %v1507
    %2171 = vmatprep.subr.bf16.mxu0 0
    %2172 = vmatpush1.bf16.msra.mxu0 0
    %2173 = vmatprep.subr.bf16.mxu0 0
    %2174 = vmatpush1.bf16.msra.mxu0 0
    %2175 = vmatprep.subr.bf16.mxu0 0
    %2176 = vmatpush1.bf16.msra.mxu0 0
    %2177 = vmatprep.subr.bf16.mxu0 0
    %2178 = vmatpush1.bf16.msra.mxu0 0
    %2179 = vmatprep.subr.bf16.mxu0 0
    %2180 = vmatpush1.bf16.msra.mxu0 0
    %2181 = vmatprep.subr.bf16.mxu0 0
    %2182 = vmatpush1.bf16.msra.mxu0 0
    %2183 = vmatprep.subr.bf16.mxu0 0
    %2184 = vmatpush1.bf16.msra.mxu0 0
    %2185 = vmatprep.subr.bf16.mxu0 0
    %2186 = vmatpush1.bf16.msra.mxu0 0
    %2187 = vmatprep.subr.bf16.mxu0 0
    %2188 = vmatpush1.bf16.msra.mxu0 0
    %2189 = vmatprep.subr.bf16.mxu0 0
    %2190 = vmatpush1.bf16.msra.mxu0 0
    %2191 = vmatprep.subr.bf16.mxu0 0
    %2192 = vmatpush1.bf16.msra.mxu0 0
    %2193 = vmatprep.subr.bf16.mxu0 0
    %2194 = vmatpush1.bf16.msra.mxu0 0
    %2195 = vmatprep.subr.bf16.mxu0 0
    %2196 = vmatpush1.bf16.msra.mxu0 0
    %2197 = vmatprep.subr.bf16.mxu0 0
    %2198 = vmatpush1.bf16.msra.mxu0 0
    %2199 = vmatprep.mubr.bf16.mxu0 0
    %2200 = vmatmul.mubr.bf16.gmra.mrb[0].mxu0 %v872
    %v2201 = vpop.f32.mrb[0].mxu0
    %v2202 = vadd.f32 %v2120, %v2201
    %v2203 = vpop.f32.mrb[0].mxu0
    %v2204 = vadd.f32 %v2122, %v2203
    %v2205 = vpop.f32.mrb[0].mxu0
    %v2206 = vpop.f32.mrb[0].mxu0
    %2207 = vdwg.mxu0
    %v2208 = vadd.f32 %v2161, %v1603
    %v2209 = vadd.f32 %v2163, %v1607
    %v2210 = vadd.f32 %v2202, %v1611
    %v2211 = vadd.f32 %v2204, %v1615
    %v2212 = vxor.u32 %v2208, 2147483648
    %v2213 = vmul.f32 %v2212, 1.442695
    %v2214 = vpow.pop %v2213
    %v2215 = vadd.f32 %v2214, 1.0
    %v2216 = vrcp.pop %v2215
    %v2217 = vmul.f32 1.0, %v2216
    %v2218 = vxor.u32 %v2209, 2147483648
    %v2219 = vmul.f32 %v2218, 1.442695
    %v2220 = vpow.pop %v2219
    %v2221 = vadd.f32 %v2220, 1.0
    %v2222 = vrcp.pop %v2221
    %v2223 = vmul.f32 1.0, %v2222
    %v2224 = vtanh.pop %v2210
    %v2225 = vxor.u32 %v2211, 2147483648
    %v2226 = vmul.f32 %v2225, 1.442695
    %v2227 = vpow.pop %v2226
    %v2228 = vadd.f32 %v2227, 1.0
    %v2229 = vrcp.pop %v2228
    %v2230 = vmul.f32 1.0, %v2229
    %v2231 = vmul.f32 %v2223, %v2037
    %v2232 = vmul.f32 %v2217, %v2224
    %v2233 = vadd.f32 %v2231, %v2232
    %v2234 = vtanh.pop %v2233
    %v2235 = vmul.f32 %v2230, %v2234
    %v2236 = vpack.c.bf16 %v2235, %v2235
    %v2238 = vsel %vm164, %v2236, 0
    %2240 = vmatprep.subr.bf16.mxu0 %v1380
    %2241 = vmatpush1.bf16.msra.mxu0 %v1379
    %2242 = vmatprep.subr.bf16.mxu0 %v1384
    %2243 = vmatpush1.bf16.msra.mxu0 %v1383
    %2244 = vmatprep.subr.bf16.mxu0 0
    %2245 = vmatpush1.bf16.msra.mxu0 0
    %2246 = vmatprep.subr.bf16.mxu0 0
    %2247 = vmatpush1.bf16.msra.mxu0 0
    %2248 = vmatprep.subr.bf16.mxu0 0
    %2249 = vmatpush1.bf16.msra.mxu0 0
    %2250 = vmatprep.subr.bf16.mxu0 0
    %2251 = vmatpush1.bf16.msra.mxu0 0
    %2252 = vmatprep.subr.bf16.mxu0 0
    %2253 = vmatpush1.bf16.msra.mxu0 0
    %2254 = vmatprep.subr.bf16.mxu0 0
    %2255 = vmatpush1.bf16.msra.mxu0 0
    %2256 = vmatprep.subr.bf16.mxu0 0
    %2257 = vmatpush1.bf16.msra.mxu0 0
    %2258 = vmatprep.subr.bf16.mxu0 0
    %2259 = vmatpush1.bf16.msra.mxu0 0
    %2260 = vmatprep.subr.bf16.mxu0 0
    %2261 = vmatpush1.bf16.msra.mxu0 0
    %2262 = vmatprep.subr.bf16.mxu0 0
    %2263 = vmatpush1.bf16.msra.mxu0 0
    %2264 = vmatprep.subr.bf16.mxu0 0
    %2265 = vmatpush1.bf16.msra.mxu0 0
    %2266 = vmatprep.subr.bf16.mxu0 0
    %2267 = vmatpush1.bf16.msra.mxu0 0
    %2268 = vmatprep.subr.bf16.mxu0 0
    %2269 = vmatpush1.bf16.msra.mxu0 0
    %2270 = vmatprep.subr.bf16.mxu0 0
    %2271 = vmatpush1.bf16.msra.mxu0 0
    %2272 = vmatprep.mubr.bf16.mxu0 0
    %2273 = vmatmul.mubr.bf16.gmra.mrb[0].mxu0 %v2238
    %v2274 = vpop.f32.mrb[0].mxu0
    %v2275 = vadd.f32 0.0, %v2274
    %v2276 = vpop.f32.mrb[0].mxu0
    %v2277 = vadd.f32 0.0, %v2276
    %v2278 = vpop.f32.mrb[0].mxu0
    %v2279 = vpop.f32.mrb[0].mxu0
    %2280 = vdwg.mxu0
    %2281 = vmatprep.subr.bf16.mxu0 %v1382
    %2282 = vmatpush1.bf16.msra.mxu0 %v1381
    %2283 = vmatprep.subr.bf16.mxu0 %v1386
    %2284 = vmatpush1.bf16.msra.mxu0 %v1385
    %2285 = vmatprep.subr.bf16.mxu0 0
    %2286 = vmatpush1.bf16.msra.mxu0 0
    %2287 = vmatprep.subr.bf16.mxu0 0
    %2288 = vmatpush1.bf16.msra.mxu0 0
    %2289 = vmatprep.subr.bf16.mxu0 0
    %2290 = vmatpush1.bf16.msra.mxu0 0
    %2291 = vmatprep.subr.bf16.mxu0 0
    %2292 = vmatpush1.bf16.msra.mxu0 0
    %2293 = vmatprep.subr.bf16.mxu0 0
    %2294 = vmatpush1.bf16.msra.mxu0 0
    %2295 = vmatprep.subr.bf16.mxu0 0
    %2296 = vmatpush1.bf16.msra.mxu0 0
    %2297 = vmatprep.subr.bf16.mxu0 0
    %2298 = vmatpush1.bf16.msra.mxu0 0
    %2299 = vmatprep.subr.bf16.mxu0 0
    %2300 = vmatpush1.bf16.msra.mxu0 0
    %2301 = vmatprep.subr.bf16.mxu0 0
    %2302 = vmatpush1.bf16.msra.mxu0 0
    %2303 = vmatprep.subr.bf16.mxu0 0
    %2304 = vmatpush1.bf16.msra.mxu0 0
    %2305 = vmatprep.subr.bf16.mxu0 0
    %2306 = vmatpush1.bf16.msra.mxu0 0
    %2307 = vmatprep.subr.bf16.mxu0 0
    %2308 = vmatpush1.bf16.msra.mxu0 0
    %2309 = vmatprep.subr.bf16.mxu0 0
    %2310 = vmatpush1.bf16.msra.mxu0 0
    %2311 = vmatprep.subr.bf16.mxu0 0
    %2312 = vmatpush1.bf16.msra.mxu0 0
    %2313 = vmatprep.mubr.bf16.mxu0 0
    %2314 = vmatmul.mubr.bf16.gmra.mrb[0].mxu0 %v2238
    %v2315 = vpop.f32.mrb[0].mxu0
    %v2316 = vadd.f32 0.0, %v2315
    %v2317 = vpop.f32.mrb[0].mxu0
    %v2318 = vadd.f32 0.0, %v2317
    %v2319 = vpop.f32.mrb[0].mxu0
    %v2320 = vpop.f32.mrb[0].mxu0
    %2321 = vdwg.mxu0
    %2322 = vmatprep.subr.bf16.mxu0 %v1502
    %2323 = vmatpush1.bf16.msra.mxu0 %v1501
    %2324 = vmatprep.subr.bf16.mxu0 %v1506
    %2325 = vmatpush1.bf16.msra.mxu0 %v1505
    %2326 = vmatprep.subr.bf16.mxu0 0
    %2327 = vmatpush1.bf16.msra.mxu0 0
    %2328 = vmatprep.subr.bf16.mxu0 0
    %2329 = vmatpush1.bf16.msra.mxu0 0
    %2330 = vmatprep.subr.bf16.mxu0 0
    %2331 = vmatpush1.bf16.msra.mxu0 0
    %2332 = vmatprep.subr.bf16.mxu0 0
    %2333 = vmatpush1.bf16.msra.mxu0 0
    %2334 = vmatprep.subr.bf16.mxu0 0
    %2335 = vmatpush1.bf16.msra.mxu0 0
    %2336 = vmatprep.subr.bf16.mxu0 0
    %2337 = vmatpush1.bf16.msra.mxu0 0
    %2338 = vmatprep.subr.bf16.mxu0 0
    %2339 = vmatpush1.bf16.msra.mxu0 0
    %2340 = vmatprep.subr.bf16.mxu0 0
    %2341 = vmatpush1.bf16.msra.mxu0 0
    %2342 = vmatprep.subr.bf16.mxu0 0
    %2343 = vmatpush1.bf16.msra.mxu0 0
    %2344 = vmatprep.subr.bf16.mxu0 0
    %2345 = vmatpush1.bf16.msra.mxu0 0
    %2346 = vmatprep.subr.bf16.mxu0 0
    %2347 = vmatpush1.bf16.msra.mxu0 0
    %2348 = vmatprep.subr.bf16.mxu0 0
    %2349 = vmatpush1.bf16.msra.mxu0 0
    %2350 = vmatprep.subr.bf16.mxu0 0
    %2351 = vmatpush1.bf16.msra.mxu0 0
    %2352 = vmatprep.subr.bf16.mxu0 0
    %2353 = vmatpush1.bf16.msra.mxu0 0
    %2354 = vmatprep.mubr.bf16.mxu0 0
    %2355 = vmatmul.mubr.bf16.gmra.mrb[0].mxu0 %v990
    %v2356 = vpop.f32.mrb[0].mxu0
    %v2357 = vadd.f32 %v2275, %v2356
    %v2358 = vpop.f32.mrb[0].mxu0
    %v2359 = vadd.f32 %v2277, %v2358
    %v2360 = vpop.f32.mrb[0].mxu0
    %v2361 = vpop.f32.mrb[0].mxu0
    %2362 = vdwg.mxu0
    %2363 = vmatprep.subr.bf16.mxu0 %v1504
    %2364 = vmatpush1.bf16.msra.mxu0 %v1503
    %2365 = vmatprep.subr.bf16.mxu0 %v1508
    %2366 = vmatpush1.bf16.msra.mxu0 %v1507
    %2367 = vmatprep.subr.bf16.mxu0 0
    %2368 = vmatpush1.bf16.msra.mxu0 0
    %2369 = vmatprep.subr.bf16.mxu0 0
    %2370 = vmatpush1.bf16.msra.mxu0 0
    %2371 = vmatprep.subr.bf16.mxu0 0
    %2372 = vmatpush1.bf16.msra.mxu0 0
    %2373 = vmatprep.subr.bf16.mxu0 0
    %2374 = vmatpush1.bf16.msra.mxu0 0
    %2375 = vmatprep.subr.bf16.mxu0 0
    %2376 = vmatpush1.bf16.msra.mxu0 0
    %2377 = vmatprep.subr.bf16.mxu0 0
    %2378 = vmatpush1.bf16.msra.mxu0 0
    %2379 = vmatprep.subr.bf16.mxu0 0
    %2380 = vmatpush1.bf16.msra.mxu0 0
    %2381 = vmatprep.subr.bf16.mxu0 0
    %2382 = vmatpush1.bf16.msra.mxu0 0
    %2383 = vmatprep.subr.bf16.mxu0 0
    %2384 = vmatpush1.bf16.msra.mxu0 0
    %2385 = vmatprep.subr.bf16.mxu0 0
    %2386 = vmatpush1.bf16.msra.mxu0 0
    %2387 = vmatprep.subr.bf16.mxu0 0
    %2388 = vmatpush1.bf16.msra.mxu0 0
    %2389 = vmatprep.subr.bf16.mxu0 0
    %2390 = vmatpush1.bf16.msra.mxu0 0
    %2391 = vmatprep.subr.bf16.mxu0 0
    %2392 = vmatpush1.bf16.msra.mxu0 0
    %2393 = vmatprep.subr.bf16.mxu0 0
    %2394 = vmatpush1.bf16.msra.mxu0 0
    %2395 = vmatprep.mubr.bf16.mxu0 0
    %2396 = vmatmul.mubr.bf16.gmra.mrb[0].mxu0 %v990
    %v2397 = vpop.f32.mrb[0].mxu0
    %v2398 = vadd.f32 %v2316, %v2397
    %v2399 = vpop.f32.mrb[0].mxu0
    %v2400 = vadd.f32 %v2318, %v2399
    %v2401 = vpop.f32.mrb[0].mxu0
    %v2402 = vpop.f32.mrb[0].mxu0
    %2403 = vdwg.mxu0
    %v2404 = vadd.f32 %v2357, %v1603
    %v2405 = vadd.f32 %v2359, %v1607
    %v2406 = vadd.f32 %v2398, %v1611
    %v2407 = vadd.f32 %v2400, %v1615
    %v2408 = vxor.u32 %v2404, 2147483648
    %v2409 = vmul.f32 %v2408, 1.442695
    %v2410 = vpow.pop %v2409
    %v2411 = vadd.f32 %v2410, 1.0
    %v2412 = vrcp.pop %v2411
    %v2413 = vmul.f32 1.0, %v2412
    %v2414 = vxor.u32 %v2405, 2147483648
    %v2415 = vmul.f32 %v2414, 1.442695
    %v2416 = vpow.pop %v2415
    %v2417 = vadd.f32 %v2416, 1.0
    %v2418 = vrcp.pop %v2417
    %v2419 = vmul.f32 1.0, %v2418
    %v2420 = vtanh.pop %v2406
    %v2421 = vxor.u32 %v2407, 2147483648
    %v2422 = vmul.f32 %v2421, 1.442695
    %v2423 = vpow.pop %v2422
    %v2424 = vadd.f32 %v2423, 1.0
    %v2425 = vrcp.pop %v2424
    %v2426 = vmul.f32 1.0, %v2425
    %v2427 = vmul.f32 %v2419, %v2233
    %v2428 = vmul.f32 %v2413, %v2420
    %v2429 = vadd.f32 %v2427, %v2428
    %v2430 = vtanh.pop %v2429
    %v2431 = vmul.f32 %v2426, %v2430
    %v2432 = vpack.c.bf16 %v2431, %v2431
    %v2434 = vsel %vm164, %v2432, 0
    %2436 = vmatprep.subr.bf16.mxu0 %v1380
    %2437 = vmatpush1.bf16.msra.mxu0 %v1379
    %2438 = vmatprep.subr.bf16.mxu0 %v1384
    %2439 = vmatpush1.bf16.msra.mxu0 %v1383
    %2440 = vmatprep.subr.bf16.mxu0 0
    %2441 = vmatpush1.bf16.msra.mxu0 0
    %2442 = vmatprep.subr.bf16.mxu0 0
    %2443 = vmatpush1.bf16.msra.mxu0 0
    %2444 = vmatprep.subr.bf16.mxu0 0
    %2445 = vmatpush1.bf16.msra.mxu0 0
    %2446 = vmatprep.subr.bf16.mxu0 0
    %2447 = vmatpush1.bf16.msra.mxu0 0
    %2448 = vmatprep.subr.bf16.mxu0 0
    %2449 = vmatpush1.bf16.msra.mxu0 0
    %2450 = vmatprep.subr.bf16.mxu0 0
    %2451 = vmatpush1.bf16.msra.mxu0 0
    %2452 = vmatprep.subr.bf16.mxu0 0
    %2453 = vmatpush1.bf16.msra.mxu0 0
    %2454 = vmatprep.subr.bf16.mxu0 0
    %2455 = vmatpush1.bf16.msra.mxu0 0
    %2456 = vmatprep.subr.bf16.mxu0 0
    %2457 = vmatpush1.bf16.msra.mxu0 0
    %2458 = vmatprep.subr.bf16.mxu0 0
    %2459 = vmatpush1.bf16.msra.mxu0 0
    %2460 = vmatprep.subr.bf16.mxu0 0
    %2461 = vmatpush1.bf16.msra.mxu0 0
    %2462 = vmatprep.subr.bf16.mxu0 0
    %2463 = vmatpush1.bf16.msra.mxu0 0
    %2464 = vmatprep.subr.bf16.mxu0 0
    %2465 = vmatpush1.bf16.msra.mxu0 0
    %2466 = vmatprep.subr.bf16.mxu0 0
    %2467 = vmatpush1.bf16.msra.mxu0 0
    %2468 = vmatprep.mubr.bf16.mxu0 0
    %2469 = vmatmul.mubr.bf16.gmra.mrb[0].mxu0 %v2434
    %v2470 = vpop.f32.mrb[0].mxu0
    %v2471 = vadd.f32 0.0, %v2470
    %v2472 = vpop.f32.mrb[0].mxu0
    %v2473 = vadd.f32 0.0, %v2472
    %v2474 = vpop.f32.mrb[0].mxu0
    %v2475 = vpop.f32.mrb[0].mxu0
    %2476 = vdwg.mxu0
    %2477 = vmatprep.subr.bf16.mxu0 %v1382
    %2478 = vmatpush1.bf16.msra.mxu0 %v1381
    %2479 = vmatprep.subr.bf16.mxu0 %v1386
    %2480 = vmatpush1.bf16.msra.mxu0 %v1385
    %2481 = vmatprep.subr.bf16.mxu0 0
    %2482 = vmatpush1.bf16.msra.mxu0 0
    %2483 = vmatprep.subr.bf16.mxu0 0
    %2484 = vmatpush1.bf16.msra.mxu0 0
    %2485 = vmatprep.subr.bf16.mxu0 0
    %2486 = vmatpush1.bf16.msra.mxu0 0
    %2487 = vmatprep.subr.bf16.mxu0 0
    %2488 = vmatpush1.bf16.msra.mxu0 0
    %2489 = vmatprep.subr.bf16.mxu0 0
    %2490 = vmatpush1.bf16.msra.mxu0 0
    %2491 = vmatprep.subr.bf16.mxu0 0
    %2492 = vmatpush1.bf16.msra.mxu0 0
    %2493 = vmatprep.subr.bf16.mxu0 0
    %2494 = vmatpush1.bf16.msra.mxu0 0
    %2495 = vmatprep.subr.bf16.mxu0 0
    %2496 = vmatpush1.bf16.msra.mxu0 0
    %2497 = vmatprep.subr.bf16.mxu0 0
    %2498 = vmatpush1.bf16.msra.mxu0 0
    %2499 = vmatprep.subr.bf16.mxu0 0
    %2500 = vmatpush1.bf16.msra.mxu0 0
    %2501 = vmatprep.subr.bf16.mxu0 0
    %2502 = vmatpush1.bf16.msra.mxu0 0
    %2503 = vmatprep.subr.bf16.mxu0 0
    %2504 = vmatpush1.bf16.msra.mxu0 0
    %2505 = vmatprep.subr.bf16.mxu0 0
    %2506 = vmatpush1.bf16.msra.mxu0 0
    %2507 = vmatprep.subr.bf16.mxu0 0
    %2508 = vmatpush1.bf16.msra.mxu0 0
    %2509 = vmatprep.mubr.bf16.mxu0 0
    %2510 = vmatmul.mubr.bf16.gmra.mrb[0].mxu0 %v2434
    %v2511 = vpop.f32.mrb[0].mxu0
    %v2512 = vadd.f32 0.0, %v2511
    %v2513 = vpop.f32.mrb[0].mxu0
    %v2514 = vadd.f32 0.0, %v2513
    %v2515 = vpop.f32.mrb[0].mxu0
    %v2516 = vpop.f32.mrb[0].mxu0
    %2517 = vdwg.mxu0
    %2518 = vmatprep.subr.bf16.mxu0 %v1502
    %2519 = vmatpush1.bf16.msra.mxu0 %v1501
    %2520 = vmatprep.subr.bf16.mxu0 %v1506
    %2521 = vmatpush1.bf16.msra.mxu0 %v1505
    %2522 = vmatprep.subr.bf16.mxu0 0
    %2523 = vmatpush1.bf16.msra.mxu0 0
    %2524 = vmatprep.subr.bf16.mxu0 0
    %2525 = vmatpush1.bf16.msra.mxu0 0
    %2526 = vmatprep.subr.bf16.mxu0 0
    %2527 = vmatpush1.bf16.msra.mxu0 0
    %2528 = vmatprep.subr.bf16.mxu0 0
    %2529 = vmatpush1.bf16.msra.mxu0 0
    %2530 = vmatprep.subr.bf16.mxu0 0
    %2531 = vmatpush1.bf16.msra.mxu0 0
    %2532 = vmatprep.subr.bf16.mxu0 0
    %2533 = vmatpush1.bf16.msra.mxu0 0
    %2534 = vmatprep.subr.bf16.mxu0 0
    %2535 = vmatpush1.bf16.msra.mxu0 0
    %2536 = vmatprep.subr.bf16.mxu0 0
    %2537 = vmatpush1.bf16.msra.mxu0 0
    %2538 = vmatprep.subr.bf16.mxu0 0
    %2539 = vmatpush1.bf16.msra.mxu0 0
    %2540 = vmatprep.subr.bf16.mxu0 0
    %2541 = vmatpush1.bf16.msra.mxu0 0
    %2542 = vmatprep.subr.bf16.mxu0 0
    %2543 = vmatpush1.bf16.msra.mxu0 0
    %2544 = vmatprep.subr.bf16.mxu0 0
    %2545 = vmatpush1.bf16.msra.mxu0 0
    %2546 = vmatprep.subr.bf16.mxu0 0
    %2547 = vmatpush1.bf16.msra.mxu0 0
    %2548 = vmatprep.subr.bf16.mxu0 0
    %2549 = vmatpush1.bf16.msra.mxu0 0
    %2550 = vmatprep.mubr.bf16.mxu0 0
    %2551 = vmatmul.mubr.bf16.gmra.mrb[0].mxu0 %v1108
    %v2552 = vpop.f32.mrb[0].mxu0
    %v2553 = vadd.f32 %v2471, %v2552
    %v2554 = vpop.f32.mrb[0].mxu0
    %v2555 = vadd.f32 %v2473, %v2554
    %v2556 = vpop.f32.mrb[0].mxu0
    %v2557 = vpop.f32.mrb[0].mxu0
    %2558 = vdwg.mxu0
    %2559 = vmatprep.subr.bf16.mxu0 %v1504
    %2560 = vmatpush1.bf16.msra.mxu0 %v1503
    %2561 = vmatprep.subr.bf16.mxu0 %v1508
    %2562 = vmatpush1.bf16.msra.mxu0 %v1507
    %2563 = vmatprep.subr.bf16.mxu0 0
    %2564 = vmatpush1.bf16.msra.mxu0 0
    %2565 = vmatprep.subr.bf16.mxu0 0
    %2566 = vmatpush1.bf16.msra.mxu0 0
    %2567 = vmatprep.subr.bf16.mxu0 0
    %2568 = vmatpush1.bf16.msra.mxu0 0
    %2569 = vmatprep.subr.bf16.mxu0 0
    %2570 = vmatpush1.bf16.msra.mxu0 0
    %2571 = vmatprep.subr.bf16.mxu0 0
    %2572 = vmatpush1.bf16.msra.mxu0 0
    %2573 = vmatprep.subr.bf16.mxu0 0
    %2574 = vmatpush1.bf16.msra.mxu0 0
    %2575 = vmatprep.subr.bf16.mxu0 0
    %2576 = vmatpush1.bf16.msra.mxu0 0
    %2577 = vmatprep.subr.bf16.mxu0 0
    %2578 = vmatpush1.bf16.msra.mxu0 0
    %2579 = vmatprep.subr.bf16.mxu0 0
    %2580 = vmatpush1.bf16.msra.mxu0 0
    %2581 = vmatprep.subr.bf16.mxu0 0
    %2582 = vmatpush1.bf16.msra.mxu0 0
    %2583 = vmatprep.subr.bf16.mxu0 0
    %2584 = vmatpush1.bf16.msra.mxu0 0
    %2585 = vmatprep.subr.bf16.mxu0 0
    %2586 = vmatpush1.bf16.msra.mxu0 0
    %2587 = vmatprep.subr.bf16.mxu0 0
    %2588 = vmatpush1.bf16.msra.mxu0 0
    %2589 = vmatprep.subr.bf16.mxu0 0
    %2590 = vmatpush1.bf16.msra.mxu0 0
    %2591 = vmatprep.mubr.bf16.mxu0 0
    %2592 = vmatmul.mubr.bf16.gmra.mrb[0].mxu0 %v1108
    %v2593 = vpop.f32.mrb[0].mxu0
    %v2594 = vadd.f32 %v2512, %v2593
    %v2595 = vpop.f32.mrb[0].mxu0
    %v2596 = vadd.f32 %v2514, %v2595
    %v2597 = vpop.f32.mrb[0].mxu0
    %v2598 = vpop.f32.mrb[0].mxu0
    %2599 = vdwg.mxu0
    %v2600 = vadd.f32 %v2553, %v1603
    %v2601 = vadd.f32 %v2555, %v1607
    %v2602 = vadd.f32 %v2594, %v1611
    %v2603 = vadd.f32 %v2596, %v1615
    %v2604 = vxor.u32 %v2600, 2147483648
    %v2605 = vmul.f32 %v2604, 1.442695
    %v2606 = vpow.pop %v2605
    %v2607 = vadd.f32 %v2606, 1.0
    %v2608 = vrcp.pop %v2607
    %v2609 = vmul.f32 1.0, %v2608
    %v2610 = vxor.u32 %v2601, 2147483648
    %v2611 = vmul.f32 %v2610, 1.442695
    %v2612 = vpow.pop %v2611
    %v2613 = vadd.f32 %v2612, 1.0
    %v2614 = vrcp.pop %v2613
    %v2615 = vmul.f32 1.0, %v2614
    %v2616 = vtanh.pop %v2602
    %v2617 = vxor.u32 %v2603, 2147483648
    %v2618 = vmul.f32 %v2617, 1.442695
    %v2619 = vpow.pop %v2618
    %v2620 = vadd.f32 %v2619, 1.0
    %v2621 = vrcp.pop %v2620
    %v2622 = vmul.f32 1.0, %v2621
    %v2623 = vmul.f32 %v2615, %v2429
    %v2624 = vmul.f32 %v2609, %v2616
    %v2625 = vadd.f32 %v2623, %v2624
    %v2626 = vtanh.pop %v2625
    %v2627 = vmul.f32 %v2622, %v2626
    %v2628 = vpack.c.bf16 %v2627, %v2627
    %v2630 = vsel %vm164, %v2628, 0
    %2632 = vmatprep.subr.bf16.mxu0 %v1380
    %2633 = vmatpush1.bf16.msra.mxu0 %v1379
    %2634 = vmatprep.subr.bf16.mxu0 %v1384
    %2635 = vmatpush1.bf16.msra.mxu0 %v1383
    %2636 = vmatprep.subr.bf16.mxu0 0
    %2637 = vmatpush1.bf16.msra.mxu0 0
    %2638 = vmatprep.subr.bf16.mxu0 0
    %2639 = vmatpush1.bf16.msra.mxu0 0
    %2640 = vmatprep.subr.bf16.mxu0 0
    %2641 = vmatpush1.bf16.msra.mxu0 0
    %2642 = vmatprep.subr.bf16.mxu0 0
    %2643 = vmatpush1.bf16.msra.mxu0 0
    %2644 = vmatprep.subr.bf16.mxu0 0
    %2645 = vmatpush1.bf16.msra.mxu0 0
    %2646 = vmatprep.subr.bf16.mxu0 0
    %2647 = vmatpush1.bf16.msra.mxu0 0
    %2648 = vmatprep.subr.bf16.mxu0 0
    %2649 = vmatpush1.bf16.msra.mxu0 0
    %2650 = vmatprep.subr.bf16.mxu0 0
    %2651 = vmatpush1.bf16.msra.mxu0 0
    %2652 = vmatprep.subr.bf16.mxu0 0
    %2653 = vmatpush1.bf16.msra.mxu0 0
    %2654 = vmatprep.subr.bf16.mxu0 0
    %2655 = vmatpush1.bf16.msra.mxu0 0
    %2656 = vmatprep.subr.bf16.mxu0 0
    %2657 = vmatpush1.bf16.msra.mxu0 0
    %2658 = vmatprep.subr.bf16.mxu0 0
    %2659 = vmatpush1.bf16.msra.mxu0 0
    %2660 = vmatprep.subr.bf16.mxu0 0
    %2661 = vmatpush1.bf16.msra.mxu0 0
    %2662 = vmatprep.subr.bf16.mxu0 0
    %2663 = vmatpush1.bf16.msra.mxu0 0
    %2664 = vmatprep.mubr.bf16.mxu0 0
    %2665 = vmatmul.mubr.bf16.gmra.mrb[0].mxu0 %v2630
    %v2666 = vpop.f32.mrb[0].mxu0
    %v2667 = vadd.f32 0.0, %v2666
    %v2668 = vpop.f32.mrb[0].mxu0
    %v2669 = vadd.f32 0.0, %v2668
    %v2670 = vpop.f32.mrb[0].mxu0
    %v2671 = vpop.f32.mrb[0].mxu0
    %2672 = vdwg.mxu0
    %2673 = vmatprep.subr.bf16.mxu0 %v1382
    %2674 = vmatpush1.bf16.msra.mxu0 %v1381
    %2675 = vmatprep.subr.bf16.mxu0 %v1386
    %2676 = vmatpush1.bf16.msra.mxu0 %v1385
    %2677 = vmatprep.subr.bf16.mxu0 0
    %2678 = vmatpush1.bf16.msra.mxu0 0
    %2679 = vmatprep.subr.bf16.mxu0 0
    %2680 = vmatpush1.bf16.msra.mxu0 0
    %2681 = vmatprep.subr.bf16.mxu0 0
    %2682 = vmatpush1.bf16.msra.mxu0 0
    %2683 = vmatprep.subr.bf16.mxu0 0
    %2684 = vmatpush1.bf16.msra.mxu0 0
    %2685 = vmatprep.subr.bf16.mxu0 0
    %2686 = vmatpush1.bf16.msra.mxu0 0
    %2687 = vmatprep.subr.bf16.mxu0 0
    %2688 = vmatpush1.bf16.msra.mxu0 0
    %2689 = vmatprep.subr.bf16.mxu0 0
    %2690 = vmatpush1.bf16.msra.mxu0 0
    %2691 = vmatprep.subr.bf16.mxu0 0
    %2692 = vmatpush1.bf16.msra.mxu0 0
    %2693 = vmatprep.subr.bf16.mxu0 0
    %2694 = vmatpush1.bf16.msra.mxu0 0
    %2695 = vmatprep.subr.bf16.mxu0 0
    %2696 = vmatpush1.bf16.msra.mxu0 0
    %2697 = vmatprep.subr.bf16.mxu0 0
    %2698 = vmatpush1.bf16.msra.mxu0 0
    %2699 = vmatprep.subr.bf16.mxu0 0
    %2700 = vmatpush1.bf16.msra.mxu0 0
    %2701 = vmatprep.subr.bf16.mxu0 0
    %2702 = vmatpush1.bf16.msra.mxu0 0
    %2703 = vmatprep.subr.bf16.mxu0 0
    %2704 = vmatpush1.bf16.msra.mxu0 0
    %2705 = vmatprep.mubr.bf16.mxu0 0
    %2706 = vmatmul.mubr.bf16.gmra.mrb[0].mxu0 %v2630
    %v2707 = vpop.f32.mrb[0].mxu0
    %v2708 = vadd.f32 0.0, %v2707
    %v2709 = vpop.f32.mrb[0].mxu0
    %v2710 = vadd.f32 0.0, %v2709
    %v2711 = vpop.f32.mrb[0].mxu0
    %v2712 = vpop.f32.mrb[0].mxu0
    %2713 = vdwg.mxu0
    %2714 = vmatprep.subr.bf16.mxu0 %v1502
    %2715 = vmatpush1.bf16.msra.mxu0 %v1501
    %2716 = vmatprep.subr.bf16.mxu0 %v1506
    %2717 = vmatpush1.bf16.msra.mxu0 %v1505
    %2718 = vmatprep.subr.bf16.mxu0 0
    %2719 = vmatpush1.bf16.msra.mxu0 0
    %2720 = vmatprep.subr.bf16.mxu0 0
    %2721 = vmatpush1.bf16.msra.mxu0 0
    %2722 = vmatprep.subr.bf16.mxu0 0
    %2723 = vmatpush1.bf16.msra.mxu0 0
    %2724 = vmatprep.subr.bf16.mxu0 0
    %2725 = vmatpush1.bf16.msra.mxu0 0
    %2726 = vmatprep.subr.bf16.mxu0 0
    %2727 = vmatpush1.bf16.msra.mxu0 0
    %2728 = vmatprep.subr.bf16.mxu0 0
    %2729 = vmatpush1.bf16.msra.mxu0 0
    %2730 = vmatprep.subr.bf16.mxu0 0
    %2731 = vmatpush1.bf16.msra.mxu0 0
    %2732 = vmatprep.subr.bf16.mxu0 0
    %2733 = vmatpush1.bf16.msra.mxu0 0
    %2734 = vmatprep.subr.bf16.mxu0 0
    %2735 = vmatpush1.bf16.msra.mxu0 0
    %2736 = vmatprep.subr.bf16.mxu0 0
    %2737 = vmatpush1.bf16.msra.mxu0 0
    %2738 = vmatprep.subr.bf16.mxu0 0
    %2739 = vmatpush1.bf16.msra.mxu0 0
    %2740 = vmatprep.subr.bf16.mxu0 0
    %2741 = vmatpush1.bf16.msra.mxu0 0
    %2742 = vmatprep.subr.bf16.mxu0 0
    %2743 = vmatpush1.bf16.msra.mxu0 0
    %2744 = vmatprep.subr.bf16.mxu0 0
    %2745 = vmatpush1.bf16.msra.mxu0 0
    %2746 = vmatprep.mubr.bf16.mxu0 0
    %2747 = vmatmul.mubr.bf16.gmra.mrb[0].mxu0 %v1226
    %v2748 = vpop.f32.mrb[0].mxu0
    %v2749 = vadd.f32 %v2667, %v2748
    %v2750 = vpop.f32.mrb[0].mxu0
    %v2751 = vadd.f32 %v2669, %v2750
    %v2752 = vpop.f32.mrb[0].mxu0
    %v2753 = vpop.f32.mrb[0].mxu0
    %2754 = vdwg.mxu0
    %2755 = vmatprep.subr.bf16.mxu0 %v1504
    %2756 = vmatpush1.bf16.msra.mxu0 %v1503
    %2757 = vmatprep.subr.bf16.mxu0 %v1508
    %2758 = vmatpush1.bf16.msra.mxu0 %v1507
    %2759 = vmatprep.subr.bf16.mxu0 0
    %2760 = vmatpush1.bf16.msra.mxu0 0
    %2761 = vmatprep.subr.bf16.mxu0 0
    %2762 = vmatpush1.bf16.msra.mxu0 0
    %2763 = vmatprep.subr.bf16.mxu0 0
    %2764 = vmatpush1.bf16.msra.mxu0 0
    %2765 = vmatprep.subr.bf16.mxu0 0
    %2766 = vmatpush1.bf16.msra.mxu0 0
    %2767 = vmatprep.subr.bf16.mxu0 0
    %2768 = vmatpush1.bf16.msra.mxu0 0
    %2769 = vmatprep.subr.bf16.mxu0 0
    %2770 = vmatpush1.bf16.msra.mxu0 0
    %2771 = vmatprep.subr.bf16.mxu0 0
    %2772 = vmatpush1.bf16.msra.mxu0 0
    %2773 = vmatprep.subr.bf16.mxu0 0
    %2774 = vmatpush1.bf16.msra.mxu0 0
    %2775 = vmatprep.subr.bf16.mxu0 0
    %2776 = vmatpush1.bf16.msra.mxu0 0
    %2777 = vmatprep.subr.bf16.mxu0 0
    %2778 = vmatpush1.bf16.msra.mxu0 0
    %2779 = vmatprep.subr.bf16.mxu0 0
    %2780 = vmatpush1.bf16.msra.mxu0 0
    %2781 = vmatprep.subr.bf16.mxu0 0
    %2782 = vmatpush1.bf16.msra.mxu0 0
    %2783 = vmatprep.subr.bf16.mxu0 0
    %2784 = vmatpush1.bf16.msra.mxu0 0
    %2785 = vmatprep.subr.bf16.mxu0 0
    %2786 = vmatpush1.bf16.msra.mxu0 0
    %2787 = vmatprep.mubr.bf16.mxu0 0
    %2788 = vmatmul.mubr.bf16.gmra.mrb[0].mxu0 %v1226
    %v2789 = vpop.f32.mrb[0].mxu0
    %v2790 = vadd.f32 %v2708, %v2789
    %v2791 = vpop.f32.mrb[0].mxu0
    %v2792 = vadd.f32 %v2710, %v2791
    %v2793 = vpop.f32.mrb[0].mxu0
    %v2794 = vpop.f32.mrb[0].mxu0
    %2795 = vdwg.mxu0
    %v2796 = vadd.f32 %v2749, %v1603
    %v2797 = vadd.f32 %v2751, %v1607
    %v2798 = vadd.f32 %v2790, %v1611
    %v2799 = vadd.f32 %v2792, %v1615
    %v2800 = vxor.u32 %v2796, 2147483648
    %v2801 = vmul.f32 %v2800, 1.442695
    %v2802 = vpow.pop %v2801
    %v2803 = vadd.f32 %v2802, 1.0
    %v2804 = vrcp.pop %v2803
    %v2805 = vmul.f32 1.0, %v2804
    %v2806 = vxor.u32 %v2797, 2147483648
    %v2807 = vmul.f32 %v2806, 1.442695
    %v2808 = vpow.pop %v2807
    %v2809 = vadd.f32 %v2808, 1.0
    %v2810 = vrcp.pop %v2809
    %v2811 = vmul.f32 1.0, %v2810
    %v2812 = vtanh.pop %v2798
    %v2813 = vxor.u32 %v2799, 2147483648
    %v2814 = vmul.f32 %v2813, 1.442695
    %v2815 = vpow.pop %v2814
    %v2816 = vadd.f32 %v2815, 1.0
    %v2817 = vrcp.pop %v2816
    %v2818 = vmul.f32 1.0, %v2817
    %v2819 = vmul.f32 %v2811, %v2625
    %v2820 = vmul.f32 %v2805, %v2812
    %v2821 = vadd.f32 %v2819, %v2820
    %v2822 = vtanh.pop %v2821
    %v2823 = vmul.f32 %v2818, %v2822
    %v2824 = vpack.c.bf16 %v1337, %v1337
    %v2825 = vpack.c.bf16 %v2823, %v2823
    %v2827 = vsel %vm164, %v2825, 0
    %2829 = vmatprep.subr.bf16.mxu0 %v1380
    %2830 = vmatpush1.bf16.msra.mxu0 %v1379
    %2831 = vmatprep.subr.bf16.mxu0 %v1384
    %2832 = vmatpush1.bf16.msra.mxu0 %v1383
    %2833 = vmatprep.subr.bf16.mxu0 0
    %2834 = vmatpush1.bf16.msra.mxu0 0
    %2835 = vmatprep.subr.bf16.mxu0 0
    %2836 = vmatpush1.bf16.msra.mxu0 0
    %2837 = vmatprep.subr.bf16.mxu0 0
    %2838 = vmatpush1.bf16.msra.mxu0 0
    %2839 = vmatprep.subr.bf16.mxu0 0
    %2840 = vmatpush1.bf16.msra.mxu0 0
    %2841 = vmatprep.subr.bf16.mxu0 0
    %2842 = vmatpush1.bf16.msra.mxu0 0
    %2843 = vmatprep.subr.bf16.mxu0 0
    %2844 = vmatpush1.bf16.msra.mxu0 0
    %2845 = vmatprep.subr.bf16.mxu0 0
    %2846 = vmatpush1.bf16.msra.mxu0 0
    %2847 = vmatprep.subr.bf16.mxu0 0
    %2848 = vmatpush1.bf16.msra.mxu0 0
    %2849 = vmatprep.subr.bf16.mxu0 0
    %2850 = vmatpush1.bf16.msra.mxu0 0
    %2851 = vmatprep.subr.bf16.mxu0 0
    %2852 = vmatpush1.bf16.msra.mxu0 0
    %2853 = vmatprep.subr.bf16.mxu0 0
    %2854 = vmatpush1.bf16.msra.mxu0 0
    %2855 = vmatprep.subr.bf16.mxu0 0
    %2856 = vmatpush1.bf16.msra.mxu0 0
    %2857 = vmatprep.subr.bf16.mxu0 0
    %2858 = vmatpush1.bf16.msra.mxu0 0
    %2859 = vmatprep.subr.bf16.mxu0 0
    %2860 = vmatpush1.bf16.msra.mxu0 0
    %2861 = vmatprep.mubr.bf16.mxu0 0
    %2862 = vmatmul.mubr.bf16.gmra.mrb[0].mxu0 %v2827
    %v2863 = vpop.f32.mrb[0].mxu0
    %v2864 = vadd.f32 0.0, %v2863
    %v2865 = vpop.f32.mrb[0].mxu0
    %v2866 = vadd.f32 0.0, %v2865
    %v2867 = vpop.f32.mrb[0].mxu0
    %v2868 = vpop.f32.mrb[0].mxu0
    %2869 = vdwg.mxu0
    %2870 = vmatprep.subr.bf16.mxu0 %v1382
    %2871 = vmatpush1.bf16.msra.mxu0 %v1381
    %2872 = vmatprep.subr.bf16.mxu0 %v1386
    %2873 = vmatpush1.bf16.msra.mxu0 %v1385
    %2874 = vmatprep.subr.bf16.mxu0 0
    %2875 = vmatpush1.bf16.msra.mxu0 0
    %2876 = vmatprep.subr.bf16.mxu0 0
    %2877 = vmatpush1.bf16.msra.mxu0 0
    %2878 = vmatprep.subr.bf16.mxu0 0
    %2879 = vmatpush1.bf16.msra.mxu0 0
    %2880 = vmatprep.subr.bf16.mxu0 0
    %2881 = vmatpush1.bf16.msra.mxu0 0
    %2882 = vmatprep.subr.bf16.mxu0 0
    %2883 = vmatpush1.bf16.msra.mxu0 0
    %2884 = vmatprep.subr.bf16.mxu0 0
    %2885 = vmatpush1.bf16.msra.mxu0 0
    %2886 = vmatprep.subr.bf16.mxu0 0
    %2887 = vmatpush1.bf16.msra.mxu0 0
    %2888 = vmatprep.subr.bf16.mxu0 0
    %2889 = vmatpush1.bf16.msra.mxu0 0
    %2890 = vmatprep.subr.bf16.mxu0 0
    %2891 = vmatpush1.bf16.msra.mxu0 0
    %2892 = vmatprep.subr.bf16.mxu0 0
    %2893 = vmatpush1.bf16.msra.mxu0 0
    %2894 = vmatprep.subr.bf16.mxu0 0
    %2895 = vmatpush1.bf16.msra.mxu0 0
    %2896 = vmatprep.subr.bf16.mxu0 0
    %2897 = vmatpush1.bf16.msra.mxu0 0
    %2898 = vmatprep.subr.bf16.mxu0 0
    %2899 = vmatpush1.bf16.msra.mxu0 0
    %2900 = vmatprep.subr.bf16.mxu0 0
    %2901 = vmatpush1.bf16.msra.mxu0 0
    %2902 = vmatprep.mubr.bf16.mxu0 0
    %2903 = vmatmul.mubr.bf16.gmra.mrb[0].mxu0 %v2827
    %v2904 = vpop.f32.mrb[0].mxu0
    %v2905 = vadd.f32 0.0, %v2904
    %v2906 = vpop.f32.mrb[0].mxu0
    %v2907 = vadd.f32 0.0, %v2906
    %v2908 = vpop.f32.mrb[0].mxu0
    %v2909 = vpop.f32.mrb[0].mxu0
    %2910 = vdwg.mxu0
    %v2912 = vsel %vm164, %v2824, 0
    %2914 = vmatprep.subr.bf16.mxu0 %v1502
    %2915 = vmatpush1.bf16.msra.mxu0 %v1501
    %2916 = vmatprep.subr.bf16.mxu0 %v1506
    %2917 = vmatpush1.bf16.msra.mxu0 %v1505
    %2918 = vmatprep.subr.bf16.mxu0 0
    %2919 = vmatpush1.bf16.msra.mxu0 0
    %2920 = vmatprep.subr.bf16.mxu0 0
    %2921 = vmatpush1.bf16.msra.mxu0 0
    %2922 = vmatprep.subr.bf16.mxu0 0
    %2923 = vmatpush1.bf16.msra.mxu0 0
    %2924 = vmatprep.subr.bf16.mxu0 0
    %2925 = vmatpush1.bf16.msra.mxu0 0
    %2926 = vmatprep.subr.bf16.mxu0 0
    %2927 = vmatpush1.bf16.msra.mxu0 0
    %2928 = vmatprep.subr.bf16.mxu0 0
    %2929 = vmatpush1.bf16.msra.mxu0 0
    %2930 = vmatprep.subr.bf16.mxu0 0
    %2931 = vmatpush1.bf16.msra.mxu0 0
    %2932 = vmatprep.subr.bf16.mxu0 0
    %2933 = vmatpush1.bf16.msra.mxu0 0
    %2934 = vmatprep.subr.bf16.mxu0 0
    %2935 = vmatpush1.bf16.msra.mxu0 0
    %2936 = vmatprep.subr.bf16.mxu0 0
    %2937 = vmatpush1.bf16.msra.mxu0 0
    %2938 = vmatprep.subr.bf16.mxu0 0
    %2939 = vmatpush1.bf16.msra.mxu0 0
    %2940 = vmatprep.subr.bf16.mxu0 0
    %2941 = vmatpush1.bf16.msra.mxu0 0
    %2942 = vmatprep.subr.bf16.mxu0 0
    %2943 = vmatpush1.bf16.msra.mxu0 0
    %2944 = vmatprep.subr.bf16.mxu0 0
    %2945 = vmatpush1.bf16.msra.mxu0 0
    %2946 = vmatprep.mubr.bf16.mxu0 0
    %2947 = vmatmul.mubr.bf16.gmra.mrb[0].mxu0 %v2912
    %v2948 = vpop.f32.mrb[0].mxu0
    %v2949 = vadd.f32 %v2864, %v2948
    %v2950 = vpop.f32.mrb[0].mxu0
    %v2951 = vadd.f32 %v2866, %v2950
    %v2952 = vpop.f32.mrb[0].mxu0
    %v2953 = vpop.f32.mrb[0].mxu0
    %2954 = vdwg.mxu0
    %2955 = vmatprep.subr.bf16.mxu0 %v1504
    %2956 = vmatpush1.bf16.msra.mxu0 %v1503
    %2957 = vmatprep.subr.bf16.mxu0 %v1508
    %2958 = vmatpush1.bf16.msra.mxu0 %v1507
    %2959 = vmatprep.subr.bf16.mxu0 0
    %2960 = vmatpush1.bf16.msra.mxu0 0
    %2961 = vmatprep.subr.bf16.mxu0 0
    %2962 = vmatpush1.bf16.msra.mxu0 0
    %2963 = vmatprep.subr.bf16.mxu0 0
    %2964 = vmatpush1.bf16.msra.mxu0 0
    %2965 = vmatprep.subr.bf16.mxu0 0
    %2966 = vmatpush1.bf16.msra.mxu0 0
    %2967 = vmatprep.subr.bf16.mxu0 0
    %2968 = vmatpush1.bf16.msra.mxu0 0
    %2969 = vmatprep.subr.bf16.mxu0 0
    %2970 = vmatpush1.bf16.msra.mxu0 0
    %2971 = vmatprep.subr.bf16.mxu0 0
    %2972 = vmatpush1.bf16.msra.mxu0 0
    %2973 = vmatprep.subr.bf16.mxu0 0
    %2974 = vmatpush1.bf16.msra.mxu0 0
    %2975 = vmatprep.subr.bf16.mxu0 0
    %2976 = vmatpush1.bf16.msra.mxu0 0
    %2977 = vmatprep.subr.bf16.mxu0 0
    %2978 = vmatpush1.bf16.msra.mxu0 0
    %2979 = vmatprep.subr.bf16.mxu0 0
    %2980 = vmatpush1.bf16.msra.mxu0 0
    %2981 = vmatprep.subr.bf16.mxu0 0
    %2982 = vmatpush1.bf16.msra.mxu0 0
    %2983 = vmatprep.subr.bf16.mxu0 0
    %2984 = vmatpush1.bf16.msra.mxu0 0
    %2985 = vmatprep.subr.bf16.mxu0 0
    %2986 = vmatpush1.bf16.msra.mxu0 0
    %2987 = vmatprep.mubr.bf16.mxu0 0
    %2988 = vmatmul.mubr.bf16.gmra.mrb[0].mxu0 %v2912
    %v2989 = vpop.f32.mrb[0].mxu0
    %v2990 = vadd.f32 %v2905, %v2989
    %v2991 = vpop.f32.mrb[0].mxu0
    %v2992 = vadd.f32 %v2907, %v2991
    %v2993 = vpop.f32.mrb[0].mxu0
    %v2994 = vpop.f32.mrb[0].mxu0
    %2995 = vdwg.mxu0
    %v2996 = vadd.f32 %v2949, %v1603
    %v2997 = vadd.f32 %v2951, %v1607
    %v2998 = vadd.f32 %v2990, %v1611
    %v2999 = vadd.f32 %v2992, %v1615
    %v3000 = vxor.u32 %v2996, 2147483648
    %v3001 = vmul.f32 %v3000, 1.442695
    %v3002 = vpow.pop %v3001
    %v3003 = vadd.f32 %v3002, 1.0
    %v3004 = vrcp.pop %v3003
    %v3005 = vmul.f32 1.0, %v3004
    %v3006 = vxor.u32 %v2997, 2147483648
    %v3007 = vmul.f32 %v3006, 1.442695
    %v3008 = vpow.pop %v3007
    %v3009 = vadd.f32 %v3008, 1.0
    %v3010 = vrcp.pop %v3009
    %v3011 = vmul.f32 1.0, %v3010
    %v3012 = vtanh.pop %v2998
    %v3013 = vxor.u32 %v2999, 2147483648
    %v3014 = vmul.f32 %v3013, 1.442695
    %v3015 = vpow.pop %v3014
    %v3016 = vadd.f32 %v3015, 1.0
    %v3017 = vrcp.pop %v3016
    %v3018 = vmul.f32 1.0, %v3017
    %v3019 = vmul.f32 %v3011, %v2821
    %v3020 = vmul.f32 %v3005, %v3012
    %v3021 = vadd.f32 %v3019, %v3020
    %v3022 = vtanh.pop %v3021
    %v3023 = vmul.f32 %v3018, %v3022
    %v3024 = vld [vmem:[%s7] sm:$0xf]
    %v3025 = vld [vmem:[%s7 + $0x4] sm:$0xf]
    %v3026 = vld [vmem:[%s7 + $0x8] sm:$0xf]
    %v3027 = vld [vmem:[%s7 + $0xc] sm:$0xf]
    %v3028 = vld [vmem:[#allocation3] sm:$0x1]
    %v3030 = vlaneseq
    %v3031 = vshrl.u32 %v3030, 7
    %v3032 = vsub.s32 0, %v3031
    %v3033 = vrot.slane %v3028, %v3032
    %v3039 = vunpack.c.l.b16 %v3024
    %v3040 = vunpack.c.l.b16 %v3025
    %v3041 = vunpack.c.l.b16 %v3026
    %v3042 = vunpack.c.l.b16 %v3027
    %v3043 = vpack.c.b16 %v3040, %v3039
    %v3044 = vpack.c.b16 %v3042, %v3041
    %3047 = vmatprep.subr.bf16.mxu0 0
    %3048 = vmatpush1.bf16.msra.mxu0 %v3043
    %3049 = vmatprep.subr.bf16.mxu0 0
    %3050 = vmatpush1.bf16.msra.mxu0 %v3044
    %3051 = vmatprep.subr.bf16.mxu0 0
    %3052 = vmatpush1.bf16.msra.mxu0 0
    %3053 = vmatprep.subr.bf16.mxu0 0
    %3054 = vmatpush1.bf16.msra.mxu0 0
    %3055 = vmatprep.subr.bf16.mxu0 0
    %3056 = vmatpush1.bf16.msra.mxu0 0
    %3057 = vmatprep.subr.bf16.mxu0 0
    %3058 = vmatpush1.bf16.msra.mxu0 0
    %3059 = vmatprep.subr.bf16.mxu0 0
    %3060 = vmatpush1.bf16.msra.mxu0 0
    %3061 = vmatprep.subr.bf16.mxu0 0
    %3062 = vmatpush1.bf16.msra.mxu0 0
    %3063 = vmatprep.subr.bf16.mxu0 0
    %3064 = vmatpush1.bf16.msra.mxu0 0
    %3065 = vmatprep.subr.bf16.mxu0 0
    %3066 = vmatpush1.bf16.msra.mxu0 0
    %3067 = vmatprep.subr.bf16.mxu0 0
    %3068 = vmatpush1.bf16.msra.mxu0 0
    %3069 = vmatprep.subr.bf16.mxu0 0
    %3070 = vmatpush1.bf16.msra.mxu0 0
    %3071 = vmatprep.subr.bf16.mxu0 0
    %3072 = vmatpush1.bf16.msra.mxu0 0
    %3073 = vmatprep.subr.bf16.mxu0 0
    %3074 = vmatpush1.bf16.msra.mxu0 0
    %3075 = vmatprep.subr.bf16.mxu0 0
    %3076 = vmatpush1.bf16.msra.mxu0 0
    %3077 = vmatprep.subr.bf16.mxu0 0
    %3078 = vmatpush1.bf16.msra.mxu0 0
    %3079 = vmatprep.mubr.bf16.mxu0 0
    %3080 = vmatmul.mubr.bf16.gmra.mrb[0].mxu0 %v1650
    %v3081 = vpop.f32.mrb[0].mxu0
    %v3082 = vadd.f32 %v3033, %v3081
    %v3083 = vpop.f32.mrb[0].mxu0
    %v3084 = vpop.f32.mrb[0].mxu0
    %v3085 = vpop.f32.mrb[0].mxu0
    %3086 = vdwg.mxu0
    %v3087 = vmax.f32 %v3082, 0.0
    %vm3088 = vcmask 7168
    %3089 = vst.msk [vmem:[%s9] sm:$0xff] %vm3088, %v3087
    %3090 = vmatprep.subr.bf16.mxu0 0
    %3091 = vmatpush1.bf16.msra.mxu0 %v3043
    %3092 = vmatprep.subr.bf16.mxu0 0
    %3093 = vmatpush1.bf16.msra.mxu0 %v3044
    %3094 = vmatprep.subr.bf16.mxu0 0
    %3095 = vmatpush1.bf16.msra.mxu0 0
    %3096 = vmatprep.subr.bf16.mxu0 0
    %3097 = vmatpush1.bf16.msra.mxu0 0
    %3098 = vmatprep.subr.bf16.mxu0 0
    %3099 = vmatpush1.bf16.msra.mxu0 0
    %3100 = vmatprep.subr.bf16.mxu0 0
    %3101 = vmatpush1.bf16.msra.mxu0 0
    %3102 = vmatprep.subr.bf16.mxu0 0
    %3103 = vmatpush1.bf16.msra.mxu0 0
    %3104 = vmatprep.subr.bf16.mxu0 0
    %3105 = vmatpush1.bf16.msra.mxu0 0
    %3106 = vmatprep.subr.bf16.mxu0 0
    %3107 = vmatpush1.bf16.msra.mxu0 0
    %3108 = vmatprep.subr.bf16.mxu0 0
    %3109 = vmatpush1.bf16.msra.mxu0 0
    %3110 = vmatprep.subr.bf16.mxu0 0
    %3111 = vmatpush1.bf16.msra.mxu0 0
    %3112 = vmatprep.subr.bf16.mxu0 0
    %3113 = vmatpush1.bf16.msra.mxu0 0
    %3114 = vmatprep.subr.bf16.mxu0 0
    %3115 = vmatpush1.bf16.msra.mxu0 0
    %3116 = vmatprep.subr.bf16.mxu0 0
    %3117 = vmatpush1.bf16.msra.mxu0 0
    %3118 = vmatprep.subr.bf16.mxu0 0
    %3119 = vmatpush1.bf16.msra.mxu0 0
    %3120 = vmatprep.subr.bf16.mxu0 0
    %3121 = vmatpush1.bf16.msra.mxu0 0
    %3122 = vmatprep.mubr.bf16.mxu0 0
    %3123 = vmatmul.mubr.bf16.gmra.mrb[0].mxu0 %v1846
    %v3124 = vpop.f32.mrb[0].mxu0
    %v3125 = vadd.f32 %v3033, %v3124
    %v3126 = vpop.f32.mrb[0].mxu0
    %v3127 = vpop.f32.mrb[0].mxu0
    %v3128 = vpop.f32.mrb[0].mxu0
    %3129 = vdwg.mxu0
    %v3130 = vmax.f32 %v3125, 0.0
    %3131 = vst.msk [vmem:[%s9 + $0x8] sm:$0xff] %vm3088, %v3130
    %3132 = vmatprep.subr.bf16.mxu0 0
    %3133 = vmatpush1.bf16.msra.mxu0 %v3043
    %3134 = vmatprep.subr.bf16.mxu0 0
    %3135 = vmatpush1.bf16.msra.mxu0 %v3044
    %3136 = vmatprep.subr.bf16.mxu0 0
    %3137 = vmatpush1.bf16.msra.mxu0 0
    %3138 = vmatprep.subr.bf16.mxu0 0
    %3139 = vmatpush1.bf16.msra.mxu0 0
    %3140 = vmatprep.subr.bf16.mxu0 0
    %3141 = vmatpush1.bf16.msra.mxu0 0
    %3142 = vmatprep.subr.bf16.mxu0 0
    %3143 = vmatpush1.bf16.msra.mxu0 0
    %3144 = vmatprep.subr.bf16.mxu0 0
    %3145 = vmatpush1.bf16.msra.mxu0 0
    %3146 = vmatprep.subr.bf16.mxu0 0
    %3147 = vmatpush1.bf16.msra.mxu0 0
    %3148 = vmatprep.subr.bf16.mxu0 0
    %3149 = vmatpush1.bf16.msra.mxu0 0
    %3150 = vmatprep.subr.bf16.mxu0 0
    %3151 = vmatpush1.bf16.msra.mxu0 0
    %3152 = vmatprep.subr.bf16.mxu0 0
    %3153 = vmatpush1.bf16.msra.mxu0 0
    %3154 = vmatprep.subr.bf16.mxu0 0
    %3155 = vmatpush1.bf16.msra.mxu0 0
    %3156 = vmatprep.subr.bf16.mxu0 0
    %3157 = vmatpush1.bf16.msra.mxu0 0
    %3158 = vmatprep.subr.bf16.mxu0 0
    %3159 = vmatpush1.bf16.msra.mxu0 0
    %3160 = vmatprep.subr.bf16.mxu0 0
    %3161 = vmatpush1.bf16.msra.mxu0 0
    %3162 = vmatprep.subr.bf16.mxu0 0
    %3163 = vmatpush1.bf16.msra.mxu0 0
    %3164 = vmatprep.mubr.bf16.mxu0 0
    %3165 = vmatmul.mubr.bf16.gmra.mrb[0].mxu0 %v2042
    %v3166 = vpop.f32.mrb[0].mxu0
    %v3167 = vadd.f32 %v3033, %v3166
    %v3168 = vpop.f32.mrb[0].mxu0
    %v3169 = vpop.f32.mrb[0].mxu0
    %v3170 = vpop.f32.mrb[0].mxu0
    %3171 = vdwg.mxu0
    %v3172 = vmax.f32 %v3167, 0.0
    %3173 = vst.msk [vmem:[%s9 + $0x10] sm:$0xff] %vm3088, %v3172
    %3174 = vmatprep.subr.bf16.mxu0 0
    %3175 = vmatpush1.bf16.msra.mxu0 %v3043
    %3176 = vmatprep.subr.bf16.mxu0 0
    %3177 = vmatpush1.bf16.msra.mxu0 %v3044
    %3178 = vmatprep.subr.bf16.mxu0 0
    %3179 = vmatpush1.bf16.msra.mxu0 0
    %3180 = vmatprep.subr.bf16.mxu0 0
    %3181 = vmatpush1.bf16.msra.mxu0 0
    %3182 = vmatprep.subr.bf16.mxu0 0
    %3183 = vmatpush1.bf16.msra.mxu0 0
    %3184 = vmatprep.subr.bf16.mxu0 0
    %3185 = vmatpush1.bf16.msra.mxu0 0
    %3186 = vmatprep.subr.bf16.mxu0 0
    %3187 = vmatpush1.bf16.msra.mxu0 0
    %3188 = vmatprep.subr.bf16.mxu0 0
    %3189 = vmatpush1.bf16.msra.mxu0 0
    %3190 = vmatprep.subr.bf16.mxu0 0
    %3191 = vmatpush1.bf16.msra.mxu0 0
    %3192 = vmatprep.subr.bf16.mxu0 0
    %3193 = vmatpush1.bf16.msra.mxu0 0
    %3194 = vmatprep.subr.bf16.mxu0 0
    %3195 = vmatpush1.bf16.msra.mxu0 0
    %3196 = vmatprep.subr.bf16.mxu0 0
    %3197 = vmatpush1.bf16.msra.mxu0 0
    %3198 = vmatprep.subr.bf16.mxu0 0
    %3199 = vmatpush1.bf16.msra.mxu0 0
    %3200 = vmatprep.subr.bf16.mxu0 0
    %3201 = vmatpush1.bf16.msra.mxu0 0
    %3202 = vmatprep.subr.bf16.mxu0 0
    %3203 = vmatpush1.bf16.msra.mxu0 0
    %3204 = vmatprep.subr.bf16.mxu0 0
    %3205 = vmatpush1.bf16.msra.mxu0 0
    %3206 = vmatprep.mubr.bf16.mxu0 0
    %3207 = vmatmul.mubr.bf16.gmra.mrb[0].mxu0 %v2238
    %v3208 = vpop.f32.mrb[0].mxu0
    %v3209 = vadd.f32 %v3033, %v3208
    %v3210 = vpop.f32.mrb[0].mxu0
    %v3211 = vpop.f32.mrb[0].mxu0
    %v3212 = vpop.f32.mrb[0].mxu0
    %3213 = vdwg.mxu0
    %v3214 = vmax.f32 %v3209, 0.0
    %3215 = vst.msk [vmem:[%s9 + $0x18] sm:$0xff] %vm3088, %v3214
    %3216 = vmatprep.subr.bf16.mxu0 0
    %3217 = vmatpush1.bf16.msra.mxu0 %v3043
    %3218 = vmatprep.subr.bf16.mxu0 0
    %3219 = vmatpush1.bf16.msra.mxu0 %v3044
    %3220 = vmatprep.subr.bf16.mxu0 0
    %3221 = vmatpush1.bf16.msra.mxu0 0
    %3222 = vmatprep.subr.bf16.mxu0 0
    %3223 = vmatpush1.bf16.msra.mxu0 0
    %3224 = vmatprep.subr.bf16.mxu0 0
    %3225 = vmatpush1.bf16.msra.mxu0 0
    %3226 = vmatprep.subr.bf16.mxu0 0
    %3227 = vmatpush1.bf16.msra.mxu0 0
    %3228 = vmatprep.subr.bf16.mxu0 0
    %3229 = vmatpush1.bf16.msra.mxu0 0
    %3230 = vmatprep.subr.bf16.mxu0 0
    %3231 = vmatpush1.bf16.msra.mxu0 0
    %3232 = vmatprep.subr.bf16.mxu0 0
    %3233 = vmatpush1.bf16.msra.mxu0 0
    %3234 = vmatprep.subr.bf16.mxu0 0
    %3235 = vmatpush1.bf16.msra.mxu0 0
    %3236 = vmatprep.subr.bf16.mxu0 0
    %3237 = vmatpush1.bf16.msra.mxu0 0
    %3238 = vmatprep.subr.bf16.mxu0 0
    %3239 = vmatpush1.bf16.msra.mxu0 0
    %3240 = vmatprep.subr.bf16.mxu0 0
    %3241 = vmatpush1.bf16.msra.mxu0 0
    %3242 = vmatprep.subr.bf16.mxu0 0
    %3243 = vmatpush1.bf16.msra.mxu0 0
    %3244 = vmatprep.subr.bf16.mxu0 0
    %3245 = vmatpush1.bf16.msra.mxu0 0
    %3246 = vmatprep.subr.bf16.mxu0 0
    %3247 = vmatpush1.bf16.msra.mxu0 0
    %3248 = vmatprep.mubr.bf16.mxu0 0
    %3249 = vmatmul.mubr.bf16.gmra.mrb[0].mxu0 %v2434
    %v3250 = vpop.f32.mrb[0].mxu0
    %v3251 = vadd.f32 %v3033, %v3250
    %v3252 = vpop.f32.mrb[0].mxu0
    %v3253 = vpop.f32.mrb[0].mxu0
    %v3254 = vpop.f32.mrb[0].mxu0
    %3255 = vdwg.mxu0
    %v3256 = vmax.f32 %v3251, 0.0
    %3257 = vst.msk [vmem:[%s9 + $0x20] sm:$0xff] %vm3088, %v3256
    %3258 = vmatprep.subr.bf16.mxu0 0
    %3259 = vmatpush1.bf16.msra.mxu0 %v3043
    %3260 = vmatprep.subr.bf16.mxu0 0
    %3261 = vmatpush1.bf16.msra.mxu0 %v3044
    %3262 = vmatprep.subr.bf16.mxu0 0
    %3263 = vmatpush1.bf16.msra.mxu0 0
    %3264 = vmatprep.subr.bf16.mxu0 0
    %3265 = vmatpush1.bf16.msra.mxu0 0
    %3266 = vmatprep.subr.bf16.mxu0 0
    %3267 = vmatpush1.bf16.msra.mxu0 0
    %3268 = vmatprep.subr.bf16.mxu0 0
    %3269 = vmatpush1.bf16.msra.mxu0 0
    %3270 = vmatprep.subr.bf16.mxu0 0
    %3271 = vmatpush1.bf16.msra.mxu0 0
    %3272 = vmatprep.subr.bf16.mxu0 0
    %3273 = vmatpush1.bf16.msra.mxu0 0
    %3274 = vmatprep.subr.bf16.mxu0 0
    %3275 = vmatpush1.bf16.msra.mxu0 0
    %3276 = vmatprep.subr.bf16.mxu0 0
    %3277 = vmatpush1.bf16.msra.mxu0 0
    %3278 = vmatprep.subr.bf16.mxu0 0
    %3279 = vmatpush1.bf16.msra.mxu0 0
    %3280 = vmatprep.subr.bf16.mxu0 0
    %3281 = vmatpush1.bf16.msra.mxu0 0
    %3282 = vmatprep.subr.bf16.mxu0 0
    %3283 = vmatpush1.bf16.msra.mxu0 0
    %3284 = vmatprep.subr.bf16.mxu0 0
    %3285 = vmatpush1.bf16.msra.mxu0 0
    %3286 = vmatprep.subr.bf16.mxu0 0
    %3287 = vmatpush1.bf16.msra.mxu0 0
    %3288 = vmatprep.subr.bf16.mxu0 0
    %3289 = vmatpush1.bf16.msra.mxu0 0
    %3290 = vmatprep.mubr.bf16.mxu0 0
    %3291 = vmatmul.mubr.bf16.gmra.mrb[0].mxu0 %v2630
    %v3292 = vpop.f32.mrb[0].mxu0
    %v3293 = vadd.f32 %v3033, %v3292
    %v3294 = vpop.f32.mrb[0].mxu0
    %v3295 = vpop.f32.mrb[0].mxu0
    %v3296 = vpop.f32.mrb[0].mxu0
    %3297 = vdwg.mxu0
    %v3298 = vmax.f32 %v3293, 0.0
    %3299 = vst.msk [vmem:[%s9 + $0x28] sm:$0xff] %vm3088, %v3298
    %3300 = vmatprep.subr.bf16.mxu0 0
    %3301 = vmatpush1.bf16.msra.mxu0 %v3043
    %3302 = vmatprep.subr.bf16.mxu0 0
    %3303 = vmatpush1.bf16.msra.mxu0 %v3044
    %3304 = vmatprep.subr.bf16.mxu0 0
    %3305 = vmatpush1.bf16.msra.mxu0 0
    %3306 = vmatprep.subr.bf16.mxu0 0
    %3307 = vmatpush1.bf16.msra.mxu0 0
    %3308 = vmatprep.subr.bf16.mxu0 0
    %3309 = vmatpush1.bf16.msra.mxu0 0
    %3310 = vmatprep.subr.bf16.mxu0 0
    %3311 = vmatpush1.bf16.msra.mxu0 0
    %3312 = vmatprep.subr.bf16.mxu0 0
    %3313 = vmatpush1.bf16.msra.mxu0 0
    %3314 = vmatprep.subr.bf16.mxu0 0
    %3315 = vmatpush1.bf16.msra.mxu0 0
    %3316 = vmatprep.subr.bf16.mxu0 0
    %3317 = vmatpush1.bf16.msra.mxu0 0
    %3318 = vmatprep.subr.bf16.mxu0 0
    %3319 = vmatpush1.bf16.msra.mxu0 0
    %3320 = vmatprep.subr.bf16.mxu0 0
    %3321 = vmatpush1.bf16.msra.mxu0 0
    %3322 = vmatprep.subr.bf16.mxu0 0
    %3323 = vmatpush1.bf16.msra.mxu0 0
    %3324 = vmatprep.subr.bf16.mxu0 0
    %3325 = vmatpush1.bf16.msra.mxu0 0
    %3326 = vmatprep.subr.bf16.mxu0 0
    %3327 = vmatpush1.bf16.msra.mxu0 0
    %3328 = vmatprep.subr.bf16.mxu0 0
    %3329 = vmatpush1.bf16.msra.mxu0 0
    %3330 = vmatprep.subr.bf16.mxu0 0
    %3331 = vmatpush1.bf16.msra.mxu0 0
    %3332 = vmatprep.mubr.bf16.mxu0 0
    %3333 = vmatmul.mubr.bf16.gmra.mrb[0].mxu0 %v2827
    %v3334 = vpop.f32.mrb[0].mxu0
    %v3335 = vadd.f32 %v3033, %v3334
    %v3336 = vpop.f32.mrb[0].mxu0
    %v3337 = vpop.f32.mrb[0].mxu0
    %v3338 = vpop.f32.mrb[0].mxu0
    %3339 = vdwg.mxu0
    %v3340 = vmax.f32 %v3335, 0.0
    %3341 = vst.msk [vmem:[%s9 + $0x30] sm:$0xff] %vm3088, %v3340
    %v3342 = vpack.c.bf16 %v3023, %v3023
    %v3344 = vsel %vm164, %v3342, 0
    %3346 = vmatprep.subr.bf16.mxu0 0
    %3347 = vmatpush1.bf16.msra.mxu0 %v3043
    %3348 = vmatprep.subr.bf16.mxu0 0
    %3349 = vmatpush1.bf16.msra.mxu0 %v3044
    %3350 = vmatprep.subr.bf16.mxu0 0
    %3351 = vmatpush1.bf16.msra.mxu0 0
    %3352 = vmatprep.subr.bf16.mxu0 0
    %3353 = vmatpush1.bf16.msra.mxu0 0
    %3354 = vmatprep.subr.bf16.mxu0 0
    %3355 = vmatpush1.bf16.msra.mxu0 0
    %3356 = vmatprep.subr.bf16.mxu0 0
    %3357 = vmatpush1.bf16.msra.mxu0 0
    %3358 = vmatprep.subr.bf16.mxu0 0
    %3359 = vmatpush1.bf16.msra.mxu0 0
    %3360 = vmatprep.subr.bf16.mxu0 0
    %3361 = vmatpush1.bf16.msra.mxu0 0
    %3362 = vmatprep.subr.bf16.mxu0 0
    %3363 = vmatpush1.bf16.msra.mxu0 0
    %3364 = vmatprep.subr.bf16.mxu0 0
    %3365 = vmatpush1.bf16.msra.mxu0 0
    %3366 = vmatprep.subr.bf16.mxu0 0
    %3367 = vmatpush1.bf16.msra.mxu0 0
    %3368 = vmatprep.subr.bf16.mxu0 0
    %3369 = vmatpush1.bf16.msra.mxu0 0
    %3370 = vmatprep.subr.bf16.mxu0 0
    %3371 = vmatpush1.bf16.msra.mxu0 0
    %3372 = vmatprep.subr.bf16.mxu0 0
    %3373 = vmatpush1.bf16.msra.mxu0 0
    %3374 = vmatprep.subr.bf16.mxu0 0
    %3375 = vmatpush1.bf16.msra.mxu0 0
    %3376 = vmatprep.subr.bf16.mxu0 0
    %3377 = vmatpush1.bf16.msra.mxu0 0
    %3378 = vmatprep.mubr.bf16.mxu0 0
    %3379 = vmatmul.mubr.bf16.gmra.mrb[0].mxu0 %v3344
    %v3380 = vpop.f32.mrb[0].mxu0
    %v3381 = vadd.f32 %v3033, %v3380
    %v3382 = vpop.f32.mrb[0].mxu0
    %v3383 = vpop.f32.mrb[0].mxu0
    %v3384 = vpop.f32.mrb[0].mxu0
    %3385 = vdwg.mxu0
    %v3386 = vmax.f32 %v3381, 0.0
    %3387 = vst.msk [vmem:[%s9 + $0x38] sm:$0xff] %vm3088, %v3386
    // Predicated region
    $region50: #{tpu_custom_call.1} parent=1 // pred_check
      _
    $region51: #{tpu_custom_call.1} parent=1 // pred_check_branch
      %3389 = sbr.rel (0) target = $region53
    $region52: #{tpu_custom_call.1} parent=1 // pred_region
      _
    $region53: #{tpu_custom_call.1} parent=1 // pred_fallthru
      _
    // Predicated region
    $region54: #{tpu_custom_call.1} parent=1 // pred_check
      _
    $region55: #{tpu_custom_call.1} parent=1 // pred_check_branch
      %3391 = sbr.rel (0) target = $region57
    $region56: #{tpu_custom_call.1} parent=1 // pred_region
      _
    $region57: #{tpu_custom_call.1} parent=1 // pred_fallthru
      _
    %3392 = vsyncpa [#allocation5], 1
    %3393 = vsyncpa [#allocation7], 1

</llo_original>
